<compile_context>
chip_gen: v6e
topology: v6e:2x2x1
jax: 0.10.0
libtpu: 0.0.40
codegen_flags: <defaults>
</compile_context>

<pallas_src>
import math

import jax
import jax.numpy as jnp
from jax.experimental import pallas as pl
from jax.experimental.pallas import tpu as pltpu

NHEAD = 4          # d_model must be divisible by NHEAD
LN_EPS = 1e-5      # torch.nn.LayerNorm default


# ---------------------------------------------------------------------------
# in-kernel math helpers (traced inside the Pallas kernels)
# ---------------------------------------------------------------------------
def _layer_norm(x, w, b):
    mu = jnp.mean(x, axis=-1, keepdims=True)
    var = jnp.mean(jnp.square(x - mu), axis=-1, keepdims=True)
    return (x - mu) * jax.lax.rsqrt(var + LN_EPS) * w + b


def _recip(x):
    # EUP approx reciprocal + one Newton-Raphson step: divide leaves the VALU
    # slot, accuracy is restored to ~f32.
    r = pl.reciprocal(x, approx=True)
    return r * (2.0 - x * r)


def _softmax_lastdim(s):
    s = s - jnp.max(s, axis=-1, keepdims=True)
    p = jnp.exp(s)
    return p * _recip(jnp.sum(p, axis=-1, keepdims=True))


def _attn_core(q3, k3, v3, wo_t, bo, nhead):
    """Multi-head attention core + output projection.

    q3 (B, Tq, D) is already scaled (1/sqrt(hd) folded into Wq at pack time),
    k3/v3 are (B, Tk, D).  Head outputs are folded straight into the output
    projection (acc += O_h @ Wo_t[h*hd:(h+1)*hd]) -> no lane concatenate.
    Returns (B*Tq, D).
    """
    Bv, Tq, D = q3.shape
    hd = D // nhead
    acc = jnp.zeros((Bv * Tq, D), jnp.float32)
    for h in range(nhead):                               # static, tiny head loop
        sl = slice(h * hd, (h + 1) * hd)
        s = jnp.einsum('bqc,bkc->bqk', q3[:, :, sl], k3[:, :, sl],
                       preferred_element_type=jnp.float32)
        p = _softmax_lastdim(s)
        oh = jnp.einsum('bqk,bkc->bqc', p, v3[:, :, sl],
                        preferred_element_type=jnp.float32)      # (B, Tq, hd)
        acc = acc + jnp.dot(oh.reshape(Bv * Tq, hd), wo_t[sl, :],
                            preferred_element_type=jnp.float32)
    return acc + bo


def _self_attn(x2, pos2, Bv, T, wqk_t, bqk, wv_t, bv, wo_t, bo):
    """q = k = x + pos, v = x.  Fused QK projection: one (., D)x(D, 2D) matmul."""
    D = x2.shape[-1]
    qk = jnp.dot(x2 + pos2, wqk_t, preferred_element_type=jnp.float32) + bqk
    v = jnp.dot(x2, wv_t, preferred_element_type=jnp.float32) + bv
    q3 = qk[:, :D].reshape(Bv, T, D)
    k3 = qk[:, D:].reshape(Bv, T, D)
    return _attn_core(q3, k3, v.reshape(Bv, T, D), wo_t, bo, NHEAD)


def _cross_attn(x2, qpos2, mem2, pos2, Bv, L, S,
                wq_t, bq, wk_t, bk, wv_t, bv, wo_t, bo):
    """q = x + qpos, k = mem + pos, v = mem (three different inputs)."""
    D = x2.shape[-1]
    q = jnp.dot(x2 + qpos2, wq_t, preferred_element_type=jnp.float32) + bq
    k = jnp.dot(mem2 + pos2, wk_t, preferred_element_type=jnp.float32) + bk
    v = jnp.dot(mem2, wv_t, preferred_element_type=jnp.float32) + bv
    return _attn_core(q.reshape(Bv, L, D), k.reshape(Bv, S, D),
                      v.reshape(Bv, S, D), wo_t, bo, NHEAD)


def _ffn(x2, w1_t, b1, w2_t, b2):
    h = jnp.maximum(
        jnp.dot(x2, w1_t, preferred_element_type=jnp.float32) + b1, 0.0)
    return jnp.dot(h, w2_t, preferred_element_type=jnp.float32) + b2


# ---------------------------------------------------------------------------
# fused encoder stack kernel: grid=(num_encoder_layers,), state in VMEM scratch
# ---------------------------------------------------------------------------
def _encoder_stack_kernel(src_ref, pos_ref,
                          wqk_ref, bqk_ref, wvo_ref, w1_ref, b1_ref, w2_ref,
                          vec_ref, out_ref, x_sc):
    layer = pl.program_id(0)
    Bv, S, D = src_ref.shape
    N = Bv * S

    @pl.when(layer == 0)
    def _():
        x_sc[...] = src_ref[...].reshape(N, D)

    pos2 = pos_ref[...].reshape(N, D)
    x = x_sc[...]

    wvo = wvo_ref[0]                                   # (2, D, D): [Wv^T, Wo^T]
    vec = vec_ref[0]                                   # (7, D)
    bv, bo, b2 = vec[0:1], vec[1:2], vec[2:3]
    n1w, n1b, n2w, n2b = vec[3:4], vec[4:5], vec[5:6], vec[6:7]

    sa = _self_attn(x, pos2, Bv, S, wqk_ref[0], bqk_ref[0],
                    wvo[0], bv, wvo[1], bo)
    x = _layer_norm(x + sa, n1w, n1b)                  # dropout1 = identity
    ff = _ffn(x, w1_ref[0], b1_ref[0], w2_ref[0], b2)
    x = _layer_norm(x + ff, n2w, n2b)                  # dropout2 = identity

    x_sc[...] = x
    out_ref[...] = x.reshape(Bv, S, D)


# ---------------------------------------------------------------------------
# fused decoder stack kernel: grid=(num_decoder_layers,), state in VMEM scratch
# ---------------------------------------------------------------------------
def _decoder_stack_kernel(tgt_ref, mem_ref, qpos_ref, pos_ref,
                          sa_wqk_ref, sa_bqk_ref, sa_wvo_ref, ca_w_ref,
                          w1_ref, b1_ref, w2_ref, vec_ref, fn_ref,
                          out_ref, x_sc):
    layer = pl.program_id(0)
    Bv, L, D = tgt_ref.shape
    S = mem_ref.shape[1]
    NQ = Bv * L
    NK = Bv * S

    @pl.when(layer == 0)
    def _():
        x_sc[...] = tgt_ref[...].reshape(NQ, D)

    qpos2 = qpos_ref[...].reshape(NQ, D)
    mem2 = mem_ref[...].reshape(NK, D)
    pos2 = pos_ref[...].reshape(NK, D)
    x = x_sc[...]

    sa_wvo = sa_wvo_ref[0]                             # (2, D, D): [Wv^T, Wo^T]
    ca_w = ca_w_ref[0]                                 # (4, D, D): [Wq^T,Wk^T,Wv^T,Wo^T]
    vec = vec_ref[0]                                   # (13, D)
    sa_bv, sa_bo = vec[0:1], vec[1:2]
    ca_bq, ca_bk, ca_bv, ca_bo = vec[2:3], vec[3:4], vec[4:5], vec[5:6]
    b2 = vec[6:7]
    n1w, n1b = vec[7:8], vec[8:9]
    n2w, n2b = vec[9:10], vec[10:11]
    n3w, n3b = vec[11:12], vec[12:13]

    # self attention: q = k = x + query_pos, v = x
    sa = _self_attn(x, qpos2, Bv, L, sa_wqk_ref[0], sa_bqk_ref[0],
                    sa_wvo[0], sa_bv, sa_wvo[1], sa_bo)
    x = _layer_norm(x + sa, n1w, n1b)                  # dropout1 = identity

    # cross attention: q = x + query_pos, k = memory + pos, v = memory
    ca = _cross_attn(x, qpos2, mem2, pos2, Bv, L, S,
                     ca_w[0], ca_bq, ca_w[1], ca_bk, ca_w[2], ca_bv,
                     ca_w[3], ca_bo)
    x = _layer_norm(x + ca, n2w, n2b)                  # dropout2 = identity

    # feed forward (relu)
    ff = _ffn(x, w1_ref[0], b1_ref[0], w2_ref[0], b2)
    x = _layer_norm(x + ff, n3w, n3b)                  # dropout3 = identity

    x_sc[...] = x
    # final TransformerDecoder norm; written each layer, only the last survives
    # (keeps the output block always initialized).
    fn = fn_ref[...]
    out_ref[...] = _layer_norm(x, fn[0:1], fn[1:2]).reshape(Bv, L, D)


# ---------------------------------------------------------------------------
# wrappers: one pallas_call per stack, weights streamed per layer by BlockSpec
# ---------------------------------------------------------------------------
def _layer_idx(ndim):
    return lambda l: (l,) + (0,) * (ndim - 1)


def _full_idx(ndim):
    return lambda l: (0,) * ndim


def encoder_stack(src_bsd, pos_bsd, ew):
    B, S, D = src_bsd.shape
    n_layers = ew["wqk"].shape[0]
    weights = [ew["wqk"], ew["bqk"], ew["wvo"], ew["w1"], ew["b1"], ew["w2"],
               ew["vec"]]
    in_specs = ([pl.BlockSpec((B, S, D), _full_idx(3))] * 2 +
                [pl.BlockSpec((1,) + w.shape[1:], _layer_idx(w.ndim))
                 for w in weights])
    return pl.pallas_call(
        _encoder_stack_kernel,
        out_shape=jax.ShapeDtypeStruct((B, S, D), jnp.float32),
        grid=(n_layers,),
        in_specs=in_specs,
        out_specs=pl.BlockSpec((B, S, D), _full_idx(3)),
        scratch_shapes=[pltpu.VMEM((B * S, D), jnp.float32)],
        compiler_params=pltpu.CompilerParams(
            dimension_semantics=("arbitrary",)),   # layers are sequential
    )(src_bsd, pos_bsd, *weights)


def decoder_stack(tgt_bld, mem_bsd, qpos_bld, pos_bsd, dw):
    B, L, D = tgt_bld.shape
    S = mem_bsd.shape[1]
    n_layers = dw["sa_wqk"].shape[0]
    weights = [dw["sa_wqk"], dw["sa_bqk"], dw["sa_wvo"], dw["ca_w"],
               dw["w1"], dw["b1"], dw["w2"], dw["vec"]]
    in_specs = ([pl.BlockSpec((B, L, D), _full_idx(3)),
                 pl.BlockSpec((B, S, D), _full_idx(3)),
                 pl.BlockSpec((B, L, D), _full_idx(3)),
                 pl.BlockSpec((B, S, D), _full_idx(3))] +
                [pl.BlockSpec((1,) + w.shape[1:], _layer_idx(w.ndim))
                 for w in weights] +
                [pl.BlockSpec(dw["final_ln"].shape, _full_idx(2))])
    return pl.pallas_call(
        _decoder_stack_kernel,
        out_shape=jax.ShapeDtypeStruct((B, L, D), jnp.float32),
        grid=(n_layers,),
        in_specs=in_specs,
        out_specs=pl.BlockSpec((B, L, D), _full_idx(3)),
        scratch_shapes=[pltpu.VMEM((B * L, D), jnp.float32)],
        compiler_params=pltpu.CompilerParams(
            dimension_semantics=("arbitrary",)),
    )(tgt_bld, mem_bsd, qpos_bld, pos_bsd, *weights, dw["final_ln"])


def transformer_forward(src, mask, query_embed, pos_embed, packed):
    """Transformer.forward (eval).  src/pos_embed: (S, B, D), query_embed: (L, D).

    Returns (hs.transpose(1, 2), memory) = ((1, B, L, D), (S, B, D)),
    matching the PyTorch module with return_intermediate_dec=False.
    """
    # TODO(synk): key_padding_mask is not implemented; the tracked config passes mask=None.
    assert mask is None, "key_padding_mask not supported"
    S, B, D = src.shape
    L = query_embed.shape[0]
    src_b = jnp.transpose(src, (1, 0, 2))                      # (B, S, D)
    pos_b = jnp.transpose(pos_embed, (1, 0, 2))                # (B, S, D)
    qpos_b = jnp.broadcast_to(query_embed[None], (B, L, D))    # unsqueeze(1).repeat
    tgt_b = jnp.zeros((B, L, D), jnp.float32)                  # zeros_like(query_embed)

    memory_b = encoder_stack(src_b, pos_b, packed["enc"])
    hs_b = decoder_stack(tgt_b, memory_b, qpos_b, pos_b, packed["dec"])

    memory = jnp.transpose(memory_b, (1, 0, 2))                # (S, B, D)
    hs_t = hs_b[None]                                          # (1, B, L, D)
    return hs_t, memory


# ---------------------------------------------------------------------------
# parameter init (PyTorch layout: Linear weight (out,in)) and packing for the
# kernels (pre-transposed, QK-fused, q-scale folded, per-layer stacked)
# ---------------------------------------------------------------------------
def _init_linear(key, out_dim, in_dim):
    kw, kb = jax.random.split(key)
    w = jax.random.normal(kw, (out_dim, in_dim), jnp.float32) * 0.1
    b = jax.random.normal(kb, (out_dim,), jnp.float32) * 0.05
    return w, b


def _init_attn(key, D):
    ks = jax.random.split(key, 4)
    p = {}
    p["wq"], p["bq"] = _init_linear(ks[0], D, D)
    p["wk"], p["bk"] = _init_linear(ks[1], D, D)
    p["wv"], p["bv"] = _init_linear(ks[2], D, D)
    p["wo"], p["bo"] = _init_linear(ks[3], D, D)
    return p


def _ln_params(D):
    return (jnp.ones((D,), jnp.float32), jnp.zeros((D,), jnp.float32))


def init_transformer_params(key, D, DFF, n_enc, n_dec):
    enc_layers, dec_layers = [], []
    keys = jax.random.split(key, n_enc + n_dec)
    for i in range(n_enc):
        k_sa, k1, k2 = jax.random.split(keys[i], 3)
        w1, b1 = _init_linear(k1, DFF, D)
        w2, b2 = _init_linear(k2, D, DFF)
        enc_layers.append({"sa": _init_attn(k_sa, D),
                           "w1": w1, "b1": b1, "w2": w2, "b2": b2,
                           "ln1": _ln_params(D), "ln2": _ln_params(D)})
    for i in range(n_dec):
        k_sa, k_ca, k1, k2 = jax.random.split(keys[n_enc + i], 4)
        w1, b1 = _init_linear(k1, DFF, D)
        w2, b2 = _init_linear(k2, D, DFF)
        dec_layers.append({"sa": _init_attn(k_sa, D), "ca": _init_attn(k_ca, D),
                           "w1": w1, "b1": b1, "w2": w2, "b2": b2,
                           "ln1": _ln_params(D), "ln2": _ln_params(D),
                           "ln3": _ln_params(D)})
    return {"enc_layers": enc_layers, "dec_layers": dec_layers,
            "dec_norm": _ln_params(D)}


def pack_encoder(layers, nhead):
    D = layers[0]["sa"]["wq"].shape[0]
    scale = 1.0 / math.sqrt(D // nhead)
    packs = {k: [] for k in ("wqk", "bqk", "wvo", "w1", "b1", "w2", "vec")}
    for lp in layers:
        sa = lp["sa"]
        packs["wqk"].append(jnp.concatenate([sa["wq"].T * scale, sa["wk"].T], 1))
        packs["bqk"].append(jnp.concatenate([sa["bq"] * scale, sa["bk"]])[None, :])
        packs["wvo"].append(jnp.stack([sa["wv"].T, sa["wo"].T]))
        packs["w1"].append(lp["w1"].T)
        packs["b1"].append(lp["b1"][None, :])
        packs["w2"].append(lp["w2"].T)
        packs["vec"].append(jnp.stack([sa["bv"], sa["bo"], lp["b2"],
                                       lp["ln1"][0], lp["ln1"][1],
                                       lp["ln2"][0], lp["ln2"][1]]))
    return {k: jnp.stack(v) for k, v in packs.items()}


def pack_decoder(layers, dec_norm, nhead):
    D = layers[0]["sa"]["wq"].shape[0]
    scale = 1.0 / math.sqrt(D // nhead)
    packs = {k: [] for k in ("sa_wqk", "sa_bqk", "sa_wvo", "ca_w",
                             "w1", "b1", "w2", "vec")}
    for lp in layers:
        sa, ca = lp["sa"], lp["ca"]
        packs["sa_wqk"].append(jnp.concatenate([sa["wq"].T * scale, sa["wk"].T], 1))
        packs["sa_bqk"].append(jnp.concatenate([sa["bq"] * scale, sa["bk"]])[None, :])
        packs["sa_wvo"].append(jnp.stack([sa["wv"].T, sa["wo"].T]))
        packs["ca_w"].append(jnp.stack([ca["wq"].T * scale, ca["wk"].T,
                                        ca["wv"].T, ca["wo"].T]))
        packs["w1"].append(lp["w1"].T)
        packs["b1"].append(lp["b1"][None, :])
        packs["w2"].append(lp["w2"].T)
        packs["vec"].append(jnp.stack([sa["bv"], sa["bo"],
                                       ca["bq"] * scale, ca["bk"],
                                       ca["bv"], ca["bo"],
                                       lp["b2"],
                                       lp["ln1"][0], lp["ln1"][1],
                                       lp["ln2"][0], lp["ln2"][1],
                                       lp["ln3"][0], lp["ln3"][1]]))
    out = {k: jnp.stack(v) for k, v in packs.items()}
    out["final_ln"] = jnp.stack([dec_norm[0], dec_norm[1]])     # (2, D)
    return out


# ---------------------------------------------------------------------------
# pure-JAX reference (same math as nn.MultiheadAttention, exact softmax)
# ---------------------------------------------------------------------------
def _ref_ln(x, w, b):
    mu = x.mean(-1, keepdims=True)
    var = ((x - mu) ** 2).mean(-1, keepdims=True)
    return (x - mu) / jnp.sqrt(var + LN_EPS) * w + b


def _ref_mha(q_in, k_in, v_in, p, nhead):
    B, Tq, D = q_in.shape
    Tk = k_in.shape[1]
    hd = D // nhead
    Q = q_in @ p["wq"].T + p["bq"]
    K = k_in @ p["wk"].T + p["bk"]
    V = v_in @ p["wv"].T + p["bv"]
    Qh = Q.reshape(B, Tq, nhead, hd)
    Kh = K.reshape(B, Tk, nhead, hd)
    Vh = V.reshape(B, Tk, nhead, hd)
    S = jnp.einsum('bqhd,bkhd->bhqk', Qh, Kh) / math.sqrt(hd)
    P = jax.nn.softmax(S, axis=-1)
    O = jnp.einsum('bhqk,bkhd->bqhd', P, Vh).reshape(B, Tq, D)
    return O @ p["wo"].T + p["bo"]


def _ref_encoder_layer(x, pos, lp, nhead):
    q = x + pos
    sa = _ref_mha(q, q, x, lp["sa"], nhead)
    x = _ref_ln(x + sa, *lp["ln1"])
    ff = jax.nn.relu(x @ lp["w1"].T + lp["b1"]) @ lp["w2"].T + lp["b2"]
    return _ref_ln(x + ff, *lp["ln2"])


def _ref_decoder_layer(x, mem, qpos, pos, lp, nhead):
    q = x + qpos
    sa = _ref_mha(q, q, x, lp["sa"], nhead)
    x = _ref_ln(x + sa, *lp["ln1"])
    ca = _ref_mha(x + qpos, mem + pos, mem, lp["ca"], nhead)
    x = _ref_ln(x + ca, *lp["ln2"])
    ff = jax.nn.relu(x @ lp["w1"].T + lp["b1"]) @ lp["w2"].T + lp["b2"]
    return _ref_ln(x + ff, *lp["ln3"])


def transformer_forward_ref(src, mask, query_embed, pos_embed, params, nhead):
    assert mask is None
    S, B, D = src.shape
    L = query_embed.shape[0]
    x = jnp.transpose(src, (1, 0, 2))
    pos = jnp.transpose(pos_embed, (1, 0, 2))
    for lp in params["enc_layers"]:
        x = _ref_encoder_layer(x, pos, lp, nhead)
    memory_b = x
    qpos = jnp.broadcast_to(query_embed[None], (B, L, D))
    y = jnp.zeros((B, L, D), jnp.float32)
    for lp in params["dec_layers"]:
        y = _ref_decoder_layer(y, memory_b, qpos, pos, lp, nhead)
    y = _ref_ln(y, *params["dec_norm"])
    return y[None], jnp.transpose(memory_b, (1, 0, 2))


# ---------------------------------------------------------------------------
if __name__ == "__main__":
    S, L, B, D, DFF = 16, 8, 2, 32, 64
    N_ENC, N_DEC = 2, 2

    key = jax.random.PRNGKey(0)
    k_src, k_q, k_pos, k_par = jax.random.split(key, 4)
    src = jax.random.normal(k_src, (S, B, D), jnp.float32)         # encoder input
    query_embed = jax.random.normal(k_q, (L, D), jnp.float32)      # object queries
    pos_embed = jax.random.normal(k_pos, (S, B, D), jnp.float32)   # pos encodings
    params = init_transformer_params(k_par, D, DFF, N_ENC, N_DEC)

    packed = {"enc": pack_encoder(params["enc_layers"], NHEAD),
              "dec": pack_decoder(params["dec_layers"], params["dec_norm"],
                                  NHEAD)}

    hs, memory = transformer_forward(src, None, query_embed, pos_embed, packed)
    hs = jax.block_until_ready(hs)
    memory = jax.block_until_ready(memory)

    hs_ref, mem_ref = transformer_forward_ref(src, None, query_embed, pos_embed,
                                              params, NHEAD)

    assert hs.shape == (1, B, L, D), hs.shape
    assert memory.shape == (S, B, D), memory.shape
    # tolerance covers the EUP approx-reciprocal (+ Newton step) softmax and
    # different f32 matmul association vs the reference.
    assert jnp.allclose(memory, mem_ref, atol=1e-3, rtol=1e-3), \
        float(jnp.max(jnp.abs(memory - mem_ref)))
    assert jnp.allclose(hs, hs_ref, atol=1e-3, rtol=1e-3), \
        float(jnp.max(jnp.abs(hs - hs_ref)))

    print("KERNEL_OK")
</pallas_src>

<mosaic_0001>
module attributes {stable_mosaic.version = 11 : i64} {
  func.func @_encoder_stack_kernel(%arg0: i32, %arg1: memref<2x16x32xf32, #tpu.memory_space<vmem>>, %arg2: memref<2x16x32xf32, #tpu.memory_space<vmem>>, %arg3: memref<1x32x64xf32, #tpu.memory_space<vmem>>, %arg4: memref<1x1x64xf32, #tpu.memory_space<vmem>>, %arg5: memref<1x2x32x32xf32, #tpu.memory_space<vmem>>, %arg6: memref<1x32x64xf32, #tpu.memory_space<vmem>>, %arg7: memref<1x1x64xf32, #tpu.memory_space<vmem>>, %arg8: memref<1x64x32xf32, #tpu.memory_space<vmem>>, %arg9: memref<1x7x32xf32, #tpu.memory_space<vmem>>, %arg10: memref<2x16x32xf32, #tpu.memory_space<vmem>>, %arg11: memref<32x32xf32, #tpu.memory_space<vmem>>) attributes {dimension_semantics = [#tpu.dimension_semantics<arbitrary>], iteration_bounds = array<i64: 2>, scalar_prefetch = 0 : i64, scratch_operands = 1 : i64, tpu.core_type = #tpu.core_type<tc>, window_params = [{pipeline_mode = #tpu.pipeline_mode<synchronous>, transform_indices = @transform_0, window_bounds = array<i64: 2, 16, 32>}, {pipeline_mode = #tpu.pipeline_mode<synchronous>, transform_indices = @transform_1, window_bounds = array<i64: 2, 16, 32>}, {transform_indices = @transform_2, window_bounds = array<i64: 1, 32, 64>}, {transform_indices = @transform_3, window_bounds = array<i64: 1, 1, 64>}, {transform_indices = @transform_4, window_bounds = array<i64: 1, 2, 32, 32>}, {transform_indices = @transform_5, window_bounds = array<i64: 1, 32, 64>}, {transform_indices = @transform_6, window_bounds = array<i64: 1, 1, 64>}, {transform_indices = @transform_7, window_bounds = array<i64: 1, 64, 32>}, {transform_indices = @transform_8, window_bounds = array<i64: 1, 7, 32>}, {pipeline_mode = #tpu.pipeline_mode<synchronous>, transform_indices = @transform_9, window_bounds = array<i64: 2, 16, 32>}]} {
    %c0_i32 = arith.constant 0 : i32
    %0 = arith.cmpi eq, %arg0, %c0_i32 : i32
    %1 = arith.extui %0 : i1 to i32
    %c0_i32_0 = arith.constant 0 : i32
    %2 = arith.cmpi ne, %1, %c0_i32_0 : i32
    scf.if %2 {
      %c0_71 = arith.constant 0 : index
      %c0_72 = arith.constant 0 : index
      %c0_73 = arith.constant 0 : index
      %195 = vector.load %arg1[%c0_71, %c0_72, %c0_73] : memref<2x16x32xf32, #tpu.memory_space<vmem>>, vector<2x16x32xf32>
      %196 = vector.shape_cast %195 : vector<2x16x32xf32> to vector<32x32xf32>
      %c0_74 = arith.constant 0 : index
      %c0_75 = arith.constant 0 : index
      %197 = vector.load %arg11[%c0_74, %c0_75] : memref<32x32xf32, #tpu.memory_space<vmem>>, vector<32x32xf32>
      tpu.vector_store %arg11[%c0_74, %c0_75], %196 {strides = array<i32>} : memref<32x32xf32, #tpu.memory_space<vmem>>, vector<32x32xf32>,
    } else {
    }
    %c0 = arith.constant 0 : index
    %c0_1 = arith.constant 0 : index
    %c0_2 = arith.constant 0 : index
    %3 = vector.load %arg2[%c0, %c0_1, %c0_2] : memref<2x16x32xf32, #tpu.memory_space<vmem>>, vector<2x16x32xf32>
    %4 = vector.shape_cast %3 : vector<2x16x32xf32> to vector<32x32xf32>
    %c0_3 = arith.constant 0 : index
    %c0_4 = arith.constant 0 : index
    %5 = vector.load %arg11[%c0_3, %c0_4] : memref<32x32xf32, #tpu.memory_space<vmem>>, vector<32x32xf32>
    %c0_5 = arith.constant 0 : index
    %c0_6 = arith.constant 0 : index
    %c0_7 = arith.constant 0 : index
    %c0_8 = arith.constant 0 : index
    %6 = vector.load %arg5[%c0_5, %c0_6, %c0_7, %c0_8] : memref<1x2x32x32xf32, #tpu.memory_space<vmem>>, vector<1x2x32x32xf32>
    %7 = vector.shape_cast %6 : vector<1x2x32x32xf32> to vector<2x32x32xf32>
    %c0_9 = arith.constant 0 : index
    %c0_10 = arith.constant 0 : index
    %c0_11 = arith.constant 0 : index
    %8 = vector.load %arg9[%c0_9, %c0_10, %c0_11] : memref<1x7x32xf32, #tpu.memory_space<vmem>>, vector<1x7x32xf32>
    %9 = vector.shape_cast %8 : vector<1x7x32xf32> to vector<7x32xf32>
    %10 = vector.extract_strided_slice %9 {offsets = [0, 0], sizes = [1, 32], strides = [1, 1]} : vector<7x32xf32> to vector<1x32xf32>
    %11 = vector.extract_strided_slice %9 {offsets = [1, 0], sizes = [1, 32], strides = [1, 1]} : vector<7x32xf32> to vector<1x32xf32>
    %12 = vector.extract_strided_slice %9 {offsets = [2, 0], sizes = [1, 32], strides = [1, 1]} : vector<7x32xf32> to vector<1x32xf32>
    %13 = vector.extract_strided_slice %9 {offsets = [3, 0], sizes = [1, 32], strides = [1, 1]} : vector<7x32xf32> to vector<1x32xf32>
    %14 = vector.extract_strided_slice %9 {offsets = [4, 0], sizes = [1, 32], strides = [1, 1]} : vector<7x32xf32> to vector<1x32xf32>
    %15 = vector.extract_strided_slice %9 {offsets = [5, 0], sizes = [1, 32], strides = [1, 1]} : vector<7x32xf32> to vector<1x32xf32>
    %16 = vector.extract_strided_slice %9 {offsets = [6, 0], sizes = [1, 32], strides = [1, 1]} : vector<7x32xf32> to vector<1x32xf32>
    %c0_12 = arith.constant 0 : index
    %c0_13 = arith.constant 0 : index
    %c0_14 = arith.constant 0 : index
    %17 = vector.load %arg3[%c0_12, %c0_13, %c0_14] : memref<1x32x64xf32, #tpu.memory_space<vmem>>, vector<1x32x64xf32>
    %18 = vector.shape_cast %17 : vector<1x32x64xf32> to vector<32x64xf32>
    %c0_15 = arith.constant 0 : index
    %c0_16 = arith.constant 0 : index
    %c0_17 = arith.constant 0 : index
    %19 = vector.load %arg4[%c0_15, %c0_16, %c0_17] : memref<1x1x64xf32, #tpu.memory_space<vmem>>, vector<1x1x64xf32>
    %20 = vector.shape_cast %19 : vector<1x1x64xf32> to vector<1x64xf32>
    %21 = vector.extract_strided_slice %7 {offsets = [0, 0, 0], sizes = [1, 32, 32], strides = [1, 1, 1]} : vector<2x32x32xf32> to vector<1x32x32xf32>
    %22 = vector.shape_cast %21 : vector<1x32x32xf32> to vector<32x32xf32>
    %23 = vector.extract_strided_slice %7 {offsets = [1, 0, 0], sizes = [1, 32, 32], strides = [1, 1, 1]} : vector<2x32x32xf32> to vector<1x32x32xf32>
    %24 = vector.shape_cast %23 : vector<1x32x32xf32> to vector<32x32xf32>
    %25 = arith.addf %5, %4 : vector<32x32xf32>
    %cst = arith.constant dense<0.000000e+00> : vector<32x64xf32>
    %26 = tpu.matmul %25, %18, %cst {dimension_numbers = #tpu.dot_dimension_numbers<[1], [0], [0], [1], [0, 0, 1, 1], [], []>} : vector<32x32xf32>, vector<32x64xf32>, vector<32x64xf32> -> vector<32x64xf32>
    %27 = vector.broadcast %20 : vector<1x64xf32> to vector<32x64xf32>
    %28 = arith.addf %26, %27 : vector<32x64xf32>
    %cst_18 = arith.constant dense<0.000000e+00> : vector<32x32xf32>
    %29 = tpu.matmul %5, %22, %cst_18 {dimension_numbers = #tpu.dot_dimension_numbers<[1], [0], [0], [1], [0, 0, 1, 1], [], []>} : vector<32x32xf32>, vector<32x32xf32>, vector<32x32xf32> -> vector<32x32xf32>
    %30 = vector.broadcast %10 : vector<1x32xf32> to vector<32x32xf32>
    %31 = arith.addf %29, %30 : vector<32x32xf32>
    %32 = vector.extract_strided_slice %28 {offsets = [0, 0], sizes = [32, 32], strides = [1, 1]} : vector<32x64xf32> to vector<32x32xf32>
    %33 = vector.shape_cast %32 : vector<32x32xf32> to vector<2x16x32xf32>
    %34 = vector.extract_strided_slice %28 {offsets = [0, 32], sizes = [32, 32], strides = [1, 1]} : vector<32x64xf32> to vector<32x32xf32>
    %35 = vector.shape_cast %34 : vector<32x32xf32> to vector<2x16x32xf32>
    %36 = vector.shape_cast %31 : vector<32x32xf32> to vector<2x16x32xf32>
    %cst_19 = arith.constant 0.000000e+00 : f32
    %37 = vector.broadcast %cst_19 : f32 to vector<32x32xf32>
    %38 = vector.extract_strided_slice %33 {offsets = [0, 0, 0], sizes = [2, 16, 8], strides = [1, 1, 1]} : vector<2x16x32xf32> to vector<2x16x8xf32>
    %39 = vector.extract_strided_slice %35 {offsets = [0, 0, 0], sizes = [2, 16, 8], strides = [1, 1, 1]} : vector<2x16x32xf32> to vector<2x16x8xf32>
    "tpu.trace_start"() <{level = 10 : i32, message = "bqc,bkc->bqk"}> : () -> ()
    %cst_20 = arith.constant dense<0.000000e+00> : vector<2x16x16xf32>
    %40 = tpu.matmul %38, %39, %cst_20 {dimension_numbers = #tpu.dot_dimension_numbers<[2], [2], [1], [1], [0, 0, 0, 1, 1, 1], [0], [0]>} : vector<2x16x8xf32>, vector<2x16x8xf32>, vector<2x16x16xf32> -> vector<2x16x16xf32>
    "tpu.trace_stop"() : () -> ()
    %cst_21 = arith.constant dense<0xFF800000> : vector<2x16xf32>
    %41 = vector.multi_reduction <maximumf>, %40, %cst_21 [2] : vector<2x16x16xf32> to vector<2x16xf32>
    %42 = vector.shape_cast %41 : vector<2x16xf32> to vector<2x16x1xf32>
    %43 = vector.broadcast %42 : vector<2x16x1xf32> to vector<2x16x16xf32>
    %44 = arith.subf %40, %43 : vector<2x16x16xf32>
    %45 = math.exp %44 : vector<2x16x16xf32>
    %cst_22 = arith.constant dense<0.000000e+00> : vector<2x16xf32>
    %46 = vector.multi_reduction <add>, %45, %cst_22 [2] : vector<2x16x16xf32> to vector<2x16xf32>
    %47 = vector.shape_cast %46 : vector<2x16xf32> to vector<2x16x1xf32>
    %48 = tpu.reciprocal %47 {approx = true} : vector<2x16x1xf32> -> vector<2x16x1xf32>
    %49 = arith.mulf %47, %48 : vector<2x16x1xf32>
    %cst_23 = arith.constant 2.000000e+00 : f32
    %50 = vector.broadcast %cst_23 : f32 to vector<2x16x1xf32>
    %51 = arith.subf %50, %49 : vector<2x16x1xf32>
    %52 = arith.mulf %48, %51 : vector<2x16x1xf32>
    %53 = vector.broadcast %52 : vector<2x16x1xf32> to vector<2x16x16xf32>
    %54 = arith.mulf %45, %53 : vector<2x16x16xf32>
    %55 = vector.extract_strided_slice %36 {offsets = [0, 0, 0], sizes = [2, 16, 8], strides = [1, 1, 1]} : vector<2x16x32xf32> to vector<2x16x8xf32>
    "tpu.trace_start"() <{level = 10 : i32, message = "bqk,bkc->bqc"}> : () -> ()
    %cst_24 = arith.constant dense<0.000000e+00> : vector<2x16x8xf32>
    %56 = tpu.matmul %54, %55, %cst_24 {dimension_numbers = #tpu.dot_dimension_numbers<[2], [1], [1], [2], [0, 0, 0, 1, 1, 2], [0], [0]>} : vector<2x16x16xf32>, vector<2x16x8xf32>, vector<2x16x8xf32> -> vector<2x16x8xf32>
    "tpu.trace_stop"() : () -> ()
    %57 = vector.shape_cast %56 : vector<2x16x8xf32> to vector<32x8xf32>
    %58 = vector.extract_strided_slice %24 {offsets = [0, 0], sizes = [8, 32], strides = [1, 1]} : vector<32x32xf32> to vector<8x32xf32>
    %cst_25 = arith.constant dense<0.000000e+00> : vector<32x32xf32>
    %59 = tpu.matmul %57, %58, %cst_25 {dimension_numbers = #tpu.dot_dimension_numbers<[1], [0], [0], [1], [0, 0, 1, 1], [], []>} : vector<32x8xf32>, vector<8x32xf32>, vector<32x32xf32> -> vector<32x32xf32>
    %60 = arith.addf %37, %59 : vector<32x32xf32>
    %61 = vector.extract_strided_slice %33 {offsets = [0, 0, 8], sizes = [2, 16, 8], strides = [1, 1, 1]} : vector<2x16x32xf32> to vector<2x16x8xf32>
    %62 = vector.extract_strided_slice %35 {offsets = [0, 0, 8], sizes = [2, 16, 8], strides = [1, 1, 1]} : vector<2x16x32xf32> to vector<2x16x8xf32>
    "tpu.trace_start"() <{level = 10 : i32, message = "bqc,bkc->bqk"}> : () -> ()
    %cst_26 = arith.constant dense<0.000000e+00> : vector<2x16x16xf32>
    %63 = tpu.matmul %61, %62, %cst_26 {dimension_numbers = #tpu.dot_dimension_numbers<[2], [2], [1], [1], [0, 0, 0, 1, 1, 1], [0], [0]>} : vector<2x16x8xf32>, vector<2x16x8xf32>, vector<2x16x16xf32> -> vector<2x16x16xf32>
    "tpu.trace_stop"() : () -> ()
    %cst_27 = arith.constant dense<0xFF800000> : vector<2x16xf32>
    %64 = vector.multi_reduction <maximumf>, %63, %cst_27 [2] : vector<2x16x16xf32> to vector<2x16xf32>
    %65 = vector.shape_cast %64 : vector<2x16xf32> to vector<2x16x1xf32>
    %66 = vector.broadcast %65 : vector<2x16x1xf32> to vector<2x16x16xf32>
    %67 = arith.subf %63, %66 : vector<2x16x16xf32>
    %68 = math.exp %67 : vector<2x16x16xf32>
    %cst_28 = arith.constant dense<0.000000e+00> : vector<2x16xf32>
    %69 = vector.multi_reduction <add>, %68, %cst_28 [2] : vector<2x16x16xf32> to vector<2x16xf32>
    %70 = vector.shape_cast %69 : vector<2x16xf32> to vector<2x16x1xf32>
    %71 = tpu.reciprocal %70 {approx = true} : vector<2x16x1xf32> -> vector<2x16x1xf32>
    %72 = arith.mulf %70, %71 : vector<2x16x1xf32>
    %cst_29 = arith.constant 2.000000e+00 : f32
    %73 = vector.broadcast %cst_29 : f32 to vector<2x16x1xf32>
    %74 = arith.subf %73, %72 : vector<2x16x1xf32>
    %75 = arith.mulf %71, %74 : vector<2x16x1xf32>
    %76 = vector.broadcast %75 : vector<2x16x1xf32> to vector<2x16x16xf32>
    %77 = arith.mulf %68, %76 : vector<2x16x16xf32>
    %78 = vector.extract_strided_slice %36 {offsets = [0, 0, 8], sizes = [2, 16, 8], strides = [1, 1, 1]} : vector<2x16x32xf32> to vector<2x16x8xf32>
    "tpu.trace_start"() <{level = 10 : i32, message = "bqk,bkc->bqc"}> : () -> ()
    %cst_30 = arith.constant dense<0.000000e+00> : vector<2x16x8xf32>
    %79 = tpu.matmul %77, %78, %cst_30 {dimension_numbers = #tpu.dot_dimension_numbers<[2], [1], [1], [2], [0, 0, 0, 1, 1, 2], [0], [0]>} : vector<2x16x16xf32>, vector<2x16x8xf32>, vector<2x16x8xf32> -> vector<2x16x8xf32>
    "tpu.trace_stop"() : () -> ()
    %80 = vector.shape_cast %79 : vector<2x16x8xf32> to vector<32x8xf32>
    %81 = vector.extract_strided_slice %24 {offsets = [8, 0], sizes = [8, 32], strides = [1, 1]} : vector<32x32xf32> to vector<8x32xf32>
    %cst_31 = arith.constant dense<0.000000e+00> : vector<32x32xf32>
    %82 = tpu.matmul %80, %81, %cst_31 {dimension_numbers = #tpu.dot_dimension_numbers<[1], [0], [0], [1], [0, 0, 1, 1], [], []>} : vector<32x8xf32>, vector<8x32xf32>, vector<32x32xf32> -> vector<32x32xf32>
    %83 = arith.addf %60, %82 : vector<32x32xf32>
    %84 = vector.extract_strided_slice %33 {offsets = [0, 0, 16], sizes = [2, 16, 8], strides = [1, 1, 1]} : vector<2x16x32xf32> to vector<2x16x8xf32>
    %85 = vector.extract_strided_slice %35 {offsets = [0, 0, 16], sizes = [2, 16, 8], strides = [1, 1, 1]} : vector<2x16x32xf32> to vector<2x16x8xf32>
    "tpu.trace_start"() <{level = 10 : i32, message = "bqc,bkc->bqk"}> : () -> ()
    %cst_32 = arith.constant dense<0.000000e+00> : vector<2x16x16xf32>
    %86 = tpu.matmul %84, %85, %cst_32 {dimension_numbers = #tpu.dot_dimension_numbers<[2], [2], [1], [1], [0, 0, 0, 1, 1, 1], [0], [0]>} : vector<2x16x8xf32>, vector<2x16x8xf32>, vector<2x16x16xf32> -> vector<2x16x16xf32>
    "tpu.trace_stop"() : () -> ()
    %cst_33 = arith.constant dense<0xFF800000> : vector<2x16xf32>
    %87 = vector.multi_reduction <maximumf>, %86, %cst_33 [2] : vector<2x16x16xf32> to vector<2x16xf32>
    %88 = vector.shape_cast %87 : vector<2x16xf32> to vector<2x16x1xf32>
    %89 = vector.broadcast %88 : vector<2x16x1xf32> to vector<2x16x16xf32>
    %90 = arith.subf %86, %89 : vector<2x16x16xf32>
    %91 = math.exp %90 : vector<2x16x16xf32>
    %cst_34 = arith.constant dense<0.000000e+00> : vector<2x16xf32>
    %92 = vector.multi_reduction <add>, %91, %cst_34 [2] : vector<2x16x16xf32> to vector<2x16xf32>
    %93 = vector.shape_cast %92 : vector<2x16xf32> to vector<2x16x1xf32>
    %94 = tpu.reciprocal %93 {approx = true} : vector<2x16x1xf32> -> vector<2x16x1xf32>
    %95 = arith.mulf %93, %94 : vector<2x16x1xf32>
    %cst_35 = arith.constant 2.000000e+00 : f32
    %96 = vector.broadcast %cst_35 : f32 to vector<2x16x1xf32>
    %97 = arith.subf %96, %95 : vector<2x16x1xf32>
    %98 = arith.mulf %94, %97 : vector<2x16x1xf32>
    %99 = vector.broadcast %98 : vector<2x16x1xf32> to vector<2x16x16xf32>
    %100 = arith.mulf %91, %99 : vector<2x16x16xf32>
    %101 = vector.extract_strided_slice %36 {offsets = [0, 0, 16], sizes = [2, 16, 8], strides = [1, 1, 1]} : vector<2x16x32xf32> to vector<2x16x8xf32>
    "tpu.trace_start"() <{level = 10 : i32, message = "bqk,bkc->bqc"}> : () -> ()
    %cst_36 = arith.constant dense<0.000000e+00> : vector<2x16x8xf32>
    %102 = tpu.matmul %100, %101, %cst_36 {dimension_numbers = #tpu.dot_dimension_numbers<[2], [1], [1], [2], [0, 0, 0, 1, 1, 2], [0], [0]>} : vector<2x16x16xf32>, vector<2x16x8xf32>, vector<2x16x8xf32> -> vector<2x16x8xf32>
    "tpu.trace_stop"() : () -> ()
    %103 = vector.shape_cast %102 : vector<2x16x8xf32> to vector<32x8xf32>
    %104 = vector.extract_strided_slice %24 {offsets = [16, 0], sizes = [8, 32], strides = [1, 1]} : vector<32x32xf32> to vector<8x32xf32>
    %cst_37 = arith.constant dense<0.000000e+00> : vector<32x32xf32>
    %105 = tpu.matmul %103, %104, %cst_37 {dimension_numbers = #tpu.dot_dimension_numbers<[1], [0], [0], [1], [0, 0, 1, 1], [], []>} : vector<32x8xf32>, vector<8x32xf32>, vector<32x32xf32> -> vector<32x32xf32>
    %106 = arith.addf %83, %105 : vector<32x32xf32>
    %107 = vector.extract_strided_slice %33 {offsets = [0, 0, 24], sizes = [2, 16, 8], strides = [1, 1, 1]} : vector<2x16x32xf32> to vector<2x16x8xf32>
    %108 = vector.extract_strided_slice %35 {offsets = [0, 0, 24], sizes = [2, 16, 8], strides = [1, 1, 1]} : vector<2x16x32xf32> to vector<2x16x8xf32>
    "tpu.trace_start"() <{level = 10 : i32, message = "bqc,bkc->bqk"}> : () -> ()
    %cst_38 = arith.constant dense<0.000000e+00> : vector<2x16x16xf32>
    %109 = tpu.matmul %107, %108, %cst_38 {dimension_numbers = #tpu.dot_dimension_numbers<[2], [2], [1], [1], [0, 0, 0, 1, 1, 1], [0], [0]>} : vector<2x16x8xf32>, vector<2x16x8xf32>, vector<2x16x16xf32> -> vector<2x16x16xf32>
    "tpu.trace_stop"() : () -> ()
    %cst_39 = arith.constant dense<0xFF800000> : vector<2x16xf32>
    %110 = vector.multi_reduction <maximumf>, %109, %cst_39 [2] : vector<2x16x16xf32> to vector<2x16xf32>
    %111 = vector.shape_cast %110 : vector<2x16xf32> to vector<2x16x1xf32>
    %112 = vector.broadcast %111 : vector<2x16x1xf32> to vector<2x16x16xf32>
    %113 = arith.subf %109, %112 : vector<2x16x16xf32>
    %114 = math.exp %113 : vector<2x16x16xf32>
    %cst_40 = arith.constant dense<0.000000e+00> : vector<2x16xf32>
    %115 = vector.multi_reduction <add>, %114, %cst_40 [2] : vector<2x16x16xf32> to vector<2x16xf32>
    %116 = vector.shape_cast %115 : vector<2x16xf32> to vector<2x16x1xf32>
    %117 = tpu.reciprocal %116 {approx = true} : vector<2x16x1xf32> -> vector<2x16x1xf32>
    %118 = arith.mulf %116, %117 : vector<2x16x1xf32>
    %cst_41 = arith.constant 2.000000e+00 : f32
    %119 = vector.broadcast %cst_41 : f32 to vector<2x16x1xf32>
    %120 = arith.subf %119, %118 : vector<2x16x1xf32>
    %121 = arith.mulf %117, %120 : vector<2x16x1xf32>
    %122 = vector.broadcast %121 : vector<2x16x1xf32> to vector<2x16x16xf32>
    %123 = arith.mulf %114, %122 : vector<2x16x16xf32>
    %124 = vector.extract_strided_slice %36 {offsets = [0, 0, 24], sizes = [2, 16, 8], strides = [1, 1, 1]} : vector<2x16x32xf32> to vector<2x16x8xf32>
    "tpu.trace_start"() <{level = 10 : i32, message = "bqk,bkc->bqc"}> : () -> ()
    %cst_42 = arith.constant dense<0.000000e+00> : vector<2x16x8xf32>
    %125 = tpu.matmul %123, %124, %cst_42 {dimension_numbers = #tpu.dot_dimension_numbers<[2], [1], [1], [2], [0, 0, 0, 1, 1, 2], [0], [0]>} : vector<2x16x16xf32>, vector<2x16x8xf32>, vector<2x16x8xf32> -> vector<2x16x8xf32>
    "tpu.trace_stop"() : () -> ()
    %126 = vector.shape_cast %125 : vector<2x16x8xf32> to vector<32x8xf32>
    %127 = vector.extract_strided_slice %24 {offsets = [24, 0], sizes = [8, 32], strides = [1, 1]} : vector<32x32xf32> to vector<8x32xf32>
    %cst_43 = arith.constant dense<0.000000e+00> : vector<32x32xf32>
    %128 = tpu.matmul %126, %127, %cst_43 {dimension_numbers = #tpu.dot_dimension_numbers<[1], [0], [0], [1], [0, 0, 1, 1], [], []>} : vector<32x8xf32>, vector<8x32xf32>, vector<32x32xf32> -> vector<32x32xf32>
    %129 = arith.addf %106, %128 : vector<32x32xf32>
    %130 = vector.broadcast %11 : vector<1x32xf32> to vector<32x32xf32>
    %131 = arith.addf %129, %130 : vector<32x32xf32>
    %132 = arith.addf %5, %131 : vector<32x32xf32>
    %cst_44 = arith.constant dense<0.000000e+00> : vector<32xf32>
    %133 = vector.multi_reduction <add>, %132, %cst_44 [1] : vector<32x32xf32> to vector<32xf32>
    %134 = vector.shape_cast %133 : vector<32xf32> to vector<32x1xf32>
    %cst_45 = arith.constant 3.200000e+01 : f32
    %135 = vector.broadcast %cst_45 : f32 to vector<32x1xf32>
    %136 = arith.divf %134, %135 : vector<32x1xf32>
    %137 = vector.broadcast %136 : vector<32x1xf32> to vector<32x32xf32>
    %138 = arith.subf %132, %137 : vector<32x32xf32>
    %139 = arith.mulf %138, %138 : vector<32x32xf32>
    %cst_46 = arith.constant dense<0.000000e+00> : vector<32xf32>
    %140 = vector.multi_reduction <add>, %139, %cst_46 [1] : vector<32x32xf32> to vector<32xf32>
    %141 = vector.shape_cast %140 : vector<32xf32> to vector<32x1xf32>
    %cst_47 = arith.constant 3.200000e+01 : f32
    %142 = vector.broadcast %cst_47 : f32 to vector<32x1xf32>
    %143 = arith.divf %141, %142 : vector<32x1xf32>
    %144 = vector.broadcast %136 : vector<32x1xf32> to vector<32x32xf32>
    %145 = arith.subf %132, %144 : vector<32x32xf32>
    %cst_48 = arith.constant 9.99999974E-6 : f32
    %146 = vector.broadcast %cst_48 : f32 to vector<32x1xf32>
    %147 = arith.addf %143, %146 : vector<32x1xf32>
    %148 = math.rsqrt %147 : vector<32x1xf32>
    %149 = vector.broadcast %148 : vector<32x1xf32> to vector<32x32xf32>
    %150 = arith.mulf %145, %149 : vector<32x32xf32>
    %151 = vector.broadcast %13 : vector<1x32xf32> to vector<32x32xf32>
    %152 = arith.mulf %150, %151 : vector<32x32xf32>
    %153 = vector.broadcast %14 : vector<1x32xf32> to vector<32x32xf32>
    %154 = arith.addf %152, %153 : vector<32x32xf32>
    %c0_49 = arith.constant 0 : index
    %c0_50 = arith.constant 0 : index
    %c0_51 = arith.constant 0 : index
    %155 = vector.load %arg6[%c0_49, %c0_50, %c0_51] : memref<1x32x64xf32, #tpu.memory_space<vmem>>, vector<1x32x64xf32>
    %156 = vector.shape_cast %155 : vector<1x32x64xf32> to vector<32x64xf32>
    %c0_52 = arith.constant 0 : index
    %c0_53 = arith.constant 0 : index
    %c0_54 = arith.constant 0 : index
    %157 = vector.load %arg7[%c0_52, %c0_53, %c0_54] : memref<1x1x64xf32, #tpu.memory_space<vmem>>, vector<1x1x64xf32>
    %158 = vector.shape_cast %157 : vector<1x1x64xf32> to vector<1x64xf32>
    %c0_55 = arith.constant 0 : index
    %c0_56 = arith.constant 0 : index
    %c0_57 = arith.constant 0 : index
    %159 = vector.load %arg8[%c0_55, %c0_56, %c0_57] : memref<1x64x32xf32, #tpu.memory_space<vmem>>, vector<1x64x32xf32>
    %160 = vector.shape_cast %159 : vector<1x64x32xf32> to vector<64x32xf32>
    %cst_58 = arith.constant dense<0.000000e+00> : vector<32x64xf32>
    %161 = tpu.matmul %154, %156, %cst_58 {dimension_numbers = #tpu.dot_dimension_numbers<[1], [0], [0], [1], [0, 0, 1, 1], [], []>} : vector<32x32xf32>, vector<32x64xf32>, vector<32x64xf32> -> vector<32x64xf32>
    %162 = vector.broadcast %158 : vector<1x64xf32> to vector<32x64xf32>
    %163 = arith.addf %161, %162 : vector<32x64xf32>
    %cst_59 = arith.constant 0.000000e+00 : f32
    %164 = vector.broadcast %cst_59 : f32 to vector<32x64xf32>
    %165 = arith.maximumf %163, %164 : vector<32x64xf32>
    %cst_60 = arith.constant dense<0.000000e+00> : vector<32x32xf32>
    %166 = tpu.matmul %165, %160, %cst_60 {dimension_numbers = #tpu.dot_dimension_numbers<[1], [0], [0], [1], [0, 0, 1, 1], [], []>} : vector<32x64xf32>, vector<64x32xf32>, vector<32x32xf32> -> vector<32x32xf32>
    %167 = vector.broadcast %12 : vector<1x32xf32> to vector<32x32xf32>
    %168 = arith.addf %166, %167 : vector<32x32xf32>
    %169 = arith.addf %154, %168 : vector<32x32xf32>
    %cst_61 = arith.constant dense<0.000000e+00> : vector<32xf32>
    %170 = vector.multi_reduction <add>, %169, %cst_61 [1] : vector<32x32xf32> to vector<32xf32>
    %171 = vector.shape_cast %170 : vector<32xf32> to vector<32x1xf32>
    %cst_62 = arith.constant 3.200000e+01 : f32
    %172 = vector.broadcast %cst_62 : f32 to vector<32x1xf32>
    %173 = arith.divf %171, %172 : vector<32x1xf32>
    %174 = vector.broadcast %173 : vector<32x1xf32> to vector<32x32xf32>
    %175 = arith.subf %169, %174 : vector<32x32xf32>
    %176 = arith.mulf %175, %175 : vector<32x32xf32>
    %cst_63 = arith.constant dense<0.000000e+00> : vector<32xf32>
    %177 = vector.multi_reduction <add>, %176, %cst_63 [1] : vector<32x32xf32> to vector<32xf32>
    %178 = vector.shape_cast %177 : vector<32xf32> to vector<32x1xf32>
    %cst_64 = arith.constant 3.200000e+01 : f32
    %179 = vector.broadcast %cst_64 : f32 to vector<32x1xf32>
    %180 = arith.divf %178, %179 : vector<32x1xf32>
    %181 = vector.broadcast %173 : vector<32x1xf32> to vector<32x32xf32>
    %182 = arith.subf %169, %181 : vector<32x32xf32>
    %cst_65 = arith.constant 9.99999974E-6 : f32
    %183 = vector.broadcast %cst_65 : f32 to vector<32x1xf32>
    %184 = arith.addf %180, %183 : vector<32x1xf32>
    %185 = math.rsqrt %184 : vector<32x1xf32>
    %186 = vector.broadcast %185 : vector<32x1xf32> to vector<32x32xf32>
    %187 = arith.mulf %182, %186 : vector<32x32xf32>
    %188 = vector.broadcast %15 : vector<1x32xf32> to vector<32x32xf32>
    %189 = arith.mulf %187, %188 : vector<32x32xf32>
    %190 = vector.broadcast %16 : vector<1x32xf32> to vector<32x32xf32>
    %191 = arith.addf %189, %190 : vector<32x32xf32>
    %c0_66 = arith.constant 0 : index
    %c0_67 = arith.constant 0 : index
    %192 = vector.load %arg11[%c0_66, %c0_67] : memref<32x32xf32, #tpu.memory_space<vmem>>, vector<32x32xf32>
    tpu.vector_store %arg11[%c0_66, %c0_67], %191 {strides = array<i32>} : memref<32x32xf32, #tpu.memory_space<vmem>>, vector<32x32xf32>,
    %193 = vector.shape_cast %191 : vector<32x32xf32> to vector<2x16x32xf32>
    %c0_68 = arith.constant 0 : index
    %c0_69 = arith.constant 0 : index
    %c0_70 = arith.constant 0 : index
    %194 = vector.load %arg10[%c0_68, %c0_69, %c0_70] : memref<2x16x32xf32, #tpu.memory_space<vmem>>, vector<2x16x32xf32>
    tpu.vector_store %arg10[%c0_68, %c0_69, %c0_70], %193 {strides = array<i32>} : memref<2x16x32xf32, #tpu.memory_space<vmem>>, vector<2x16x32xf32>,
    return
  }
  func.func @transform_0(%arg0: i32) -> (i32, i32, i32) {
    %c0_i32 = arith.constant 0 : i32
    %c0_i32_0 = arith.constant 0 : i32
    %c0_i32_1 = arith.constant 0 : i32
    %c0_i32_2 = arith.constant 0 : i32
    return %c0_i32, %c0_i32_0, %c0_i32_1 : i32, i32, i32
  }
  func.func @transform_1(%arg0: i32) -> (i32, i32, i32) {
    %c0_i32 = arith.constant 0 : i32
    %c0_i32_0 = arith.constant 0 : i32
    %c0_i32_1 = arith.constant 0 : i32
    %c0_i32_2 = arith.constant 0 : i32
    return %c0_i32, %c0_i32_0, %c0_i32_1 : i32, i32, i32
  }
  func.func @transform_2(%arg0: i32) -> (i32, i32, i32) {
    %c0_i32 = arith.constant 0 : i32
    %c0_i32_0 = arith.constant 0 : i32
    %c0_i32_1 = arith.constant 0 : i32
    return %arg0, %c0_i32, %c0_i32_0 : i32, i32, i32
  }
  func.func @transform_3(%arg0: i32) -> (i32, i32, i32) {
    %c0_i32 = arith.constant 0 : i32
    %c0_i32_0 = arith.constant 0 : i32
    %c0_i32_1 = arith.constant 0 : i32
    return %arg0, %c0_i32, %c0_i32_0 : i32, i32, i32
  }
  func.func @transform_4(%arg0: i32) -> (i32, i32, i32, i32) {
    %c0_i32 = arith.constant 0 : i32
    %c0_i32_0 = arith.constant 0 : i32
    %c0_i32_1 = arith.constant 0 : i32
    %c0_i32_2 = arith.constant 0 : i32
    return %arg0, %c0_i32, %c0_i32_0, %c0_i32_1 : i32, i32, i32, i32
  }
  func.func @transform_5(%arg0: i32) -> (i32, i32, i32) {
    %c0_i32 = arith.constant 0 : i32
    %c0_i32_0 = arith.constant 0 : i32
    %c0_i32_1 = arith.constant 0 : i32
    return %arg0, %c0_i32, %c0_i32_0 : i32, i32, i32
  }
  func.func @transform_6(%arg0: i32) -> (i32, i32, i32) {
    %c0_i32 = arith.constant 0 : i32
    %c0_i32_0 = arith.constant 0 : i32
    %c0_i32_1 = arith.constant 0 : i32
    return %arg0, %c0_i32, %c0_i32_0 : i32, i32, i32
  }
  func.func @transform_7(%arg0: i32) -> (i32, i32, i32) {
    %c0_i32 = arith.constant 0 : i32
    %c0_i32_0 = arith.constant 0 : i32
    %c0_i32_1 = arith.constant 0 : i32
    return %arg0, %c0_i32, %c0_i32_0 : i32, i32, i32
  }
  func.func @transform_8(%arg0: i32) -> (i32, i32, i32) {
    %c0_i32 = arith.constant 0 : i32
    %c0_i32_0 = arith.constant 0 : i32
    %c0_i32_1 = arith.constant 0 : i32
    return %arg0, %c0_i32, %c0_i32_0 : i32, i32, i32
  }
  func.func @transform_9(%arg0: i32) -> (i32, i32, i32) {
    %c0_i32 = arith.constant 0 : i32
    %c0_i32_0 = arith.constant 0 : i32
    %c0_i32_1 = arith.constant 0 : i32
    %c0_i32_2 = arith.constant 0 : i32
    return %c0_i32, %c0_i32_0, %c0_i32_1 : i32, i32, i32
  }
}

</mosaic_0001>

<llo_original>
// kernel: tpu_custom_call.1
$region0: #{tpu_custom_call.1}
  #allocation0 [shape = 'u32[]', space=smem, size = 0x4, offset = 0x4, fixed_abs, tag = 'smem constant byte address 0x4 - core index']
  #allocation1 [shape = 'u32[144,128]{1,0:T(1,128)}', space=vmem, size = 0x12000, scoped, tag = 'internal scratch']
  #allocation2 [shape = 'f32[32,32]{1,0:T(8,128)}', space=vmem, size = 0x4000, scoped, tag = 'scratch operand']
  %s0 = inlined_call_operand.vmem [shape: f32[2,16,32], index: 0, kind: input, shape index: {}]
  %s1 = inlined_call_operand.hbm [shape: f32[2,16,32], index: 1, kind: input, shape index: {}]
  %s2 = inlined_call_operand.vmem [shape: f32[2,32,64], index: 2, kind: input, shape index: {}]
  %s3 = inlined_call_operand.vmem [shape: f32[2,1,64], index: 3, kind: input, shape index: {}]
  %s4 = inlined_call_operand.vmem [shape: f32[2,2,32,32], index: 4, kind: input, shape index: {}]
  %s5 = inlined_call_operand.hbm [shape: f32[2,32,64], index: 5, kind: input, shape index: {}]
  %s6 = inlined_call_operand.vmem [shape: f32[2,1,64], index: 6, kind: input, shape index: {}]
  %s7 = inlined_call_operand.vmem [shape: f32[2,64,32], index: 7, kind: input, shape index: {}]
  %s8 = inlined_call_operand.vmem [shape: f32[2,7,32], index: 8, kind: input, shape index: {}]
  %s9 = inlined_call_operand.hbm [shape: f32[2,16,32], index: 9, kind: output, shape index: {}]
  %s10 = sld [smem:[#allocation0]]
  $region81: #{tpu_custom_call.1} parent=0
    _
  %s12 = ssub.s32 1, %s10
  %s13 = scalar_select 0, %s12, %s10
  $region1: #{tpu_custom_call.1} parent=0
    #allocation3 [shape = 'u8[16384]{0}', space=vmem, size = 0x4000, scoped, tag = 'input window, operand 1, single buffered']
    #allocation4 [shape = 's32[2]{0}', space=sflag, size = 0x8, scoped, tag = 'scoped memory for tpu_custom_call.1']
    #allocation5 [shape = 's32[2]{0}', space=sflag, size = 0x8, scoped, tag = 'scoped memory for tpu_custom_call.1']
    #allocation6 [shape = 'u8[32768]{0}', space=vmem, size = 0x8000, scoped, tag = 'input window, operand 5']
    #allocation7 [shape = 's32[2]{0}', space=sflag, size = 0x8, scoped, tag = 'scoped memory for tpu_custom_call.1']
    #allocation8 [shape = 'u8[16384]{0}', space=vmem, size = 0x4000, scoped, tag = 'output window, operand 0, single buffered']
    %14 = vsyncpa [#allocation4], 0
    %15 = vsyncpa [#allocation7], 0
    %s16 = scalar_lea.sflag [#allocation7], 1
    %17 = vsyncpa %s16, 0
    %18 = vsyncpa [#allocation5], 0
    loop: start=0, step=1, limit=4
    $region2: #{tpu_custom_call.1} parent=1 // loop_pre_header
      _
    $region3: #{tpu_custom_call.1} parent=1 // loop_header
      %s20 = sphi 0, %s24
      %p21 = scmp.ge.s32.totalorder %s20, 4
      %s28 = sphi 0, %s28
      %s30 = sphi 0, %s28
      %s31 = sphi 0, %s30
      %s45 = sphi 0, %s31
      %s49 = sphi 0, %s49
      %s51 = sphi 0, %s49
      %s52 = sphi 0, %s51
      %s66 = sphi 0, %s52
      %s72 = sphi 0, %s74
      %s75 = sphi 0, %s72
      %s76 = sphi 0, %s75
      %s92 = sphi 0, %s76
      %s98 = sphi 0, %s100
      %s101 = sphi 0, %s98
      %s102 = sphi 0, %s101
      %s118 = sphi 0, %s102
      %s124 = sphi 0, %s126
      %s127 = sphi 0, %s124
      %s128 = sphi 0, %s127
      %s144 = sphi 0, %s128
      %s150 = sphi 0, %s152
      %s153 = sphi 0, %s150
      %s154 = sphi 0, %s153
      %s170 = sphi 0, %s154
      %s176 = sphi 0, %s178
      %s179 = sphi 0, %s176
      %s180 = sphi 0, %s179
      %s196 = sphi 0, %s180
      %s202 = sphi 0, %s204
      %s205 = sphi 0, %s202
      %s206 = sphi 0, %s205
      %s222 = sphi 0, %s206
      %s228 = sphi 0, %s230
      %s231 = sphi 0, %s228
      %s232 = sphi 0, %s231
      %s248 = sphi 0, %s232
      %s252 = sphi 0, %s252
      %s254 = sphi 0, %s252
      %s255 = sphi 0, %s254
      %s269 = sphi 0, %s255
    $region4: #{tpu_custom_call.1} parent=1 // loop_header_branch
      %23 = sbr.rel (%p21) target = $region8
    $region5: #{tpu_custom_call.1} parent=1 // loop_body
      %s25 = ssub.s32 %s20, 1
      %s26 = ssub.s32 %s20, 2
      %s27 = sadd.s32 %s20, 1
      %s29 = sadd.s32 %s28, 1
      %p32 = scmp.eq.s32.totalorder %s20, 1
      %p33 = scmp.ne.s32.totalorder %s28, %s30
      %p34 = scmp.eq.s32.totalorder %s20, 0
      %p35 = por %p33, %p34
      %p36 = scmp.ne.s32.totalorder %s28, %s30
      %p37 = scmp.eq.s32.totalorder %s25, 1
      %p38 = por %p36, %p37
      %p39 = scmp.ne.s32.totalorder %s30, %s31
      %p40 = scmp.eq.s32.totalorder %s25, 0
      %p41 = por %p39, %p40
      %p42 = scmp.ne.s32.totalorder %s30, %s31
      %p43 = scmp.eq.s32.totalorder %s26, 1
      %p44 = por %p42, %p43
      %p46 = scmp.ne.s32.totalorder %s31, %s45
      %p47 = scmp.eq.s32.totalorder %s26, 0
      %p48 = por %p46, %p47
      %s50 = sadd.s32 %s49, 1
      %p53 = scmp.eq.s32.totalorder %s20, 1
      %p54 = scmp.ne.s32.totalorder %s49, %s51
      %p55 = scmp.eq.s32.totalorder %s20, 0
      %p56 = por %p54, %p55
      %p57 = scmp.ne.s32.totalorder %s49, %s51
      %p58 = scmp.eq.s32.totalorder %s25, 1
      %p59 = por %p57, %p58
      %p60 = scmp.ne.s32.totalorder %s51, %s52
      %p61 = scmp.eq.s32.totalorder %s25, 0
      %p62 = por %p60, %p61
      %p63 = scmp.ne.s32.totalorder %s51, %s52
      %p64 = scmp.eq.s32.totalorder %s26, 1
      %p65 = por %p63, %p64
      %p67 = scmp.ne.s32.totalorder %s52, %s66
      %p68 = scmp.eq.s32.totalorder %s26, 0
      %p69 = por %p67, %p68
      %s70 = ssub.s32 %s20, %s27
      %p71 = scmp.eq.s32.totalorder %s70, 0
      %s73 = sadd.s32 %s72, 1
      %s74 = scalar_select %p71, %s72, %s73
      %p77 = pneg %p71
      %p78 = scmp.eq.s32.totalorder %s20, 1
      %p79 = por %p77, %p78
      %p80 = scmp.ne.s32.totalorder %s72, %s75
      %p81 = scmp.eq.s32.totalorder %s20, 0
      %p82 = por %p80, %p81
      %p83 = scmp.ne.s32.totalorder %s72, %s75
      %p84 = scmp.eq.s32.totalorder %s25, 1
      %p85 = por %p83, %p84
      %p86 = scmp.ne.s32.totalorder %s75, %s76
      %p87 = scmp.eq.s32.totalorder %s25, 0
      %p88 = por %p86, %p87
      %p89 = scmp.ne.s32.totalorder %s75, %s76
      %p90 = scmp.eq.s32.totalorder %s26, 1
      %p91 = por %p89, %p90
      %p93 = scmp.ne.s32.totalorder %s76, %s92
      %p94 = scmp.eq.s32.totalorder %s26, 0
      %p95 = por %p93, %p94
      %s96 = ssub.s32 %s20, %s27
      %p97 = scmp.eq.s32.totalorder %s96, 0
      %s99 = sadd.s32 %s98, 1
      %s100 = scalar_select %p97, %s98, %s99
      %p103 = pneg %p97
      %p104 = scmp.eq.s32.totalorder %s20, 1
      %p105 = por %p103, %p104
      %p106 = scmp.ne.s32.totalorder %s98, %s101
      %p107 = scmp.eq.s32.totalorder %s20, 0
      %p108 = por %p106, %p107
      %p109 = scmp.ne.s32.totalorder %s98, %s101
      %p110 = scmp.eq.s32.totalorder %s25, 1
      %p111 = por %p109, %p110
      %p112 = scmp.ne.s32.totalorder %s101, %s102
      %p113 = scmp.eq.s32.totalorder %s25, 0
      %p114 = por %p112, %p113
      %p115 = scmp.ne.s32.totalorder %s101, %s102
      %p116 = scmp.eq.s32.totalorder %s26, 1
      %p117 = por %p115, %p116
      %p119 = scmp.ne.s32.totalorder %s102, %s118
      %p120 = scmp.eq.s32.totalorder %s26, 0
      %p121 = por %p119, %p120
      %s122 = ssub.s32 %s20, %s27
      %p123 = scmp.eq.s32.totalorder %s122, 0
      %s125 = sadd.s32 %s124, 1
      %s126 = scalar_select %p123, %s124, %s125
      %p129 = pneg %p123
      %p130 = scmp.eq.s32.totalorder %s20, 1
      %p131 = por %p129, %p130
      %p132 = scmp.ne.s32.totalorder %s124, %s127
      %p133 = scmp.eq.s32.totalorder %s20, 0
      %p134 = por %p132, %p133
      %p135 = scmp.ne.s32.totalorder %s124, %s127
      %p136 = scmp.eq.s32.totalorder %s25, 1
      %p137 = por %p135, %p136
      %p138 = scmp.ne.s32.totalorder %s127, %s128
      %p139 = scmp.eq.s32.totalorder %s25, 0
      %p140 = por %p138, %p139
      %p141 = scmp.ne.s32.totalorder %s127, %s128
      %p142 = scmp.eq.s32.totalorder %s26, 1
      %p143 = por %p141, %p142
      %p145 = scmp.ne.s32.totalorder %s128, %s144
      %p146 = scmp.eq.s32.totalorder %s26, 0
      %p147 = por %p145, %p146
      %s148 = ssub.s32 %s20, %s27
      %p149 = scmp.eq.s32.totalorder %s148, 0
      %s151 = sadd.s32 %s150, 1
      %s152 = scalar_select %p149, %s150, %s151
      %p155 = pneg %p149
      %p156 = scmp.eq.s32.totalorder %s20, 1
      %p157 = por %p155, %p156
      %p158 = scmp.ne.s32.totalorder %s150, %s153
      %p159 = scmp.eq.s32.totalorder %s20, 0
      %p160 = por %p158, %p159
      %p161 = scmp.ne.s32.totalorder %s150, %s153
      %p162 = scmp.eq.s32.totalorder %s25, 1
      %p163 = por %p161, %p162
      %p164 = scmp.ne.s32.totalorder %s153, %s154
      %p165 = scmp.eq.s32.totalorder %s25, 0
      %p166 = por %p164, %p165
      %p167 = scmp.ne.s32.totalorder %s153, %s154
      %p168 = scmp.eq.s32.totalorder %s26, 1
      %p169 = por %p167, %p168
      %p171 = scmp.ne.s32.totalorder %s154, %s170
      %p172 = scmp.eq.s32.totalorder %s26, 0
      %p173 = por %p171, %p172
      %s174 = ssub.s32 %s20, %s27
      %p175 = scmp.eq.s32.totalorder %s174, 0
      %s177 = sadd.s32 %s176, 1
      %s178 = scalar_select %p175, %s176, %s177
      %p181 = pneg %p175
      %p182 = scmp.eq.s32.totalorder %s20, 1
      %p183 = por %p181, %p182
      %p184 = scmp.ne.s32.totalorder %s176, %s179
      %p185 = scmp.eq.s32.totalorder %s20, 0
      %p186 = por %p184, %p185
      %p187 = scmp.ne.s32.totalorder %s176, %s179
      %p188 = scmp.eq.s32.totalorder %s25, 1
      %p189 = por %p187, %p188
      %p190 = scmp.ne.s32.totalorder %s179, %s180
      %p191 = scmp.eq.s32.totalorder %s25, 0
      %p192 = por %p190, %p191
      %p193 = scmp.ne.s32.totalorder %s179, %s180
      %p194 = scmp.eq.s32.totalorder %s26, 1
      %p195 = por %p193, %p194
      %p197 = scmp.ne.s32.totalorder %s180, %s196
      %p198 = scmp.eq.s32.totalorder %s26, 0
      %p199 = por %p197, %p198
      %s200 = ssub.s32 %s20, %s27
      %p201 = scmp.eq.s32.totalorder %s200, 0
      %s203 = sadd.s32 %s202, 1
      %s204 = scalar_select %p201, %s202, %s203
      %p207 = pneg %p201
      %p208 = scmp.eq.s32.totalorder %s20, 1
      %p209 = por %p207, %p208
      %p210 = scmp.ne.s32.totalorder %s202, %s205
      %p211 = scmp.eq.s32.totalorder %s20, 0
      %p212 = por %p210, %p211
      %p213 = scmp.ne.s32.totalorder %s202, %s205
      %p214 = scmp.eq.s32.totalorder %s25, 1
      %p215 = por %p213, %p214
      %p216 = scmp.ne.s32.totalorder %s205, %s206
      %p217 = scmp.eq.s32.totalorder %s25, 0
      %p218 = por %p216, %p217
      %p219 = scmp.ne.s32.totalorder %s205, %s206
      %p220 = scmp.eq.s32.totalorder %s26, 1
      %p221 = por %p219, %p220
      %p223 = scmp.ne.s32.totalorder %s206, %s222
      %p224 = scmp.eq.s32.totalorder %s26, 0
      %p225 = por %p223, %p224
      %s226 = ssub.s32 %s20, %s27
      %p227 = scmp.eq.s32.totalorder %s226, 0
      %s229 = sadd.s32 %s228, 1
      %s230 = scalar_select %p227, %s228, %s229
      %p233 = pneg %p227
      %p234 = scmp.eq.s32.totalorder %s20, 1
      %p235 = por %p233, %p234
      %p236 = scmp.ne.s32.totalorder %s228, %s231
      %p237 = scmp.eq.s32.totalorder %s20, 0
      %p238 = por %p236, %p237
      %p239 = scmp.ne.s32.totalorder %s228, %s231
      %p240 = scmp.eq.s32.totalorder %s25, 1
      %p241 = por %p239, %p240
      %p242 = scmp.ne.s32.totalorder %s231, %s232
      %p243 = scmp.eq.s32.totalorder %s25, 0
      %p244 = por %p242, %p243
      %p245 = scmp.ne.s32.totalorder %s231, %s232
      %p246 = scmp.eq.s32.totalorder %s26, 1
      %p247 = por %p245, %p246
      %p249 = scmp.ne.s32.totalorder %s232, %s248
      %p250 = scmp.eq.s32.totalorder %s26, 0
      %p251 = por %p249, %p250
      %s253 = sadd.s32 %s252, 1
      %p256 = scmp.eq.s32.totalorder %s20, 1
      %p257 = scmp.ne.s32.totalorder %s252, %s254
      %p258 = scmp.eq.s32.totalorder %s20, 0
      %p259 = por %p257, %p258
      %p260 = scmp.ne.s32.totalorder %s252, %s254
      %p261 = scmp.eq.s32.totalorder %s25, 1
      %p262 = por %p260, %p261
      %p263 = scmp.ne.s32.totalorder %s254, %s255
      %p264 = scmp.eq.s32.totalorder %s25, 0
      %p265 = por %p263, %p264
      %p266 = scmp.ne.s32.totalorder %s254, %s255
      %p267 = scmp.eq.s32.totalorder %s26, 1
      %p268 = por %p266, %p267
      %p270 = scmp.ne.s32.totalorder %s255, %s269
      %p271 = scmp.eq.s32.totalorder %s26, 0
      %p272 = por %p270, %p271
      %p273 = scmp.le.s32.totalorder 1, %s20
      %p274 = scmp.lt.s32.totalorder %s20, 3
      %p275 = pnand %p273, %p274
      %p276 = pneg %p275
      // Predicated region
      $region9: #{tpu_custom_call.1} parent=5 // pred_check
        _
      $region10: #{tpu_custom_call.1} parent=5 // pred_check_branch
        %278 = sbr.rel (%p275) target = $region12
      $region11: #{tpu_custom_call.1} parent=5 // pred_region
        %s279 = ssub.s32 %s20, 1
        // Predicated region
        $region13: #{tpu_custom_call.1} parent=11 // pred_check
          %p280 = pneg %p41
        $region14: #{tpu_custom_call.1} parent=11 // pred_check_branch
          %282 = sbr.rel (%p280) target = $region16
        $region15: #{tpu_custom_call.1} parent=11 // pred_region
          _
        $region16: #{tpu_custom_call.1} parent=11 // pred_fallthru
          _
        // Predicated region
        $region17: #{tpu_custom_call.1} parent=11 // pred_check
          %p283 = pneg %p62
        $region18: #{tpu_custom_call.1} parent=11 // pred_check_branch
          %285 = sbr.rel (%p283) target = $region20
        $region19: #{tpu_custom_call.1} parent=11 // pred_region
          %s287 = ssub.s32 512, 512
          %288 = vsyncadd [#allocation4], %s287
          %s289 = sshll.u32 [#allocation3], 4
          %s290 = int_to_ptr.vmem [resolvable:$true] %s289
          %295 = dma.hbm_to_vmem [thread:$0]  %s1, 512, %s290, [#allocation4], 128, 128, 8
        $region20: #{tpu_custom_call.1} parent=11 // pred_fallthru
          _
      $region12: #{tpu_custom_call.1} parent=5 // pred_fallthru
        _
      %p296 = scmp.lt.s32.totalorder %s20, 2
      // Predicated region
      $region21: #{tpu_custom_call.1} parent=5 // pred_check
        %p297 = pneg %p296
      $region22: #{tpu_custom_call.1} parent=5 // pred_check_branch
        %299 = sbr.rel (%p297) target = $region24
      $region23: #{tpu_custom_call.1} parent=5 // pred_region
        // Predicated region
        $region25: #{tpu_custom_call.1} parent=23 // pred_check
          %p300 = pneg %p82
        $region26: #{tpu_custom_call.1} parent=23 // pred_check_branch
          %302 = sbr.rel (%p300) target = $region28
        $region27: #{tpu_custom_call.1} parent=23 // pred_region
          %p303 = scmp.lt.s32.totalorder %s20, 1
          %s304 = scalar_select %p303, %s20, 1
          %s305 = smul.addr %s304, 4
          %s306 = smul.addr %s305, 8
          %s307 = scalar_lea.vmem %s2, %s306
        $region28: #{tpu_custom_call.1} parent=23 // pred_fallthru
          _
        // Predicated region
        $region29: #{tpu_custom_call.1} parent=23 // pred_check
          %p308 = pneg %p108
        $region30: #{tpu_custom_call.1} parent=23 // pred_check_branch
          %310 = sbr.rel (%p308) target = $region32
        $region31: #{tpu_custom_call.1} parent=23 // pred_region
          %p311 = scmp.lt.s32.totalorder %s20, 1
          %s312 = scalar_select %p311, %s20, 1
          %s313 = scalar_lea.vmem %s3, %s312
        $region32: #{tpu_custom_call.1} parent=23 // pred_fallthru
          _
        // Predicated region
        $region33: #{tpu_custom_call.1} parent=23 // pred_check
          %p314 = pneg %p134
        $region34: #{tpu_custom_call.1} parent=23 // pred_check_branch
          %316 = sbr.rel (%p314) target = $region36
        $region35: #{tpu_custom_call.1} parent=23 // pred_region
          %p317 = scmp.lt.s32.totalorder %s20, 1
          %s318 = scalar_select %p317, %s20, 1
          %s319 = smul.addr %s318, 8
          %s320 = smul.addr %s319, 8
          %s321 = scalar_lea.vmem %s4, %s320
        $region36: #{tpu_custom_call.1} parent=23 // pred_fallthru
          _
        // Predicated region
        $region37: #{tpu_custom_call.1} parent=23 // pred_check
          %p322 = pneg %p160
        $region38: #{tpu_custom_call.1} parent=23 // pred_check_branch
          %324 = sbr.rel (%p322) target = $region40
        $region39: #{tpu_custom_call.1} parent=23 // pred_region
          %s325 = sand.u32 %s150, 1
          %s326 = scalar_lea.sflag [#allocation7], %s325
          %s327 = sand.u32 %s150, 1
          %s328 = smul.addr %s327, 32
          %s329 = scalar_lea.vmem [#allocation6], %s328
          %s331 = ssub.s32 512, 512
          %332 = vsyncadd %s326, %s331
          %s333 = smul.addr %s20, 4
          %s334 = smul.addr %s333, 128
          %s335 = scalar_lea.hbm %s5, %s334
          %s336 = sshll.u32 %s329, 4
          %s337 = int_to_ptr.vmem [resolvable:$true] %s336
          %342 = dma.hbm_to_vmem [thread:$0]  %s335, 512, %s337, %s326, 128, 128, 8
        $region40: #{tpu_custom_call.1} parent=23 // pred_fallthru
          _
        // Predicated region
        $region41: #{tpu_custom_call.1} parent=23 // pred_check
          %p343 = pneg %p186
        $region42: #{tpu_custom_call.1} parent=23 // pred_check_branch
          %345 = sbr.rel (%p343) target = $region44
        $region43: #{tpu_custom_call.1} parent=23 // pred_region
          %p346 = scmp.lt.s32.totalorder %s20, 1
          %s347 = scalar_select %p346, %s20, 1
          %s348 = scalar_lea.vmem %s6, %s347
        $region44: #{tpu_custom_call.1} parent=23 // pred_fallthru
          _
        // Predicated region
        $region45: #{tpu_custom_call.1} parent=23 // pred_check
          %p349 = pneg %p212
        $region46: #{tpu_custom_call.1} parent=23 // pred_check_branch
          %351 = sbr.rel (%p349) target = $region48
        $region47: #{tpu_custom_call.1} parent=23 // pred_region
          %p352 = scmp.lt.s32.totalorder %s20, 1
          %s353 = scalar_select %p352, %s20, 1
          %s354 = smul.addr %s353, 8
          %s355 = smul.addr %s354, 8
          %s356 = scalar_lea.vmem %s7, %s355
        $region48: #{tpu_custom_call.1} parent=23 // pred_fallthru
          _
        // Predicated region
        $region49: #{tpu_custom_call.1} parent=23 // pred_check
          %p357 = pneg %p238
        $region50: #{tpu_custom_call.1} parent=23 // pred_check_branch
          %359 = sbr.rel (%p357) target = $region52
        $region51: #{tpu_custom_call.1} parent=23 // pred_region
          %p360 = scmp.lt.s32.totalorder %s20, 1
          %s361 = scalar_select %p360, %s20, 1
          %s362 = smul.addr %s361, 8
          %s363 = scalar_lea.vmem %s8, %s362
        $region52: #{tpu_custom_call.1} parent=23 // pred_fallthru
          _
      $region24: #{tpu_custom_call.1} parent=5 // pred_fallthru
        _
      %p364 = scmp.le.s32.totalorder 1, %s20
      %p365 = scmp.lt.s32.totalorder %s20, 3
      %p366 = pnand %p364, %p365
      %p367 = pneg %p366
      // Predicated region
      $region53: #{tpu_custom_call.1} parent=5 // pred_check
        _
      $region54: #{tpu_custom_call.1} parent=5 // pred_check_branch
        %369 = sbr.rel (%p366) target = $region56
      $region55: #{tpu_custom_call.1} parent=5 // pred_region
        %s370 = ssub.s32 %s20, 1
        // Predicated region
        $region57: #{tpu_custom_call.1} parent=55 // pred_check
          %p371 = pneg %p62
        $region58: #{tpu_custom_call.1} parent=55 // pred_check_branch
          %373 = sbr.rel (%p371) target = $region60
        $region59: #{tpu_custom_call.1} parent=55 // pred_region
          %374 = dma.done [#allocation4], 512
        $region60: #{tpu_custom_call.1} parent=55 // pred_fallthru
          _
        %s375 = sand.u32 %s153, 1
        %s376 = scalar_lea.sflag [#allocation7], %s375
        %s377 = sand.u32 %s153, 1
        %s378 = smul.addr %s377, 32
        %s379 = scalar_lea.vmem [#allocation6], %s378
        // Predicated region
        $region61: #{tpu_custom_call.1} parent=55 // pred_check
          %p380 = pneg %p166
        $region62: #{tpu_custom_call.1} parent=55 // pred_check_branch
          %382 = sbr.rel (%p380) target = $region64
        $region63: #{tpu_custom_call.1} parent=55 // pred_region
          %383 = dma.done %s376, 512
        $region64: #{tpu_custom_call.1} parent=55 // pred_fallthru
          _
        %p384 = pneg %p41
        %p385 = pneg %p38
        %p386 = pneg %p62
        %p387 = pneg %p59
        %p388 = scmp.lt.s32.totalorder %s25, 1
        %s389 = scalar_select %p388, %s25, 1
        %s390 = smul.addr %s389, 4
        %s391 = smul.addr %s390, 8
        %s392 = scalar_lea.vmem %s2, %s391
        %p393 = pneg %p88
        %p394 = pneg %p85
        %p395 = scmp.lt.s32.totalorder %s25, 1
        %s396 = scalar_select %p395, %s25, 1
        %s397 = scalar_lea.vmem %s3, %s396
        %p398 = pneg %p114
        %p399 = pneg %p111
        %p400 = scmp.lt.s32.totalorder %s25, 1
        %s401 = scalar_select %p400, %s25, 1
        %s402 = smul.addr %s401, 8
        %s403 = smul.addr %s402, 8
        %s404 = scalar_lea.vmem %s4, %s403
        %p405 = pneg %p140
        %p406 = pneg %p137
        %s407 = sand.u32 %s153, 1
        %s408 = scalar_lea.sflag [#allocation7], %s407
        %s409 = sand.u32 %s153, 1
        %s410 = smul.addr %s409, 32
        %s411 = scalar_lea.vmem [#allocation6], %s410
        %p412 = pneg %p166
        %p413 = pneg %p163
        %p414 = scmp.lt.s32.totalorder %s25, 1
        %s415 = scalar_select %p414, %s25, 1
        %s416 = scalar_lea.vmem %s6, %s415
        %p417 = pneg %p192
        %p418 = pneg %p189
        %p419 = scmp.lt.s32.totalorder %s25, 1
        %s420 = scalar_select %p419, %s25, 1
        %s421 = smul.addr %s420, 8
        %s422 = smul.addr %s421, 8
        %s423 = scalar_lea.vmem %s7, %s422
        %p424 = pneg %p218
        %p425 = pneg %p215
        %p426 = scmp.lt.s32.totalorder %s25, 1
        %s427 = scalar_select %p426, %s25, 1
        %s428 = smul.addr %s427, 8
        %s429 = scalar_lea.vmem %s8, %s428
        %p430 = pneg %p244
        %p431 = pneg %p241
        %p432 = pneg %p265
        %p433 = pneg %p262
        %p434 = scmp.lt.s32.totalorder %s25, 1
        %s435 = scalar_select %p434, %s25, 1
        %s436 = smul.addr %s435, 4
        %s437 = smul.addr %s436, 8
        %s438 = scalar_lea.vmem %s2, %s437
        %p439 = scmp.lt.s32.totalorder %s25, 1
        %s440 = scalar_select %p439, %s25, 1
        %s441 = scalar_lea.vmem %s3, %s440
        %p442 = scmp.lt.s32.totalorder %s25, 1
        %s443 = scalar_select %p442, %s25, 1
        %s444 = smul.addr %s443, 8
        %s445 = smul.addr %s444, 8
        %s446 = scalar_lea.vmem %s4, %s445
        %p447 = scmp.lt.s32.totalorder %s25, 1
        %s448 = scalar_select %p447, %s25, 1
        %s449 = scalar_lea.vmem %s6, %s448
        %p450 = scmp.lt.s32.totalorder %s25, 1
        %s451 = scalar_select %p450, %s25, 1
        %s452 = smul.addr %s451, 8
        %s453 = smul.addr %s452, 8
        %s454 = scalar_lea.vmem %s7, %s453
        %p455 = scmp.lt.s32.totalorder %s25, 1
        %s456 = scalar_select %p455, %s25, 1
        %s457 = smul.addr %s456, 8
        %s458 = scalar_lea.vmem %s8, %s457
        %p459 = scmp.eq.s32.totalorder %s25, 0
        // Predicated region
        $region65: #{tpu_custom_call.1} parent=55 // pred_check
          %p460 = pneg %p459
        $region66: #{tpu_custom_call.1} parent=55 // pred_check_branch
          %462 = sbr.rel (%p460) target = $region68
        $region67: #{tpu_custom_call.1} parent=55 // pred_region
          %v463 = vld [vmem:[%s0] sm:$0xff]
          %v464 = vld [vmem:[%s0 + $0x8] sm:$0xff]
          %v465 = vld [vmem:[%s0 + $0x10] sm:$0xff]
          %v466 = vld [vmem:[%s0 + $0x18] sm:$0xff]
          %vm467 = vcmask 261120
          %468 = vst.msk [vmem:[#allocation2] sm:$0xff] %vm467, %v463
          %469 = vst.msk [vmem:[#allocation2 + $0x8] sm:$0xff] %vm467, %v464
          %470 = vst.msk [vmem:[#allocation2 + $0x10] sm:$0xff] %vm467, %v465
          %471 = vst.msk [vmem:[#allocation2 + $0x18] sm:$0xff] %vm467, %v466
        $region68: #{tpu_custom_call.1} parent=55 // pred_fallthru
          _
        %v472 = vld [vmem:[#allocation3] sm:$0xff]
        %v473 = vld [vmem:[#allocation3 + $0x8] sm:$0xff]
        %v474 = vld [vmem:[#allocation3 + $0x10] sm:$0xff]
        %v475 = vld [vmem:[#allocation3 + $0x18] sm:$0xff]
        %v476 = vld [vmem:[#allocation2] sm:$0xff]
        %v477 = vld [vmem:[#allocation2 + $0x8] sm:$0xff]
        %v478 = vld [vmem:[#allocation2 + $0x10] sm:$0xff]
        %v479 = vld [vmem:[#allocation2 + $0x18] sm:$0xff]
        %v480 = vld [vmem:[%s446] sm:$0xff]
        %v481 = vld [vmem:[%s446 + $0x8] sm:$0xff]
        %v482 = vld [vmem:[%s446 + $0x10] sm:$0xff]
        %v483 = vld [vmem:[%s446 + $0x18] sm:$0xff]
        %v484 = vld [vmem:[%s446 + $0x20] sm:$0xff]
        %v485 = vld [vmem:[%s446 + $0x28] sm:$0xff]
        %v486 = vld [vmem:[%s446 + $0x30] sm:$0xff]
        %v487 = vld [vmem:[%s446 + $0x38] sm:$0xff]
        %v488 = vld [vmem:[%s458] sm:$0x7f]
        %v489 = vld [vmem:[%s438] sm:$0xff]
        %v490 = vld [vmem:[%s438 + $0x8] sm:$0xff]
        %v491 = vld [vmem:[%s438 + $0x10] sm:$0xff]
        %v492 = vld [vmem:[%s438 + $0x18] sm:$0xff]
        %v493 = vld [vmem:[%s441] sm:$0x1]
        %v494 = vadd.f32 %v476, %v472
        %v495 = vadd.f32 %v477, %v473
        %v496 = vadd.f32 %v478, %v474
        %v497 = vadd.f32 %v479, %v475
        %v499 = vlaneseq
        %v500 = vshrl.u32 %v499, 7
        %v501 = vsub.s32 0, %v500
        %v502 = vrot.slane %v493, %v501
        %vm504 = vcmask 261120
        %v506 = vsel %vm504, %v494, 0
        %v509 = vsel %vm504, %v495, 0
        %v512 = vsel %vm504, %v496, 0
        %v515 = vsel %vm504, %v497, 0
        %517 = vmatprep.subr.mxu0 0.0
        %518 = vmatpush1.msra.mxu0 0.0
        %519 = vmatprep.subr.mxu0 0.0
        %520 = vmatpush1.msra.mxu0 0.0
        %521 = vmatprep.subr.mxu0 0.0
        %522 = vmatpush1.msra.mxu0 0.0
        %523 = vmatprep.subr.mxu0 0.0
        %524 = vmatpush1.msra.mxu0 0.0
        %525 = vmatprep.subr.mxu0 0.0
        %526 = vmatpush1.msra.mxu0 0.0
        %527 = vmatprep.subr.mxu0 0.0
        %528 = vmatpush1.msra.mxu0 0.0
        %529 = vmatprep.subr.mxu0 0.0
        %530 = vmatpush1.msra.mxu0 0.0
        %531 = vmatprep.subr.mxu0 0.0
        %532 = vmatpush1.msra.mxu0 0.0
        %533 = vmatprep.subr.mxu0 0.0
        %534 = vmatpush1.msra.mxu0 0.0
        %535 = vmatprep.subr.mxu0 0.0
        %536 = vmatpush1.msra.mxu0 0.0
        %537 = vmatprep.subr.mxu0 0.0
        %538 = vmatpush1.msra.mxu0 0.0
        %539 = vmatprep.subr.mxu0 0.0
        %540 = vmatpush1.msra.mxu0 0.0
        %541 = vmatprep.subr.mxu0 0.0
        %542 = vmatpush1.msra.mxu0 %v492
        %543 = vmatprep.subr.mxu0 0.0
        %544 = vmatpush1.msra.mxu0 %v491
        %545 = vmatprep.subr.mxu0 0.0
        %546 = vmatpush1.msra.mxu0 %v490
        %547 = vmatprep.subr.mxu0 0.0
        %548 = vmatpush1.msra.mxu0 %v489
        %549 = vmatprep.subr.mxu0 0.0
        %550 = vmatpush2.msra.mxu0 0.0
        %551 = vmatprep.subr.mxu0 0.0
        %552 = vmatpush2.msra.mxu0 0.0
        %553 = vmatprep.subr.mxu0 0.0
        %554 = vmatpush2.msra.mxu0 0.0
        %555 = vmatprep.subr.mxu0 0.0
        %556 = vmatpush2.msra.mxu0 0.0
        %557 = vmatprep.subr.mxu0 0.0
        %558 = vmatpush2.msra.mxu0 0.0
        %559 = vmatprep.subr.mxu0 0.0
        %560 = vmatpush2.msra.mxu0 0.0
        %561 = vmatprep.subr.mxu0 0.0
        %562 = vmatpush2.msra.mxu0 0.0
        %563 = vmatprep.subr.mxu0 0.0
        %564 = vmatpush2.msra.mxu0 0.0
        %565 = vmatprep.subr.mxu0 0.0
        %566 = vmatpush2.msra.mxu0 0.0
        %567 = vmatprep.subr.mxu0 0.0
        %568 = vmatpush2.msra.mxu0 0.0
        %569 = vmatprep.subr.mxu0 0.0
        %570 = vmatpush2.msra.mxu0 0.0
        %571 = vmatprep.subr.mxu0 0.0
        %572 = vmatpush2.msra.mxu0 0.0
        %573 = vmatprep.subr.mxu0 0.0
        %574 = vmatpush2.msra.mxu0 0.0
        %575 = vmatprep.subr.mxu0 0.0
        %576 = vmatpush2.msra.mxu0 0.0
        %577 = vmatprep.subr.mxu0 0.0
        %578 = vmatpush2.msra.mxu0 0.0
        %579 = vmatprep.subr.mxu0 0.0
        %580 = vmatpush2.msra.mxu0 0.0
        %581 = vmatprep.mubr.f32.mxu0 0.0
        %582 = vmatmul.mubr.f32.gmra.mxu0 %v506
        %v583 = vpop.f32.mrf.mxu0
        %v584 = vadd.f32 %v502, %v583
        %v585 = vpop.f32.mrf.mxu0
        %586 = vmatprep.mubr.f32.mxu0 0.0
        %587 = vmatmul.mubr.f32.gmra.mxu0 %v509
        %v588 = vpop.f32.mrf.mxu0
        %v589 = vadd.f32 %v502, %v588
        %v590 = vpop.f32.mrf.mxu0
        %591 = vmatprep.mubr.f32.mxu0 0.0
        %592 = vmatmul.mubr.f32.gmra.mxu0 %v512
        %v593 = vpop.f32.mrf.mxu0
        %v594 = vadd.f32 %v502, %v593
        %v595 = vpop.f32.mrf.mxu0
        %596 = vmatprep.mubr.f32.mxu0 0.0
        %597 = vmatmul.mubr.f32.gmra.mxu0 %v515
        %v598 = vpop.f32.mrf.mxu0
        %v599 = vadd.f32 %v502, %v598
        %v600 = vpop.f32.mrf.mxu0
        %601 = vdwg.mxu0
        %v602 = vlaneseq
        %v603 = vshrl.u32 %v602, 7
        %v604 = vsub.s32 0, %v603
        %v605 = vrot.slane %v488, %v604
        %v607 = vsel %vm504, %v476, 0
        %v610 = vsel %vm504, %v477, 0
        %v613 = vsel %vm504, %v478, 0
        %v616 = vsel %vm504, %v479, 0
        %618 = vmatprep.subr.mxu0 0.0
        %619 = vmatpush1.msra.mxu0 0.0
        %620 = vmatprep.subr.mxu0 0.0
        %621 = vmatpush1.msra.mxu0 0.0
        %622 = vmatprep.subr.mxu0 0.0
        %623 = vmatpush1.msra.mxu0 0.0
        %624 = vmatprep.subr.mxu0 0.0
        %625 = vmatpush1.msra.mxu0 0.0
        %626 = vmatprep.subr.mxu0 0.0
        %627 = vmatpush1.msra.mxu0 0.0
        %628 = vmatprep.subr.mxu0 0.0
        %629 = vmatpush1.msra.mxu0 0.0
        %630 = vmatprep.subr.mxu0 0.0
        %631 = vmatpush1.msra.mxu0 0.0
        %632 = vmatprep.subr.mxu0 0.0
        %633 = vmatpush1.msra.mxu0 0.0
        %634 = vmatprep.subr.mxu0 0.0
        %635 = vmatpush1.msra.mxu0 0.0
        %636 = vmatprep.subr.mxu0 0.0
        %637 = vmatpush1.msra.mxu0 0.0
        %638 = vmatprep.subr.mxu0 0.0
        %639 = vmatpush1.msra.mxu0 0.0
        %640 = vmatprep.subr.mxu0 0.0
        %641 = vmatpush1.msra.mxu0 0.0
        %642 = vmatprep.subr.mxu0 0.0
        %643 = vmatpush1.msra.mxu0 %v483
        %644 = vmatprep.subr.mxu0 0.0
        %645 = vmatpush1.msra.mxu0 %v482
        %646 = vmatprep.subr.mxu0 0.0
        %647 = vmatpush1.msra.mxu0 %v481
        %648 = vmatprep.subr.mxu0 0.0
        %649 = vmatpush1.msra.mxu0 %v480
        %650 = vmatprep.subr.mxu0 0.0
        %651 = vmatpush2.msra.mxu0 0.0
        %652 = vmatprep.subr.mxu0 0.0
        %653 = vmatpush2.msra.mxu0 0.0
        %654 = vmatprep.subr.mxu0 0.0
        %655 = vmatpush2.msra.mxu0 0.0
        %656 = vmatprep.subr.mxu0 0.0
        %657 = vmatpush2.msra.mxu0 0.0
        %658 = vmatprep.subr.mxu0 0.0
        %659 = vmatpush2.msra.mxu0 0.0
        %660 = vmatprep.subr.mxu0 0.0
        %661 = vmatpush2.msra.mxu0 0.0
        %662 = vmatprep.subr.mxu0 0.0
        %663 = vmatpush2.msra.mxu0 0.0
        %664 = vmatprep.subr.mxu0 0.0
        %665 = vmatpush2.msra.mxu0 0.0
        %666 = vmatprep.subr.mxu0 0.0
        %667 = vmatpush2.msra.mxu0 0.0
        %668 = vmatprep.subr.mxu0 0.0
        %669 = vmatpush2.msra.mxu0 0.0
        %670 = vmatprep.subr.mxu0 0.0
        %671 = vmatpush2.msra.mxu0 0.0
        %672 = vmatprep.subr.mxu0 0.0
        %673 = vmatpush2.msra.mxu0 0.0
        %674 = vmatprep.subr.mxu0 0.0
        %675 = vmatpush2.msra.mxu0 0.0
        %676 = vmatprep.subr.mxu0 0.0
        %677 = vmatpush2.msra.mxu0 0.0
        %678 = vmatprep.subr.mxu0 0.0
        %679 = vmatpush2.msra.mxu0 0.0
        %680 = vmatprep.subr.mxu0 0.0
        %681 = vmatpush2.msra.mxu0 0.0
        %682 = vmatprep.mubr.f32.mxu0 0.0
        %683 = vmatmul.mubr.f32.gmra.mxu0 %v607
        %v684 = vpop.f32.mrf.mxu0
        %v685 = vadd.f32 %v605, %v684
        %v686 = vpop.f32.mrf.mxu0
        %687 = vmatprep.mubr.f32.mxu0 0.0
        %688 = vmatmul.mubr.f32.gmra.mxu0 %v610
        %v689 = vpop.f32.mrf.mxu0
        %v690 = vadd.f32 %v605, %v689
        %v691 = vpop.f32.mrf.mxu0
        %692 = vmatprep.mubr.f32.mxu0 0.0
        %693 = vmatmul.mubr.f32.gmra.mxu0 %v613
        %v694 = vpop.f32.mrf.mxu0
        %v695 = vadd.f32 %v605, %v694
        %v696 = vpop.f32.mrf.mxu0
        %697 = vmatprep.mubr.f32.mxu0 0.0
        %698 = vmatmul.mubr.f32.gmra.mxu0 %v616
        %v699 = vpop.f32.mrf.mxu0
        %v700 = vadd.f32 %v605, %v699
        %v701 = vpop.f32.mrf.mxu0
        %702 = vdwg.mxu0
        %705 = vrot.lane.b32.xlu0 %v584, 96
        %v706 = vpop.permute.xlu0 %705
        %707 = vrot.lane.b32.xlu0 %v589, 96
        %v708 = vpop.permute.xlu0 %707
        %vm709 = vcmask 64512
        %v710 = vsel %vm709, %v584, 0
        %v712 = vsel %vm709, %v589, 0
        %v714 = vsel %vm709, %v706, 0
        %v716 = vsel %vm709, %v708, 0
        %718 = vmatprep.subr.mxu0 0.0
        %719 = vmatpush1.xpose.msra.mxu0 0.0
        %720 = vmatprep.subr.mxu0 0.0
        %721 = vmatpush1.xpose.msra.mxu0 0.0
        %722 = vmatprep.subr.mxu0 0.0
        %723 = vmatpush1.xpose.msra.mxu0 0.0
        %724 = vmatprep.subr.mxu0 0.0
        %725 = vmatpush1.xpose.msra.mxu0 0.0
        %726 = vmatprep.subr.mxu0 0.0
        %727 = vmatpush1.xpose.msra.mxu0 0.0
        %728 = vmatprep.subr.mxu0 0.0
        %729 = vmatpush1.xpose.msra.mxu0 0.0
        %730 = vmatprep.subr.mxu0 0.0
        %731 = vmatpush1.xpose.msra.mxu0 0.0
        %732 = vmatprep.subr.mxu0 0.0
        %733 = vmatpush1.xpose.msra.mxu0 0.0
        %734 = vmatprep.subr.mxu0 0.0
        %735 = vmatpush1.xpose.msra.mxu0 0.0
        %736 = vmatprep.subr.mxu0 0.0
        %737 = vmatpush1.xpose.msra.mxu0 0.0
        %738 = vmatprep.subr.mxu0 0.0
        %739 = vmatpush1.xpose.msra.mxu0 0.0
        %740 = vmatprep.subr.mxu0 0.0
        %741 = vmatpush1.xpose.msra.mxu0 0.0
        %742 = vmatprep.subr.mxu0 0.0
        %743 = vmatpush1.xpose.msra.mxu0 0.0
        %744 = vmatprep.subr.mxu0 0.0
        %745 = vmatpush1.xpose.msra.mxu0 0.0
        %746 = vmatprep.subr.mxu0 0.0
        %747 = vmatpush1.xpose.msra.mxu0 %v716
        %748 = vmatprep.subr.mxu0 0.0
        %749 = vmatpush1.xpose.msra.mxu0 %v714
        %750 = vmatprep.subr.mxu0 0.0
        %751 = vmatpush2.xpose.msra.mxu0 0.0
        %752 = vmatprep.subr.mxu0 0.0
        %753 = vmatpush2.xpose.msra.mxu0 0.0
        %754 = vmatprep.subr.mxu0 0.0
        %755 = vmatpush2.xpose.msra.mxu0 0.0
        %756 = vmatprep.subr.mxu0 0.0
        %757 = vmatpush2.xpose.msra.mxu0 0.0
        %758 = vmatprep.subr.mxu0 0.0
        %759 = vmatpush2.xpose.msra.mxu0 0.0
        %760 = vmatprep.subr.mxu0 0.0
        %761 = vmatpush2.xpose.msra.mxu0 0.0
        %762 = vmatprep.subr.mxu0 0.0
        %763 = vmatpush2.xpose.msra.mxu0 0.0
        %764 = vmatprep.subr.mxu0 0.0
        %765 = vmatpush2.xpose.msra.mxu0 0.0
        %766 = vmatprep.subr.mxu0 0.0
        %767 = vmatpush2.xpose.msra.mxu0 0.0
        %768 = vmatprep.subr.mxu0 0.0
        %769 = vmatpush2.xpose.msra.mxu0 0.0
        %770 = vmatprep.subr.mxu0 0.0
        %771 = vmatpush2.xpose.msra.mxu0 0.0
        %772 = vmatprep.subr.mxu0 0.0
        %773 = vmatpush2.xpose.msra.mxu0 0.0
        %774 = vmatprep.subr.mxu0 0.0
        %775 = vmatpush2.xpose.msra.mxu0 0.0
        %776 = vmatprep.subr.mxu0 0.0
        %777 = vmatpush2.xpose.msra.mxu0 0.0
        %778 = vmatprep.subr.mxu0 0.0
        %779 = vmatpush2.xpose.msra.mxu0 0.0
        %780 = vmatprep.subr.mxu0 0.0
        %781 = vmatpush2.xpose.msra.mxu0 0.0
        %782 = vmatprep.mubr.f32.mxu0 0.0
        %783 = vmatmul.mubr.f32.gmra.mxu0 %v710
        %v784 = vpop.f32.mrf.mxu0
        %v785 = vadd.f32 0.0, %v784
        %v786 = vpop.f32.mrf.mxu0
        %787 = vmatprep.mubr.f32.mxu0 0.0
        %788 = vmatmul.mubr.f32.gmra.mxu0 %v712
        %v789 = vpop.f32.mrf.mxu0
        %v790 = vadd.f32 0.0, %v789
        %v791 = vpop.f32.mrf.mxu0
        %792 = vdwg.mxu0
        %795 = vrot.lane.b32.xlu0 %v594, 96
        %v796 = vpop.permute.xlu0 %795
        %797 = vrot.lane.b32.xlu0 %v599, 96
        %v798 = vpop.permute.xlu0 %797
        %v799 = vsel %vm709, %v594, 0
        %v801 = vsel %vm709, %v599, 0
        %v803 = vsel %vm709, %v796, 0
        %v805 = vsel %vm709, %v798, 0
        %807 = vmatprep.subr.mxu0 0.0
        %808 = vmatpush1.xpose.msra.mxu0 0.0
        %809 = vmatprep.subr.mxu0 0.0
        %810 = vmatpush1.xpose.msra.mxu0 0.0
        %811 = vmatprep.subr.mxu0 0.0
        %812 = vmatpush1.xpose.msra.mxu0 0.0
        %813 = vmatprep.subr.mxu0 0.0
        %814 = vmatpush1.xpose.msra.mxu0 0.0
        %815 = vmatprep.subr.mxu0 0.0
        %816 = vmatpush1.xpose.msra.mxu0 0.0
        %817 = vmatprep.subr.mxu0 0.0
        %818 = vmatpush1.xpose.msra.mxu0 0.0
        %819 = vmatprep.subr.mxu0 0.0
        %820 = vmatpush1.xpose.msra.mxu0 0.0
        %821 = vmatprep.subr.mxu0 0.0
        %822 = vmatpush1.xpose.msra.mxu0 0.0
        %823 = vmatprep.subr.mxu0 0.0
        %824 = vmatpush1.xpose.msra.mxu0 0.0
        %825 = vmatprep.subr.mxu0 0.0
        %826 = vmatpush1.xpose.msra.mxu0 0.0
        %827 = vmatprep.subr.mxu0 0.0
        %828 = vmatpush1.xpose.msra.mxu0 0.0
        %829 = vmatprep.subr.mxu0 0.0
        %830 = vmatpush1.xpose.msra.mxu0 0.0
        %831 = vmatprep.subr.mxu0 0.0
        %832 = vmatpush1.xpose.msra.mxu0 0.0
        %833 = vmatprep.subr.mxu0 0.0
        %834 = vmatpush1.xpose.msra.mxu0 0.0
        %835 = vmatprep.subr.mxu0 0.0
        %836 = vmatpush1.xpose.msra.mxu0 %v805
        %837 = vmatprep.subr.mxu0 0.0
        %838 = vmatpush1.xpose.msra.mxu0 %v803
        %839 = vmatprep.subr.mxu0 0.0
        %840 = vmatpush2.xpose.msra.mxu0 0.0
        %841 = vmatprep.subr.mxu0 0.0
        %842 = vmatpush2.xpose.msra.mxu0 0.0
        %843 = vmatprep.subr.mxu0 0.0
        %844 = vmatpush2.xpose.msra.mxu0 0.0
        %845 = vmatprep.subr.mxu0 0.0
        %846 = vmatpush2.xpose.msra.mxu0 0.0
        %847 = vmatprep.subr.mxu0 0.0
        %848 = vmatpush2.xpose.msra.mxu0 0.0
        %849 = vmatprep.subr.mxu0 0.0
        %850 = vmatpush2.xpose.msra.mxu0 0.0
        %851 = vmatprep.subr.mxu0 0.0
        %852 = vmatpush2.xpose.msra.mxu0 0.0
        %853 = vmatprep.subr.mxu0 0.0
        %854 = vmatpush2.xpose.msra.mxu0 0.0
        %855 = vmatprep.subr.mxu0 0.0
        %856 = vmatpush2.xpose.msra.mxu0 0.0
        %857 = vmatprep.subr.mxu0 0.0
        %858 = vmatpush2.xpose.msra.mxu0 0.0
        %859 = vmatprep.subr.mxu0 0.0
        %860 = vmatpush2.xpose.msra.mxu0 0.0
        %861 = vmatprep.subr.mxu0 0.0
        %862 = vmatpush2.xpose.msra.mxu0 0.0
        %863 = vmatprep.subr.mxu0 0.0
        %864 = vmatpush2.xpose.msra.mxu0 0.0
        %865 = vmatprep.subr.mxu0 0.0
        %866 = vmatpush2.xpose.msra.mxu0 0.0
        %867 = vmatprep.subr.mxu0 0.0
        %868 = vmatpush2.xpose.msra.mxu0 0.0
        %869 = vmatprep.subr.mxu0 0.0
        %870 = vmatpush2.xpose.msra.mxu0 0.0
        %871 = vmatprep.mubr.f32.mxu0 0.0
        %872 = vmatmul.mubr.f32.gmra.mxu0 %v799
        %v873 = vpop.f32.mrf.mxu0
        %v874 = vadd.f32 0.0, %v873
        %v875 = vpop.f32.mrf.mxu0
        %876 = vmatprep.mubr.f32.mxu0 0.0
        %877 = vmatmul.mubr.f32.gmra.mxu0 %v801
        %v878 = vpop.f32.mrf.mxu0
        %v879 = vadd.f32 0.0, %v878
        %v880 = vpop.f32.mrf.mxu0
        %881 = vdwg.mxu0
        %vm882 = vcmask 130048
        %v883 = vsel %vm882, %v785, -inf
        %884 = vmax.xlane.f32.xlu0 %v883
        %v885 = vpop.xlane.xlu0 %884
        %v886 = vsel %vm882, %v790, -inf
        %887 = vmax.xlane.f32.xlu0 %v886
        %v888 = vpop.xlane.xlu0 %887
        %v889 = vsel %vm882, %v874, -inf
        %890 = vmax.xlane.f32.xlu0 %v889
        %v891 = vpop.xlane.xlu0 %890
        %v892 = vsel %vm882, %v879, -inf
        %893 = vmax.xlane.f32.xlu0 %v892
        %v894 = vpop.xlane.xlu0 %893
        %v895 = vsub.f32 %v785, %v885
        %v896 = vsub.f32 %v790, %v888
        %v897 = vsub.f32 %v874, %v891
        %v898 = vsub.f32 %v879, %v894
        %v899 = vmul.f32 %v895, 1.442695
        %v900 = vpow.pop %v899
        %v901 = vmul.f32 %v896, 1.442695
        %v902 = vpow.pop %v901
        %v903 = vmul.f32 %v897, 1.442695
        %v904 = vpow.pop %v903
        %v905 = vmul.f32 %v898, 1.442695
        %v906 = vpow.pop %v905
        %v907 = vsel %vm882, %v900, 0.0
        %908 = vadd.xlane.f32.xlu0 %v907
        %v909 = vpop.xlane.xlu0 %908
        %v910 = vsel %vm882, %v902, 0.0
        %911 = vadd.xlane.f32.xlu0 %v910
        %v912 = vpop.xlane.xlu0 %911
        %v913 = vsel %vm882, %v904, 0.0
        %914 = vadd.xlane.f32.xlu0 %v913
        %v915 = vpop.xlane.xlu0 %914
        %v916 = vsel %vm882, %v906, 0.0
        %917 = vadd.xlane.f32.xlu0 %v916
        %v918 = vpop.xlane.xlu0 %917
        %v919 = vrcp.pop %v909
        %v920 = vrcp.pop %v912
        %v921 = vrcp.pop %v915
        %v922 = vrcp.pop %v918
        %v923 = vmul.f32 %v909, %v919
        %v924 = vmul.f32 %v912, %v920
        %v925 = vmul.f32 %v915, %v921
        %v926 = vmul.f32 %v918, %v922
        %v927 = vsub.f32 2.0, %v923
        %v928 = vsub.f32 2.0, %v924
        %v929 = vsub.f32 2.0, %v925
        %v930 = vsub.f32 2.0, %v926
        %v931 = vmul.f32 %v919, %v927
        %v932 = vmul.f32 %v920, %v928
        %v933 = vmul.f32 %v921, %v929
        %v934 = vmul.f32 %v922, %v930
        %v935 = vmul.f32 %v900, %v931
        %v936 = vmul.f32 %v902, %v932
        %v937 = vmul.f32 %v904, %v933
        %v938 = vmul.f32 %v906, %v934
        %v940 = vsel %vm882, %v935, 0
        %v943 = vsel %vm882, %v936, 0
        %945 = vmatprep.subr.mxu0 0.0
        %946 = vmatpush1.msra.mxu0 0.0
        %947 = vmatprep.subr.mxu0 0.0
        %948 = vmatpush1.msra.mxu0 0.0
        %949 = vmatprep.subr.mxu0 0.0
        %950 = vmatpush1.msra.mxu0 0.0
        %951 = vmatprep.subr.mxu0 0.0
        %952 = vmatpush1.msra.mxu0 0.0
        %953 = vmatprep.subr.mxu0 0.0
        %954 = vmatpush1.msra.mxu0 0.0
        %955 = vmatprep.subr.mxu0 0.0
        %956 = vmatpush1.msra.mxu0 0.0
        %957 = vmatprep.subr.mxu0 0.0
        %958 = vmatpush1.msra.mxu0 0.0
        %959 = vmatprep.subr.mxu0 0.0
        %960 = vmatpush1.msra.mxu0 0.0
        %961 = vmatprep.subr.mxu0 0.0
        %962 = vmatpush1.msra.mxu0 0.0
        %963 = vmatprep.subr.mxu0 0.0
        %964 = vmatpush1.msra.mxu0 0.0
        %965 = vmatprep.subr.mxu0 0.0
        %966 = vmatpush1.msra.mxu0 0.0
        %967 = vmatprep.subr.mxu0 0.0
        %968 = vmatpush1.msra.mxu0 0.0
        %969 = vmatprep.subr.mxu0 0.0
        %970 = vmatpush1.msra.mxu0 0.0
        %971 = vmatprep.subr.mxu0 0.0
        %972 = vmatpush1.msra.mxu0 0.0
        %973 = vmatprep.subr.mxu0 0.0
        %974 = vmatpush1.msra.mxu0 %v690
        %975 = vmatprep.subr.mxu0 0.0
        %976 = vmatpush1.msra.mxu0 %v685
        %977 = vmatprep.subr.mxu0 0.0
        %978 = vmatpush2.msra.mxu0 0.0
        %979 = vmatprep.subr.mxu0 0.0
        %980 = vmatpush2.msra.mxu0 0.0
        %981 = vmatprep.subr.mxu0 0.0
        %982 = vmatpush2.msra.mxu0 0.0
        %983 = vmatprep.subr.mxu0 0.0
        %984 = vmatpush2.msra.mxu0 0.0
        %985 = vmatprep.subr.mxu0 0.0
        %986 = vmatpush2.msra.mxu0 0.0
        %987 = vmatprep.subr.mxu0 0.0
        %988 = vmatpush2.msra.mxu0 0.0
        %989 = vmatprep.subr.mxu0 0.0
        %990 = vmatpush2.msra.mxu0 0.0
        %991 = vmatprep.subr.mxu0 0.0
        %992 = vmatpush2.msra.mxu0 0.0
        %993 = vmatprep.subr.mxu0 0.0
        %994 = vmatpush2.msra.mxu0 0.0
        %995 = vmatprep.subr.mxu0 0.0
        %996 = vmatpush2.msra.mxu0 0.0
        %997 = vmatprep.subr.mxu0 0.0
        %998 = vmatpush2.msra.mxu0 0.0
        %999 = vmatprep.subr.mxu0 0.0
        %1000 = vmatpush2.msra.mxu0 0.0
        %1001 = vmatprep.subr.mxu0 0.0
        %1002 = vmatpush2.msra.mxu0 0.0
        %1003 = vmatprep.subr.mxu0 0.0
        %1004 = vmatpush2.msra.mxu0 0.0
        %1005 = vmatprep.subr.mxu0 0.0
        %1006 = vmatpush2.msra.mxu0 0.0
        %1007 = vmatprep.subr.mxu0 0.0
        %1008 = vmatpush2.msra.mxu0 0.0
        %1009 = vmatprep.mubr.f32.mxu0 0.0
        %1010 = vmatmul.mubr.f32.gmra.mxu0 %v940
        %v1011 = vpop.f32.mrf.mxu0
        %v1012 = vadd.f32 0.0, %v1011
        %v1013 = vpop.f32.mrf.mxu0
        %1014 = vmatprep.mubr.f32.mxu0 0.0
        %1015 = vmatmul.mubr.f32.gmra.mxu0 %v943
        %v1016 = vpop.f32.mrf.mxu0
        %v1017 = vadd.f32 0.0, %v1016
        %v1018 = vpop.f32.mrf.mxu0
        %1019 = vdwg.mxu0
        %v1021 = vsel %vm882, %v937, 0
        %v1024 = vsel %vm882, %v938, 0
        %1026 = vmatprep.subr.mxu0 0.0
        %1027 = vmatpush1.msra.mxu0 0.0
        %1028 = vmatprep.subr.mxu0 0.0
        %1029 = vmatpush1.msra.mxu0 0.0
        %1030 = vmatprep.subr.mxu0 0.0
        %1031 = vmatpush1.msra.mxu0 0.0
        %1032 = vmatprep.subr.mxu0 0.0
        %1033 = vmatpush1.msra.mxu0 0.0
        %1034 = vmatprep.subr.mxu0 0.0
        %1035 = vmatpush1.msra.mxu0 0.0
        %1036 = vmatprep.subr.mxu0 0.0
        %1037 = vmatpush1.msra.mxu0 0.0
        %1038 = vmatprep.subr.mxu0 0.0
        %1039 = vmatpush1.msra.mxu0 0.0
        %1040 = vmatprep.subr.mxu0 0.0
        %1041 = vmatpush1.msra.mxu0 0.0
        %1042 = vmatprep.subr.mxu0 0.0
        %1043 = vmatpush1.msra.mxu0 0.0
        %1044 = vmatprep.subr.mxu0 0.0
        %1045 = vmatpush1.msra.mxu0 0.0
        %1046 = vmatprep.subr.mxu0 0.0
        %1047 = vmatpush1.msra.mxu0 0.0
        %1048 = vmatprep.subr.mxu0 0.0
        %1049 = vmatpush1.msra.mxu0 0.0
        %1050 = vmatprep.subr.mxu0 0.0
        %1051 = vmatpush1.msra.mxu0 0.0
        %1052 = vmatprep.subr.mxu0 0.0
        %1053 = vmatpush1.msra.mxu0 0.0
        %1054 = vmatprep.subr.mxu0 0.0
        %1055 = vmatpush1.msra.mxu0 %v700
        %1056 = vmatprep.subr.mxu0 0.0
        %1057 = vmatpush1.msra.mxu0 %v695
        %1058 = vmatprep.subr.mxu0 0.0
        %1059 = vmatpush2.msra.mxu0 0.0
        %1060 = vmatprep.subr.mxu0 0.0
        %1061 = vmatpush2.msra.mxu0 0.0
        %1062 = vmatprep.subr.mxu0 0.0
        %1063 = vmatpush2.msra.mxu0 0.0
        %1064 = vmatprep.subr.mxu0 0.0
        %1065 = vmatpush2.msra.mxu0 0.0
        %1066 = vmatprep.subr.mxu0 0.0
        %1067 = vmatpush2.msra.mxu0 0.0
        %1068 = vmatprep.subr.mxu0 0.0
        %1069 = vmatpush2.msra.mxu0 0.0
        %1070 = vmatprep.subr.mxu0 0.0
        %1071 = vmatpush2.msra.mxu0 0.0
        %1072 = vmatprep.subr.mxu0 0.0
        %1073 = vmatpush2.msra.mxu0 0.0
        %1074 = vmatprep.subr.mxu0 0.0
        %1075 = vmatpush2.msra.mxu0 0.0
        %1076 = vmatprep.subr.mxu0 0.0
        %1077 = vmatpush2.msra.mxu0 0.0
        %1078 = vmatprep.subr.mxu0 0.0
        %1079 = vmatpush2.msra.mxu0 0.0
        %1080 = vmatprep.subr.mxu0 0.0
        %1081 = vmatpush2.msra.mxu0 0.0
        %1082 = vmatprep.subr.mxu0 0.0
        %1083 = vmatpush2.msra.mxu0 0.0
        %1084 = vmatprep.subr.mxu0 0.0
        %1085 = vmatpush2.msra.mxu0 0.0
        %1086 = vmatprep.subr.mxu0 0.0
        %1087 = vmatpush2.msra.mxu0 0.0
        %1088 = vmatprep.subr.mxu0 0.0
        %1089 = vmatpush2.msra.mxu0 0.0
        %1090 = vmatprep.mubr.f32.mxu0 0.0
        %1091 = vmatmul.mubr.f32.gmra.mxu0 %v1021
        %v1092 = vpop.f32.mrf.mxu0
        %v1093 = vadd.f32 0.0, %v1092
        %v1094 = vpop.f32.mrf.mxu0
        %1095 = vmatprep.mubr.f32.mxu0 0.0
        %1096 = vmatmul.mubr.f32.gmra.mxu0 %v1024
        %v1097 = vpop.f32.mrf.mxu0
        %v1098 = vadd.f32 0.0, %v1097
        %v1099 = vpop.f32.mrf.mxu0
        %1100 = vdwg.mxu0
        %1101 = vrot.lane.b32.xlu0 %v584, 120
        %v1102 = vpop.permute.xlu0 %1101
        %1103 = vrot.lane.b32.xlu0 %v589, 120
        %v1104 = vpop.permute.xlu0 %1103
        %1105 = vrot.lane.b32.xlu0 %v584, 88
        %v1106 = vpop.permute.xlu0 %1105
        %1107 = vrot.lane.b32.xlu0 %v589, 88
        %v1108 = vpop.permute.xlu0 %1107
        %v1109 = vsel %vm709, %v1102, 0
        %v1111 = vsel %vm709, %v1104, 0
        %v1113 = vsel %vm709, %v1106, 0
        %v1115 = vsel %vm709, %v1108, 0
        %1117 = vmatprep.subr.mxu0 0.0
        %1118 = vmatpush1.xpose.msra.mxu0 0.0
        %1119 = vmatprep.subr.mxu0 0.0
        %1120 = vmatpush1.xpose.msra.mxu0 0.0
        %1121 = vmatprep.subr.mxu0 0.0
        %1122 = vmatpush1.xpose.msra.mxu0 0.0
        %1123 = vmatprep.subr.mxu0 0.0
        %1124 = vmatpush1.xpose.msra.mxu0 0.0
        %1125 = vmatprep.subr.mxu0 0.0
        %1126 = vmatpush1.xpose.msra.mxu0 0.0
        %1127 = vmatprep.subr.mxu0 0.0
        %1128 = vmatpush1.xpose.msra.mxu0 0.0
        %1129 = vmatprep.subr.mxu0 0.0
        %1130 = vmatpush1.xpose.msra.mxu0 0.0
        %1131 = vmatprep.subr.mxu0 0.0
        %1132 = vmatpush1.xpose.msra.mxu0 0.0
        %1133 = vmatprep.subr.mxu0 0.0
        %1134 = vmatpush1.xpose.msra.mxu0 0.0
        %1135 = vmatprep.subr.mxu0 0.0
        %1136 = vmatpush1.xpose.msra.mxu0 0.0
        %1137 = vmatprep.subr.mxu0 0.0
        %1138 = vmatpush1.xpose.msra.mxu0 0.0
        %1139 = vmatprep.subr.mxu0 0.0
        %1140 = vmatpush1.xpose.msra.mxu0 0.0
        %1141 = vmatprep.subr.mxu0 0.0
        %1142 = vmatpush1.xpose.msra.mxu0 0.0
        %1143 = vmatprep.subr.mxu0 0.0
        %1144 = vmatpush1.xpose.msra.mxu0 0.0
        %1145 = vmatprep.subr.mxu0 0.0
        %1146 = vmatpush1.xpose.msra.mxu0 %v1115
        %1147 = vmatprep.subr.mxu0 0.0
        %1148 = vmatpush1.xpose.msra.mxu0 %v1113
        %1149 = vmatprep.subr.mxu0 0.0
        %1150 = vmatpush2.xpose.msra.mxu0 0.0
        %1151 = vmatprep.subr.mxu0 0.0
        %1152 = vmatpush2.xpose.msra.mxu0 0.0
        %1153 = vmatprep.subr.mxu0 0.0
        %1154 = vmatpush2.xpose.msra.mxu0 0.0
        %1155 = vmatprep.subr.mxu0 0.0
        %1156 = vmatpush2.xpose.msra.mxu0 0.0
        %1157 = vmatprep.subr.mxu0 0.0
        %1158 = vmatpush2.xpose.msra.mxu0 0.0
        %1159 = vmatprep.subr.mxu0 0.0
        %1160 = vmatpush2.xpose.msra.mxu0 0.0
        %1161 = vmatprep.subr.mxu0 0.0
        %1162 = vmatpush2.xpose.msra.mxu0 0.0
        %1163 = vmatprep.subr.mxu0 0.0
        %1164 = vmatpush2.xpose.msra.mxu0 0.0
        %1165 = vmatprep.subr.mxu0 0.0
        %1166 = vmatpush2.xpose.msra.mxu0 0.0
        %1167 = vmatprep.subr.mxu0 0.0
        %1168 = vmatpush2.xpose.msra.mxu0 0.0
        %1169 = vmatprep.subr.mxu0 0.0
        %1170 = vmatpush2.xpose.msra.mxu0 0.0
        %1171 = vmatprep.subr.mxu0 0.0
        %1172 = vmatpush2.xpose.msra.mxu0 0.0
        %1173 = vmatprep.subr.mxu0 0.0
        %1174 = vmatpush2.xpose.msra.mxu0 0.0
        %1175 = vmatprep.subr.mxu0 0.0
        %1176 = vmatpush2.xpose.msra.mxu0 0.0
        %1177 = vmatprep.subr.mxu0 0.0
        %1178 = vmatpush2.xpose.msra.mxu0 0.0
        %1179 = vmatprep.subr.mxu0 0.0
        %1180 = vmatpush2.xpose.msra.mxu0 0.0
        %1181 = vmatprep.mubr.f32.mxu0 0.0
        %1182 = vmatmul.mubr.f32.gmra.mxu0 %v1109
        %v1183 = vpop.f32.mrf.mxu0
        %v1184 = vadd.f32 0.0, %v1183
        %v1185 = vpop.f32.mrf.mxu0
        %1186 = vmatprep.mubr.f32.mxu0 0.0
        %1187 = vmatmul.mubr.f32.gmra.mxu0 %v1111
        %v1188 = vpop.f32.mrf.mxu0
        %v1189 = vadd.f32 0.0, %v1188
        %v1190 = vpop.f32.mrf.mxu0
        %1191 = vdwg.mxu0
        %1192 = vrot.lane.b32.xlu0 %v594, 120
        %v1193 = vpop.permute.xlu0 %1192
        %1194 = vrot.lane.b32.xlu0 %v599, 120
        %v1195 = vpop.permute.xlu0 %1194
        %1196 = vrot.lane.b32.xlu0 %v594, 88
        %v1197 = vpop.permute.xlu0 %1196
        %1198 = vrot.lane.b32.xlu0 %v599, 88
        %v1199 = vpop.permute.xlu0 %1198
        %v1200 = vsel %vm709, %v1193, 0
        %v1202 = vsel %vm709, %v1195, 0
        %v1204 = vsel %vm709, %v1197, 0
        %v1206 = vsel %vm709, %v1199, 0
        %1208 = vmatprep.subr.mxu0 0.0
        %1209 = vmatpush1.xpose.msra.mxu0 0.0
        %1210 = vmatprep.subr.mxu0 0.0
        %1211 = vmatpush1.xpose.msra.mxu0 0.0
        %1212 = vmatprep.subr.mxu0 0.0
        %1213 = vmatpush1.xpose.msra.mxu0 0.0
        %1214 = vmatprep.subr.mxu0 0.0
        %1215 = vmatpush1.xpose.msra.mxu0 0.0
        %1216 = vmatprep.subr.mxu0 0.0
        %1217 = vmatpush1.xpose.msra.mxu0 0.0
        %1218 = vmatprep.subr.mxu0 0.0
        %1219 = vmatpush1.xpose.msra.mxu0 0.0
        %1220 = vmatprep.subr.mxu0 0.0
        %1221 = vmatpush1.xpose.msra.mxu0 0.0
        %1222 = vmatprep.subr.mxu0 0.0
        %1223 = vmatpush1.xpose.msra.mxu0 0.0
        %1224 = vmatprep.subr.mxu0 0.0
        %1225 = vmatpush1.xpose.msra.mxu0 0.0
        %1226 = vmatprep.subr.mxu0 0.0
        %1227 = vmatpush1.xpose.msra.mxu0 0.0
        %1228 = vmatprep.subr.mxu0 0.0
        %1229 = vmatpush1.xpose.msra.mxu0 0.0
        %1230 = vmatprep.subr.mxu0 0.0
        %1231 = vmatpush1.xpose.msra.mxu0 0.0
        %1232 = vmatprep.subr.mxu0 0.0
        %1233 = vmatpush1.xpose.msra.mxu0 0.0
        %1234 = vmatprep.subr.mxu0 0.0
        %1235 = vmatpush1.xpose.msra.mxu0 0.0
        %1236 = vmatprep.subr.mxu0 0.0
        %1237 = vmatpush1.xpose.msra.mxu0 %v1206
        %1238 = vmatprep.subr.mxu0 0.0
        %1239 = vmatpush1.xpose.msra.mxu0 %v1204
        %1240 = vmatprep.subr.mxu0 0.0
        %1241 = vmatpush2.xpose.msra.mxu0 0.0
        %1242 = vmatprep.subr.mxu0 0.0
        %1243 = vmatpush2.xpose.msra.mxu0 0.0
        %1244 = vmatprep.subr.mxu0 0.0
        %1245 = vmatpush2.xpose.msra.mxu0 0.0
        %1246 = vmatprep.subr.mxu0 0.0
        %1247 = vmatpush2.xpose.msra.mxu0 0.0
        %1248 = vmatprep.subr.mxu0 0.0
        %1249 = vmatpush2.xpose.msra.mxu0 0.0
        %1250 = vmatprep.subr.mxu0 0.0
        %1251 = vmatpush2.xpose.msra.mxu0 0.0
        %1252 = vmatprep.subr.mxu0 0.0
        %1253 = vmatpush2.xpose.msra.mxu0 0.0
        %1254 = vmatprep.subr.mxu0 0.0
        %1255 = vmatpush2.xpose.msra.mxu0 0.0
        %1256 = vmatprep.subr.mxu0 0.0
        %1257 = vmatpush2.xpose.msra.mxu0 0.0
        %1258 = vmatprep.subr.mxu0 0.0
        %1259 = vmatpush2.xpose.msra.mxu0 0.0
        %1260 = vmatprep.subr.mxu0 0.0
        %1261 = vmatpush2.xpose.msra.mxu0 0.0
        %1262 = vmatprep.subr.mxu0 0.0
        %1263 = vmatpush2.xpose.msra.mxu0 0.0
        %1264 = vmatprep.subr.mxu0 0.0
        %1265 = vmatpush2.xpose.msra.mxu0 0.0
        %1266 = vmatprep.subr.mxu0 0.0
        %1267 = vmatpush2.xpose.msra.mxu0 0.0
        %1268 = vmatprep.subr.mxu0 0.0
        %1269 = vmatpush2.xpose.msra.mxu0 0.0
        %1270 = vmatprep.subr.mxu0 0.0
        %1271 = vmatpush2.xpose.msra.mxu0 0.0
        %1272 = vmatprep.mubr.f32.mxu0 0.0
        %1273 = vmatmul.mubr.f32.gmra.mxu0 %v1200
        %v1274 = vpop.f32.mrf.mxu0
        %v1275 = vadd.f32 0.0, %v1274
        %v1276 = vpop.f32.mrf.mxu0
        %1277 = vmatprep.mubr.f32.mxu0 0.0
        %1278 = vmatmul.mubr.f32.gmra.mxu0 %v1202
        %v1279 = vpop.f32.mrf.mxu0
        %v1280 = vadd.f32 0.0, %v1279
        %v1281 = vpop.f32.mrf.mxu0
        %1282 = vdwg.mxu0
        %v1283 = vsel %vm882, %v1184, -inf
        %1284 = vmax.xlane.f32.xlu0 %v1283
        %v1285 = vpop.xlane.xlu0 %1284
        %v1286 = vsel %vm882, %v1189, -inf
        %1287 = vmax.xlane.f32.xlu0 %v1286
        %v1288 = vpop.xlane.xlu0 %1287
        %v1289 = vsel %vm882, %v1275, -inf
        %1290 = vmax.xlane.f32.xlu0 %v1289
        %v1291 = vpop.xlane.xlu0 %1290
        %v1292 = vsel %vm882, %v1280, -inf
        %1293 = vmax.xlane.f32.xlu0 %v1292
        %v1294 = vpop.xlane.xlu0 %1293
        %v1295 = vsub.f32 %v1184, %v1285
        %v1296 = vsub.f32 %v1189, %v1288
        %v1297 = vsub.f32 %v1275, %v1291
        %v1298 = vsub.f32 %v1280, %v1294
        %v1299 = vmul.f32 %v1295, 1.442695
        %v1300 = vpow.pop %v1299
        %v1301 = vmul.f32 %v1296, 1.442695
        %v1302 = vpow.pop %v1301
        %v1303 = vmul.f32 %v1297, 1.442695
        %v1304 = vpow.pop %v1303
        %v1305 = vmul.f32 %v1298, 1.442695
        %v1306 = vpow.pop %v1305
        %v1307 = vsel %vm882, %v1300, 0.0
        %1308 = vadd.xlane.f32.xlu0 %v1307
        %v1309 = vpop.xlane.xlu0 %1308
        %v1310 = vsel %vm882, %v1302, 0.0
        %1311 = vadd.xlane.f32.xlu0 %v1310
        %v1312 = vpop.xlane.xlu0 %1311
        %v1313 = vsel %vm882, %v1304, 0.0
        %1314 = vadd.xlane.f32.xlu0 %v1313
        %v1315 = vpop.xlane.xlu0 %1314
        %v1316 = vsel %vm882, %v1306, 0.0
        %1317 = vadd.xlane.f32.xlu0 %v1316
        %v1318 = vpop.xlane.xlu0 %1317
        %v1319 = vrcp.pop %v1309
        %v1320 = vrcp.pop %v1312
        %v1321 = vrcp.pop %v1315
        %v1322 = vrcp.pop %v1318
        %v1323 = vmul.f32 %v1309, %v1319
        %v1324 = vmul.f32 %v1312, %v1320
        %v1325 = vmul.f32 %v1315, %v1321
        %v1326 = vmul.f32 %v1318, %v1322
        %v1327 = vsub.f32 2.0, %v1323
        %v1328 = vsub.f32 2.0, %v1324
        %v1329 = vsub.f32 2.0, %v1325
        %v1330 = vsub.f32 2.0, %v1326
        %v1331 = vmul.f32 %v1319, %v1327
        %v1332 = vmul.f32 %v1320, %v1328
        %v1333 = vmul.f32 %v1321, %v1329
        %v1334 = vmul.f32 %v1322, %v1330
        %v1335 = vmul.f32 %v1300, %v1331
        %v1336 = vmul.f32 %v1302, %v1332
        %v1337 = vmul.f32 %v1304, %v1333
        %v1338 = vmul.f32 %v1306, %v1334
        %1341 = vrot.lane.b32.xlu0 %v685, 120
        %v1342 = vpop.permute.xlu0 %1341
        %1343 = vrot.lane.b32.xlu0 %v690, 120
        %v1344 = vpop.permute.xlu0 %1343
        %v1348 = vsel %vm882, %v1335, 0
        %v1351 = vsel %vm882, %v1336, 0
        %1353 = vmatprep.subr.mxu0 0.0
        %1354 = vmatpush1.msra.mxu0 0.0
        %1355 = vmatprep.subr.mxu0 0.0
        %1356 = vmatpush1.msra.mxu0 0.0
        %1357 = vmatprep.subr.mxu0 0.0
        %1358 = vmatpush1.msra.mxu0 0.0
        %1359 = vmatprep.subr.mxu0 0.0
        %1360 = vmatpush1.msra.mxu0 0.0
        %1361 = vmatprep.subr.mxu0 0.0
        %1362 = vmatpush1.msra.mxu0 0.0
        %1363 = vmatprep.subr.mxu0 0.0
        %1364 = vmatpush1.msra.mxu0 0.0
        %1365 = vmatprep.subr.mxu0 0.0
        %1366 = vmatpush1.msra.mxu0 0.0
        %1367 = vmatprep.subr.mxu0 0.0
        %1368 = vmatpush1.msra.mxu0 0.0
        %1369 = vmatprep.subr.mxu0 0.0
        %1370 = vmatpush1.msra.mxu0 0.0
        %1371 = vmatprep.subr.mxu0 0.0
        %1372 = vmatpush1.msra.mxu0 0.0
        %1373 = vmatprep.subr.mxu0 0.0
        %1374 = vmatpush1.msra.mxu0 0.0
        %1375 = vmatprep.subr.mxu0 0.0
        %1376 = vmatpush1.msra.mxu0 0.0
        %1377 = vmatprep.subr.mxu0 0.0
        %1378 = vmatpush1.msra.mxu0 0.0
        %1379 = vmatprep.subr.mxu0 0.0
        %1380 = vmatpush1.msra.mxu0 0.0
        %1381 = vmatprep.subr.mxu0 0.0
        %1382 = vmatpush1.msra.mxu0 %v1344
        %1383 = vmatprep.subr.mxu0 0.0
        %1384 = vmatpush1.msra.mxu0 %v1342
        %1385 = vmatprep.subr.mxu0 0.0
        %1386 = vmatpush2.msra.mxu0 0.0
        %1387 = vmatprep.subr.mxu0 0.0
        %1388 = vmatpush2.msra.mxu0 0.0
        %1389 = vmatprep.subr.mxu0 0.0
        %1390 = vmatpush2.msra.mxu0 0.0
        %1391 = vmatprep.subr.mxu0 0.0
        %1392 = vmatpush2.msra.mxu0 0.0
        %1393 = vmatprep.subr.mxu0 0.0
        %1394 = vmatpush2.msra.mxu0 0.0
        %1395 = vmatprep.subr.mxu0 0.0
        %1396 = vmatpush2.msra.mxu0 0.0
        %1397 = vmatprep.subr.mxu0 0.0
        %1398 = vmatpush2.msra.mxu0 0.0
        %1399 = vmatprep.subr.mxu0 0.0
        %1400 = vmatpush2.msra.mxu0 0.0
        %1401 = vmatprep.subr.mxu0 0.0
        %1402 = vmatpush2.msra.mxu0 0.0
        %1403 = vmatprep.subr.mxu0 0.0
        %1404 = vmatpush2.msra.mxu0 0.0
        %1405 = vmatprep.subr.mxu0 0.0
        %1406 = vmatpush2.msra.mxu0 0.0
        %1407 = vmatprep.subr.mxu0 0.0
        %1408 = vmatpush2.msra.mxu0 0.0
        %1409 = vmatprep.subr.mxu0 0.0
        %1410 = vmatpush2.msra.mxu0 0.0
        %1411 = vmatprep.subr.mxu0 0.0
        %1412 = vmatpush2.msra.mxu0 0.0
        %1413 = vmatprep.subr.mxu0 0.0
        %1414 = vmatpush2.msra.mxu0 0.0
        %1415 = vmatprep.subr.mxu0 0.0
        %1416 = vmatpush2.msra.mxu0 0.0
        %1417 = vmatprep.mubr.f32.mxu0 0.0
        %1418 = vmatmul.mubr.f32.gmra.mxu0 %v1348
        %v1419 = vpop.f32.mrf.mxu0
        %v1420 = vadd.f32 0.0, %v1419
        %v1421 = vpop.f32.mrf.mxu0
        %1422 = vmatprep.mubr.f32.mxu0 0.0
        %1423 = vmatmul.mubr.f32.gmra.mxu0 %v1351
        %v1424 = vpop.f32.mrf.mxu0
        %v1425 = vadd.f32 0.0, %v1424
        %v1426 = vpop.f32.mrf.mxu0
        %1427 = vdwg.mxu0
        %1430 = vrot.lane.b32.xlu0 %v695, 120
        %v1431 = vpop.permute.xlu0 %1430
        %1432 = vrot.lane.b32.xlu0 %v700, 120
        %v1433 = vpop.permute.xlu0 %1432
        %v1437 = vsel %vm882, %v1337, 0
        %v1440 = vsel %vm882, %v1338, 0
        %1442 = vmatprep.subr.mxu0 0.0
        %1443 = vmatpush1.msra.mxu0 0.0
        %1444 = vmatprep.subr.mxu0 0.0
        %1445 = vmatpush1.msra.mxu0 0.0
        %1446 = vmatprep.subr.mxu0 0.0
        %1447 = vmatpush1.msra.mxu0 0.0
        %1448 = vmatprep.subr.mxu0 0.0
        %1449 = vmatpush1.msra.mxu0 0.0
        %1450 = vmatprep.subr.mxu0 0.0
        %1451 = vmatpush1.msra.mxu0 0.0
        %1452 = vmatprep.subr.mxu0 0.0
        %1453 = vmatpush1.msra.mxu0 0.0
        %1454 = vmatprep.subr.mxu0 0.0
        %1455 = vmatpush1.msra.mxu0 0.0
        %1456 = vmatprep.subr.mxu0 0.0
        %1457 = vmatpush1.msra.mxu0 0.0
        %1458 = vmatprep.subr.mxu0 0.0
        %1459 = vmatpush1.msra.mxu0 0.0
        %1460 = vmatprep.subr.mxu0 0.0
        %1461 = vmatpush1.msra.mxu0 0.0
        %1462 = vmatprep.subr.mxu0 0.0
        %1463 = vmatpush1.msra.mxu0 0.0
        %1464 = vmatprep.subr.mxu0 0.0
        %1465 = vmatpush1.msra.mxu0 0.0
        %1466 = vmatprep.subr.mxu0 0.0
        %1467 = vmatpush1.msra.mxu0 0.0
        %1468 = vmatprep.subr.mxu0 0.0
        %1469 = vmatpush1.msra.mxu0 0.0
        %1470 = vmatprep.subr.mxu0 0.0
        %1471 = vmatpush1.msra.mxu0 %v1433
        %1472 = vmatprep.subr.mxu0 0.0
        %1473 = vmatpush1.msra.mxu0 %v1431
        %1474 = vmatprep.subr.mxu0 0.0
        %1475 = vmatpush2.msra.mxu0 0.0
        %1476 = vmatprep.subr.mxu0 0.0
        %1477 = vmatpush2.msra.mxu0 0.0
        %1478 = vmatprep.subr.mxu0 0.0
        %1479 = vmatpush2.msra.mxu0 0.0
        %1480 = vmatprep.subr.mxu0 0.0
        %1481 = vmatpush2.msra.mxu0 0.0
        %1482 = vmatprep.subr.mxu0 0.0
        %1483 = vmatpush2.msra.mxu0 0.0
        %1484 = vmatprep.subr.mxu0 0.0
        %1485 = vmatpush2.msra.mxu0 0.0
        %1486 = vmatprep.subr.mxu0 0.0
        %1487 = vmatpush2.msra.mxu0 0.0
        %1488 = vmatprep.subr.mxu0 0.0
        %1489 = vmatpush2.msra.mxu0 0.0
        %1490 = vmatprep.subr.mxu0 0.0
        %1491 = vmatpush2.msra.mxu0 0.0
        %1492 = vmatprep.subr.mxu0 0.0
        %1493 = vmatpush2.msra.mxu0 0.0
        %1494 = vmatprep.subr.mxu0 0.0
        %1495 = vmatpush2.msra.mxu0 0.0
        %1496 = vmatprep.subr.mxu0 0.0
        %1497 = vmatpush2.msra.mxu0 0.0
        %1498 = vmatprep.subr.mxu0 0.0
        %1499 = vmatpush2.msra.mxu0 0.0
        %1500 = vmatprep.subr.mxu0 0.0
        %1501 = vmatpush2.msra.mxu0 0.0
        %1502 = vmatprep.subr.mxu0 0.0
        %1503 = vmatpush2.msra.mxu0 0.0
        %1504 = vmatprep.subr.mxu0 0.0
        %1505 = vmatpush2.msra.mxu0 0.0
        %1506 = vmatprep.mubr.f32.mxu0 0.0
        %1507 = vmatmul.mubr.f32.gmra.mxu0 %v1437
        %v1508 = vpop.f32.mrf.mxu0
        %v1509 = vadd.f32 0.0, %v1508
        %v1510 = vpop.f32.mrf.mxu0
        %1511 = vmatprep.mubr.f32.mxu0 0.0
        %1512 = vmatmul.mubr.f32.gmra.mxu0 %v1440
        %v1513 = vpop.f32.mrf.mxu0
        %v1514 = vadd.f32 0.0, %v1513
        %v1515 = vpop.f32.mrf.mxu0
        %1516 = vdwg.mxu0
        %v1518 = vsel %vm709, %v1420, 0
        %v1521 = vsel %vm709, %v1425, 0
        %v1524 = vsel %vm709, %v1509, 0
        %v1527 = vsel %vm709, %v1514, 0
        %1529 = vmatprep.subr.mxu0 0.0
        %1530 = vmatpush1.msra.mxu0 0.0
        %1531 = vmatprep.subr.mxu0 0.0
        %1532 = vmatpush1.msra.mxu0 0.0
        %1533 = vmatprep.subr.mxu0 0.0
        %1534 = vmatpush1.msra.mxu0 0.0
        %1535 = vmatprep.subr.mxu0 0.0
        %1536 = vmatpush1.msra.mxu0 0.0
        %1537 = vmatprep.subr.mxu0 0.0
        %1538 = vmatpush1.msra.mxu0 0.0
        %1539 = vmatprep.subr.mxu0 0.0
        %1540 = vmatpush1.msra.mxu0 0.0
        %1541 = vmatprep.subr.mxu0 0.0
        %1542 = vmatpush1.msra.mxu0 0.0
        %1543 = vmatprep.subr.mxu0 0.0
        %1544 = vmatpush1.msra.mxu0 0.0
        %1545 = vmatprep.subr.mxu0 0.0
        %1546 = vmatpush1.msra.mxu0 0.0
        %1547 = vmatprep.subr.mxu0 0.0
        %1548 = vmatpush1.msra.mxu0 0.0
        %1549 = vmatprep.subr.mxu0 0.0
        %1550 = vmatpush1.msra.mxu0 0.0
        %1551 = vmatprep.subr.mxu0 0.0
        %1552 = vmatpush1.msra.mxu0 0.0
        %1553 = vmatprep.subr.mxu0 0.0
        %1554 = vmatpush1.msra.mxu0 0.0
        %1555 = vmatprep.subr.mxu0 0.0
        %1556 = vmatpush1.msra.mxu0 0.0
        %1557 = vmatprep.subr.mxu0 0.0
        %1558 = vmatpush1.msra.mxu0 0.0
        %1559 = vmatprep.subr.mxu0 0.0
        %1560 = vmatpush1.msra.mxu0 %v485
        %1561 = vmatprep.subr.mxu0 0.0
        %1562 = vmatpush2.msra.mxu0 0.0
        %1563 = vmatprep.subr.mxu0 0.0
        %1564 = vmatpush2.msra.mxu0 0.0
        %1565 = vmatprep.subr.mxu0 0.0
        %1566 = vmatpush2.msra.mxu0 0.0
        %1567 = vmatprep.subr.mxu0 0.0
        %1568 = vmatpush2.msra.mxu0 0.0
        %1569 = vmatprep.subr.mxu0 0.0
        %1570 = vmatpush2.msra.mxu0 0.0
        %1571 = vmatprep.subr.mxu0 0.0
        %1572 = vmatpush2.msra.mxu0 0.0
        %1573 = vmatprep.subr.mxu0 0.0
        %1574 = vmatpush2.msra.mxu0 0.0
        %1575 = vmatprep.subr.mxu0 0.0
        %1576 = vmatpush2.msra.mxu0 0.0
        %1577 = vmatprep.subr.mxu0 0.0
        %1578 = vmatpush2.msra.mxu0 0.0
        %1579 = vmatprep.subr.mxu0 0.0
        %1580 = vmatpush2.msra.mxu0 0.0
        %1581 = vmatprep.subr.mxu0 0.0
        %1582 = vmatpush2.msra.mxu0 0.0
        %1583 = vmatprep.subr.mxu0 0.0
        %1584 = vmatpush2.msra.mxu0 0.0
        %1585 = vmatprep.subr.mxu0 0.0
        %1586 = vmatpush2.msra.mxu0 0.0
        %1587 = vmatprep.subr.mxu0 0.0
        %1588 = vmatpush2.msra.mxu0 0.0
        %1589 = vmatprep.subr.mxu0 0.0
        %1590 = vmatpush2.msra.mxu0 0.0
        %1591 = vmatprep.subr.mxu0 0.0
        %1592 = vmatpush2.msra.mxu0 0.0
        %1593 = vmatprep.mubr.f32.mxu0 0.0
        %1594 = vmatmul.mubr.f32.gmra.mxu0 %v1518
        %v1595 = vpop.f32.mrf.mxu0
        %v1596 = vadd.f32 0.0, %v1595
        %v1597 = vpop.f32.mrf.mxu0
        %1598 = vmatprep.mubr.f32.mxu0 0.0
        %1599 = vmatmul.mubr.f32.gmra.mxu0 %v1521
        %v1600 = vpop.f32.mrf.mxu0
        %v1601 = vadd.f32 0.0, %v1600
        %v1602 = vpop.f32.mrf.mxu0
        %1603 = vmatprep.mubr.f32.mxu0 0.0
        %1604 = vmatmul.mubr.f32.gmra.mxu0 %v1524
        %v1605 = vpop.f32.mrf.mxu0
        %v1606 = vadd.f32 0.0, %v1605
        %v1607 = vpop.f32.mrf.mxu0
        %1608 = vmatprep.mubr.f32.mxu0 0.0
        %1609 = vmatmul.mubr.f32.gmra.mxu0 %v1527
        %v1610 = vpop.f32.mrf.mxu0
        %v1611 = vadd.f32 0.0, %v1610
        %v1612 = vpop.f32.mrf.mxu0
        %1613 = vdwg.mxu0
        %v1615 = vsel %vm709, %v1012, 0
        %v1618 = vsel %vm709, %v1017, 0
        %v1621 = vsel %vm709, %v1093, 0
        %v1624 = vsel %vm709, %v1098, 0
        %1626 = vmatprep.subr.mxu0 0.0
        %1627 = vmatpush1.msra.mxu0 0.0
        %1628 = vmatprep.subr.mxu0 0.0
        %1629 = vmatpush1.msra.mxu0 0.0
        %1630 = vmatprep.subr.mxu0 0.0
        %1631 = vmatpush1.msra.mxu0 0.0
        %1632 = vmatprep.subr.mxu0 0.0
        %1633 = vmatpush1.msra.mxu0 0.0
        %1634 = vmatprep.subr.mxu0 0.0
        %1635 = vmatpush1.msra.mxu0 0.0
        %1636 = vmatprep.subr.mxu0 0.0
        %1637 = vmatpush1.msra.mxu0 0.0
        %1638 = vmatprep.subr.mxu0 0.0
        %1639 = vmatpush1.msra.mxu0 0.0
        %1640 = vmatprep.subr.mxu0 0.0
        %1641 = vmatpush1.msra.mxu0 0.0
        %1642 = vmatprep.subr.mxu0 0.0
        %1643 = vmatpush1.msra.mxu0 0.0
        %1644 = vmatprep.subr.mxu0 0.0
        %1645 = vmatpush1.msra.mxu0 0.0
        %1646 = vmatprep.subr.mxu0 0.0
        %1647 = vmatpush1.msra.mxu0 0.0
        %1648 = vmatprep.subr.mxu0 0.0
        %1649 = vmatpush1.msra.mxu0 0.0
        %1650 = vmatprep.subr.mxu0 0.0
        %1651 = vmatpush1.msra.mxu0 0.0
        %1652 = vmatprep.subr.mxu0 0.0
        %1653 = vmatpush1.msra.mxu0 0.0
        %1654 = vmatprep.subr.mxu0 0.0
        %1655 = vmatpush1.msra.mxu0 0.0
        %1656 = vmatprep.subr.mxu0 0.0
        %1657 = vmatpush1.msra.mxu0 %v484
        %1658 = vmatprep.subr.mxu0 0.0
        %1659 = vmatpush2.msra.mxu0 0.0
        %1660 = vmatprep.subr.mxu0 0.0
        %1661 = vmatpush2.msra.mxu0 0.0
        %1662 = vmatprep.subr.mxu0 0.0
        %1663 = vmatpush2.msra.mxu0 0.0
        %1664 = vmatprep.subr.mxu0 0.0
        %1665 = vmatpush2.msra.mxu0 0.0
        %1666 = vmatprep.subr.mxu0 0.0
        %1667 = vmatpush2.msra.mxu0 0.0
        %1668 = vmatprep.subr.mxu0 0.0
        %1669 = vmatpush2.msra.mxu0 0.0
        %1670 = vmatprep.subr.mxu0 0.0
        %1671 = vmatpush2.msra.mxu0 0.0
        %1672 = vmatprep.subr.mxu0 0.0
        %1673 = vmatpush2.msra.mxu0 0.0
        %1674 = vmatprep.subr.mxu0 0.0
        %1675 = vmatpush2.msra.mxu0 0.0
        %1676 = vmatprep.subr.mxu0 0.0
        %1677 = vmatpush2.msra.mxu0 0.0
        %1678 = vmatprep.subr.mxu0 0.0
        %1679 = vmatpush2.msra.mxu0 0.0
        %1680 = vmatprep.subr.mxu0 0.0
        %1681 = vmatpush2.msra.mxu0 0.0
        %1682 = vmatprep.subr.mxu0 0.0
        %1683 = vmatpush2.msra.mxu0 0.0
        %1684 = vmatprep.subr.mxu0 0.0
        %1685 = vmatpush2.msra.mxu0 0.0
        %1686 = vmatprep.subr.mxu0 0.0
        %1687 = vmatpush2.msra.mxu0 0.0
        %1688 = vmatprep.subr.mxu0 0.0
        %1689 = vmatpush2.msra.mxu0 0.0
        %1690 = vmatprep.mubr.f32.mxu0 0.0
        %1691 = vmatmul.mubr.f32.gmra.mxu0 %v1615
        %v1692 = vpop.f32.mrf.mxu0
        %v1693 = vadd.f32 %v1596, %v1692
        %v1694 = vpop.f32.mrf.mxu0
        %1695 = vmatprep.mubr.f32.mxu0 0.0
        %1696 = vmatmul.mubr.f32.gmra.mxu0 %v1618
        %v1697 = vpop.f32.mrf.mxu0
        %v1698 = vadd.f32 %v1601, %v1697
        %v1699 = vpop.f32.mrf.mxu0
        %1700 = vmatprep.mubr.f32.mxu0 0.0
        %1701 = vmatmul.mubr.f32.gmra.mxu0 %v1621
        %v1702 = vpop.f32.mrf.mxu0
        %v1703 = vadd.f32 %v1606, %v1702
        %v1704 = vpop.f32.mrf.mxu0
        %1705 = vmatprep.mubr.f32.mxu0 0.0
        %1706 = vmatmul.mubr.f32.gmra.mxu0 %v1624
        %v1707 = vpop.f32.mrf.mxu0
        %v1708 = vadd.f32 %v1611, %v1707
        %v1709 = vpop.f32.mrf.mxu0
        %1710 = vdwg.mxu0
        %1711 = vrot.lane.b32.xlu0 %v584, 112
        %v1712 = vpop.permute.xlu0 %1711
        %1713 = vrot.lane.b32.xlu0 %v589, 112
        %v1714 = vpop.permute.xlu0 %1713
        %1715 = vrot.lane.b32.xlu0 %v584, 80
        %v1716 = vpop.permute.xlu0 %1715
        %1717 = vrot.lane.b32.xlu0 %v589, 80
        %v1718 = vpop.permute.xlu0 %1717
        %v1719 = vsel %vm709, %v1712, 0
        %v1721 = vsel %vm709, %v1714, 0
        %v1723 = vsel %vm709, %v1716, 0
        %v1725 = vsel %vm709, %v1718, 0
        %1727 = vmatprep.subr.mxu0 0.0
        %1728 = vmatpush1.xpose.msra.mxu0 0.0
        %1729 = vmatprep.subr.mxu0 0.0
        %1730 = vmatpush1.xpose.msra.mxu0 0.0
        %1731 = vmatprep.subr.mxu0 0.0
        %1732 = vmatpush1.xpose.msra.mxu0 0.0
        %1733 = vmatprep.subr.mxu0 0.0
        %1734 = vmatpush1.xpose.msra.mxu0 0.0
        %1735 = vmatprep.subr.mxu0 0.0
        %1736 = vmatpush1.xpose.msra.mxu0 0.0
        %1737 = vmatprep.subr.mxu0 0.0
        %1738 = vmatpush1.xpose.msra.mxu0 0.0
        %1739 = vmatprep.subr.mxu0 0.0
        %1740 = vmatpush1.xpose.msra.mxu0 0.0
        %1741 = vmatprep.subr.mxu0 0.0
        %1742 = vmatpush1.xpose.msra.mxu0 0.0
        %1743 = vmatprep.subr.mxu0 0.0
        %1744 = vmatpush1.xpose.msra.mxu0 0.0
        %1745 = vmatprep.subr.mxu0 0.0
        %1746 = vmatpush1.xpose.msra.mxu0 0.0
        %1747 = vmatprep.subr.mxu0 0.0
        %1748 = vmatpush1.xpose.msra.mxu0 0.0
        %1749 = vmatprep.subr.mxu0 0.0
        %1750 = vmatpush1.xpose.msra.mxu0 0.0
        %1751 = vmatprep.subr.mxu0 0.0
        %1752 = vmatpush1.xpose.msra.mxu0 0.0
        %1753 = vmatprep.subr.mxu0 0.0
        %1754 = vmatpush1.xpose.msra.mxu0 0.0
        %1755 = vmatprep.subr.mxu0 0.0
        %1756 = vmatpush1.xpose.msra.mxu0 %v1725
        %1757 = vmatprep.subr.mxu0 0.0
        %1758 = vmatpush1.xpose.msra.mxu0 %v1723
        %1759 = vmatprep.subr.mxu0 0.0
        %1760 = vmatpush2.xpose.msra.mxu0 0.0
        %1761 = vmatprep.subr.mxu0 0.0
        %1762 = vmatpush2.xpose.msra.mxu0 0.0
        %1763 = vmatprep.subr.mxu0 0.0
        %1764 = vmatpush2.xpose.msra.mxu0 0.0
        %1765 = vmatprep.subr.mxu0 0.0
        %1766 = vmatpush2.xpose.msra.mxu0 0.0
        %1767 = vmatprep.subr.mxu0 0.0
        %1768 = vmatpush2.xpose.msra.mxu0 0.0
        %1769 = vmatprep.subr.mxu0 0.0
        %1770 = vmatpush2.xpose.msra.mxu0 0.0
        %1771 = vmatprep.subr.mxu0 0.0
        %1772 = vmatpush2.xpose.msra.mxu0 0.0
        %1773 = vmatprep.subr.mxu0 0.0
        %1774 = vmatpush2.xpose.msra.mxu0 0.0
        %1775 = vmatprep.subr.mxu0 0.0
        %1776 = vmatpush2.xpose.msra.mxu0 0.0
        %1777 = vmatprep.subr.mxu0 0.0
        %1778 = vmatpush2.xpose.msra.mxu0 0.0
        %1779 = vmatprep.subr.mxu0 0.0
        %1780 = vmatpush2.xpose.msra.mxu0 0.0
        %1781 = vmatprep.subr.mxu0 0.0
        %1782 = vmatpush2.xpose.msra.mxu0 0.0
        %1783 = vmatprep.subr.mxu0 0.0
        %1784 = vmatpush2.xpose.msra.mxu0 0.0
        %1785 = vmatprep.subr.mxu0 0.0
        %1786 = vmatpush2.xpose.msra.mxu0 0.0
        %1787 = vmatprep.subr.mxu0 0.0
        %1788 = vmatpush2.xpose.msra.mxu0 0.0
        %1789 = vmatprep.subr.mxu0 0.0
        %1790 = vmatpush2.xpose.msra.mxu0 0.0
        %1791 = vmatprep.mubr.f32.mxu0 0.0
        %1792 = vmatmul.mubr.f32.gmra.mxu0 %v1719
        %v1793 = vpop.f32.mrf.mxu0
        %v1794 = vadd.f32 0.0, %v1793
        %v1795 = vpop.f32.mrf.mxu0
        %1796 = vmatprep.mubr.f32.mxu0 0.0
        %1797 = vmatmul.mubr.f32.gmra.mxu0 %v1721
        %v1798 = vpop.f32.mrf.mxu0
        %v1799 = vadd.f32 0.0, %v1798
        %v1800 = vpop.f32.mrf.mxu0
        %1801 = vdwg.mxu0
        %1802 = vrot.lane.b32.xlu0 %v594, 112
        %v1803 = vpop.permute.xlu0 %1802
        %1804 = vrot.lane.b32.xlu0 %v599, 112
        %v1805 = vpop.permute.xlu0 %1804
        %1806 = vrot.lane.b32.xlu0 %v594, 80
        %v1807 = vpop.permute.xlu0 %1806
        %1808 = vrot.lane.b32.xlu0 %v599, 80
        %v1809 = vpop.permute.xlu0 %1808
        %v1810 = vsel %vm709, %v1803, 0
        %v1812 = vsel %vm709, %v1805, 0
        %v1814 = vsel %vm709, %v1807, 0
        %v1816 = vsel %vm709, %v1809, 0
        %1818 = vmatprep.subr.mxu0 0.0
        %1819 = vmatpush1.xpose.msra.mxu0 0.0
        %1820 = vmatprep.subr.mxu0 0.0
        %1821 = vmatpush1.xpose.msra.mxu0 0.0
        %1822 = vmatprep.subr.mxu0 0.0
        %1823 = vmatpush1.xpose.msra.mxu0 0.0
        %1824 = vmatprep.subr.mxu0 0.0
        %1825 = vmatpush1.xpose.msra.mxu0 0.0
        %1826 = vmatprep.subr.mxu0 0.0
        %1827 = vmatpush1.xpose.msra.mxu0 0.0
        %1828 = vmatprep.subr.mxu0 0.0
        %1829 = vmatpush1.xpose.msra.mxu0 0.0
        %1830 = vmatprep.subr.mxu0 0.0
        %1831 = vmatpush1.xpose.msra.mxu0 0.0
        %1832 = vmatprep.subr.mxu0 0.0
        %1833 = vmatpush1.xpose.msra.mxu0 0.0
        %1834 = vmatprep.subr.mxu0 0.0
        %1835 = vmatpush1.xpose.msra.mxu0 0.0
        %1836 = vmatprep.subr.mxu0 0.0
        %1837 = vmatpush1.xpose.msra.mxu0 0.0
        %1838 = vmatprep.subr.mxu0 0.0
        %1839 = vmatpush1.xpose.msra.mxu0 0.0
        %1840 = vmatprep.subr.mxu0 0.0
        %1841 = vmatpush1.xpose.msra.mxu0 0.0
        %1842 = vmatprep.subr.mxu0 0.0
        %1843 = vmatpush1.xpose.msra.mxu0 0.0
        %1844 = vmatprep.subr.mxu0 0.0
        %1845 = vmatpush1.xpose.msra.mxu0 0.0
        %1846 = vmatprep.subr.mxu0 0.0
        %1847 = vmatpush1.xpose.msra.mxu0 %v1816
        %1848 = vmatprep.subr.mxu0 0.0
        %1849 = vmatpush1.xpose.msra.mxu0 %v1814
        %1850 = vmatprep.subr.mxu0 0.0
        %1851 = vmatpush2.xpose.msra.mxu0 0.0
        %1852 = vmatprep.subr.mxu0 0.0
        %1853 = vmatpush2.xpose.msra.mxu0 0.0
        %1854 = vmatprep.subr.mxu0 0.0
        %1855 = vmatpush2.xpose.msra.mxu0 0.0
        %1856 = vmatprep.subr.mxu0 0.0
        %1857 = vmatpush2.xpose.msra.mxu0 0.0
        %1858 = vmatprep.subr.mxu0 0.0
        %1859 = vmatpush2.xpose.msra.mxu0 0.0
        %1860 = vmatprep.subr.mxu0 0.0
        %1861 = vmatpush2.xpose.msra.mxu0 0.0
        %1862 = vmatprep.subr.mxu0 0.0
        %1863 = vmatpush2.xpose.msra.mxu0 0.0
        %1864 = vmatprep.subr.mxu0 0.0
        %1865 = vmatpush2.xpose.msra.mxu0 0.0
        %1866 = vmatprep.subr.mxu0 0.0
        %1867 = vmatpush2.xpose.msra.mxu0 0.0
        %1868 = vmatprep.subr.mxu0 0.0
        %1869 = vmatpush2.xpose.msra.mxu0 0.0
        %1870 = vmatprep.subr.mxu0 0.0
        %1871 = vmatpush2.xpose.msra.mxu0 0.0
        %1872 = vmatprep.subr.mxu0 0.0
        %1873 = vmatpush2.xpose.msra.mxu0 0.0
        %1874 = vmatprep.subr.mxu0 0.0
        %1875 = vmatpush2.xpose.msra.mxu0 0.0
        %1876 = vmatprep.subr.mxu0 0.0
        %1877 = vmatpush2.xpose.msra.mxu0 0.0
        %1878 = vmatprep.subr.mxu0 0.0
        %1879 = vmatpush2.xpose.msra.mxu0 0.0
        %1880 = vmatprep.subr.mxu0 0.0
        %1881 = vmatpush2.xpose.msra.mxu0 0.0
        %1882 = vmatprep.mubr.f32.mxu0 0.0
        %1883 = vmatmul.mubr.f32.gmra.mxu0 %v1810
        %v1884 = vpop.f32.mrf.mxu0
        %v1885 = vadd.f32 0.0, %v1884
        %v1886 = vpop.f32.mrf.mxu0
        %1887 = vmatprep.mubr.f32.mxu0 0.0
        %1888 = vmatmul.mubr.f32.gmra.mxu0 %v1812
        %v1889 = vpop.f32.mrf.mxu0
        %v1890 = vadd.f32 0.0, %v1889
        %v1891 = vpop.f32.mrf.mxu0
        %1892 = vdwg.mxu0
        %v1893 = vsel %vm882, %v1794, -inf
        %1894 = vmax.xlane.f32.xlu0 %v1893
        %v1895 = vpop.xlane.xlu0 %1894
        %v1896 = vsel %vm882, %v1799, -inf
        %1897 = vmax.xlane.f32.xlu0 %v1896
        %v1898 = vpop.xlane.xlu0 %1897
        %v1899 = vsel %vm882, %v1885, -inf
        %1900 = vmax.xlane.f32.xlu0 %v1899
        %v1901 = vpop.xlane.xlu0 %1900
        %v1902 = vsel %vm882, %v1890, -inf
        %1903 = vmax.xlane.f32.xlu0 %v1902
        %v1904 = vpop.xlane.xlu0 %1903
        %v1905 = vsub.f32 %v1794, %v1895
        %v1906 = vsub.f32 %v1799, %v1898
        %v1907 = vsub.f32 %v1885, %v1901
        %v1908 = vsub.f32 %v1890, %v1904
        %v1909 = vmul.f32 %v1905, 1.442695
        %v1910 = vpow.pop %v1909
        %v1911 = vmul.f32 %v1906, 1.442695
        %v1912 = vpow.pop %v1911
        %v1913 = vmul.f32 %v1907, 1.442695
        %v1914 = vpow.pop %v1913
        %v1915 = vmul.f32 %v1908, 1.442695
        %v1916 = vpow.pop %v1915
        %v1917 = vsel %vm882, %v1910, 0.0
        %1918 = vadd.xlane.f32.xlu0 %v1917
        %v1919 = vpop.xlane.xlu0 %1918
        %v1920 = vsel %vm882, %v1912, 0.0
        %1921 = vadd.xlane.f32.xlu0 %v1920
        %v1922 = vpop.xlane.xlu0 %1921
        %v1923 = vsel %vm882, %v1914, 0.0
        %1924 = vadd.xlane.f32.xlu0 %v1923
        %v1925 = vpop.xlane.xlu0 %1924
        %v1926 = vsel %vm882, %v1916, 0.0
        %1927 = vadd.xlane.f32.xlu0 %v1926
        %v1928 = vpop.xlane.xlu0 %1927
        %v1929 = vrcp.pop %v1919
        %v1930 = vrcp.pop %v1922
        %v1931 = vrcp.pop %v1925
        %v1932 = vrcp.pop %v1928
        %v1933 = vmul.f32 %v1919, %v1929
        %v1934 = vmul.f32 %v1922, %v1930
        %v1935 = vmul.f32 %v1925, %v1931
        %v1936 = vmul.f32 %v1928, %v1932
        %v1937 = vsub.f32 2.0, %v1933
        %v1938 = vsub.f32 2.0, %v1934
        %v1939 = vsub.f32 2.0, %v1935
        %v1940 = vsub.f32 2.0, %v1936
        %v1941 = vmul.f32 %v1929, %v1937
        %v1942 = vmul.f32 %v1930, %v1938
        %v1943 = vmul.f32 %v1931, %v1939
        %v1944 = vmul.f32 %v1932, %v1940
        %v1945 = vmul.f32 %v1910, %v1941
        %v1946 = vmul.f32 %v1912, %v1942
        %v1947 = vmul.f32 %v1914, %v1943
        %v1948 = vmul.f32 %v1916, %v1944
        %1949 = vrot.lane.b32.xlu0 %v685, 112
        %v1950 = vpop.permute.xlu0 %1949
        %1951 = vrot.lane.b32.xlu0 %v690, 112
        %v1952 = vpop.permute.xlu0 %1951
        %v1956 = vsel %vm882, %v1945, 0
        %v1959 = vsel %vm882, %v1946, 0
        %1961 = vmatprep.subr.mxu0 0.0
        %1962 = vmatpush1.msra.mxu0 0.0
        %1963 = vmatprep.subr.mxu0 0.0
        %1964 = vmatpush1.msra.mxu0 0.0
        %1965 = vmatprep.subr.mxu0 0.0
        %1966 = vmatpush1.msra.mxu0 0.0
        %1967 = vmatprep.subr.mxu0 0.0
        %1968 = vmatpush1.msra.mxu0 0.0
        %1969 = vmatprep.subr.mxu0 0.0
        %1970 = vmatpush1.msra.mxu0 0.0
        %1971 = vmatprep.subr.mxu0 0.0
        %1972 = vmatpush1.msra.mxu0 0.0
        %1973 = vmatprep.subr.mxu0 0.0
        %1974 = vmatpush1.msra.mxu0 0.0
        %1975 = vmatprep.subr.mxu0 0.0
        %1976 = vmatpush1.msra.mxu0 0.0
        %1977 = vmatprep.subr.mxu0 0.0
        %1978 = vmatpush1.msra.mxu0 0.0
        %1979 = vmatprep.subr.mxu0 0.0
        %1980 = vmatpush1.msra.mxu0 0.0
        %1981 = vmatprep.subr.mxu0 0.0
        %1982 = vmatpush1.msra.mxu0 0.0
        %1983 = vmatprep.subr.mxu0 0.0
        %1984 = vmatpush1.msra.mxu0 0.0
        %1985 = vmatprep.subr.mxu0 0.0
        %1986 = vmatpush1.msra.mxu0 0.0
        %1987 = vmatprep.subr.mxu0 0.0
        %1988 = vmatpush1.msra.mxu0 0.0
        %1989 = vmatprep.subr.mxu0 0.0
        %1990 = vmatpush1.msra.mxu0 %v1952
        %1991 = vmatprep.subr.mxu0 0.0
        %1992 = vmatpush1.msra.mxu0 %v1950
        %1993 = vmatprep.subr.mxu0 0.0
        %1994 = vmatpush2.msra.mxu0 0.0
        %1995 = vmatprep.subr.mxu0 0.0
        %1996 = vmatpush2.msra.mxu0 0.0
        %1997 = vmatprep.subr.mxu0 0.0
        %1998 = vmatpush2.msra.mxu0 0.0
        %1999 = vmatprep.subr.mxu0 0.0
        %2000 = vmatpush2.msra.mxu0 0.0
        %2001 = vmatprep.subr.mxu0 0.0
        %2002 = vmatpush2.msra.mxu0 0.0
        %2003 = vmatprep.subr.mxu0 0.0
        %2004 = vmatpush2.msra.mxu0 0.0
        %2005 = vmatprep.subr.mxu0 0.0
        %2006 = vmatpush2.msra.mxu0 0.0
        %2007 = vmatprep.subr.mxu0 0.0
        %2008 = vmatpush2.msra.mxu0 0.0
        %2009 = vmatprep.subr.mxu0 0.0
        %2010 = vmatpush2.msra.mxu0 0.0
        %2011 = vmatprep.subr.mxu0 0.0
        %2012 = vmatpush2.msra.mxu0 0.0
        %2013 = vmatprep.subr.mxu0 0.0
        %2014 = vmatpush2.msra.mxu0 0.0
        %2015 = vmatprep.subr.mxu0 0.0
        %2016 = vmatpush2.msra.mxu0 0.0
        %2017 = vmatprep.subr.mxu0 0.0
        %2018 = vmatpush2.msra.mxu0 0.0
        %2019 = vmatprep.subr.mxu0 0.0
        %2020 = vmatpush2.msra.mxu0 0.0
        %2021 = vmatprep.subr.mxu0 0.0
        %2022 = vmatpush2.msra.mxu0 0.0
        %2023 = vmatprep.subr.mxu0 0.0
        %2024 = vmatpush2.msra.mxu0 0.0
        %2025 = vmatprep.mubr.f32.mxu0 0.0
        %2026 = vmatmul.mubr.f32.gmra.mxu0 %v1956
        %v2027 = vpop.f32.mrf.mxu0
        %v2028 = vadd.f32 0.0, %v2027
        %v2029 = vpop.f32.mrf.mxu0
        %2030 = vmatprep.mubr.f32.mxu0 0.0
        %2031 = vmatmul.mubr.f32.gmra.mxu0 %v1959
        %v2032 = vpop.f32.mrf.mxu0
        %v2033 = vadd.f32 0.0, %v2032
        %v2034 = vpop.f32.mrf.mxu0
        %2035 = vdwg.mxu0
        %2036 = vrot.lane.b32.xlu0 %v695, 112
        %v2037 = vpop.permute.xlu0 %2036
        %2038 = vrot.lane.b32.xlu0 %v700, 112
        %v2039 = vpop.permute.xlu0 %2038
        %v2043 = vsel %vm882, %v1947, 0
        %v2046 = vsel %vm882, %v1948, 0
        %2048 = vmatprep.subr.mxu0 0.0
        %2049 = vmatpush1.msra.mxu0 0.0
        %2050 = vmatprep.subr.mxu0 0.0
        %2051 = vmatpush1.msra.mxu0 0.0
        %2052 = vmatprep.subr.mxu0 0.0
        %2053 = vmatpush1.msra.mxu0 0.0
        %2054 = vmatprep.subr.mxu0 0.0
        %2055 = vmatpush1.msra.mxu0 0.0
        %2056 = vmatprep.subr.mxu0 0.0
        %2057 = vmatpush1.msra.mxu0 0.0
        %2058 = vmatprep.subr.mxu0 0.0
        %2059 = vmatpush1.msra.mxu0 0.0
        %2060 = vmatprep.subr.mxu0 0.0
        %2061 = vmatpush1.msra.mxu0 0.0
        %2062 = vmatprep.subr.mxu0 0.0
        %2063 = vmatpush1.msra.mxu0 0.0
        %2064 = vmatprep.subr.mxu0 0.0
        %2065 = vmatpush1.msra.mxu0 0.0
        %2066 = vmatprep.subr.mxu0 0.0
        %2067 = vmatpush1.msra.mxu0 0.0
        %2068 = vmatprep.subr.mxu0 0.0
        %2069 = vmatpush1.msra.mxu0 0.0
        %2070 = vmatprep.subr.mxu0 0.0
        %2071 = vmatpush1.msra.mxu0 0.0
        %2072 = vmatprep.subr.mxu0 0.0
        %2073 = vmatpush1.msra.mxu0 0.0
        %2074 = vmatprep.subr.mxu0 0.0
        %2075 = vmatpush1.msra.mxu0 0.0
        %2076 = vmatprep.subr.mxu0 0.0
        %2077 = vmatpush1.msra.mxu0 %v2039
        %2078 = vmatprep.subr.mxu0 0.0
        %2079 = vmatpush1.msra.mxu0 %v2037
        %2080 = vmatprep.subr.mxu0 0.0
        %2081 = vmatpush2.msra.mxu0 0.0
        %2082 = vmatprep.subr.mxu0 0.0
        %2083 = vmatpush2.msra.mxu0 0.0
        %2084 = vmatprep.subr.mxu0 0.0
        %2085 = vmatpush2.msra.mxu0 0.0
        %2086 = vmatprep.subr.mxu0 0.0
        %2087 = vmatpush2.msra.mxu0 0.0
        %2088 = vmatprep.subr.mxu0 0.0
        %2089 = vmatpush2.msra.mxu0 0.0
        %2090 = vmatprep.subr.mxu0 0.0
        %2091 = vmatpush2.msra.mxu0 0.0
        %2092 = vmatprep.subr.mxu0 0.0
        %2093 = vmatpush2.msra.mxu0 0.0
        %2094 = vmatprep.subr.mxu0 0.0
        %2095 = vmatpush2.msra.mxu0 0.0
        %2096 = vmatprep.subr.mxu0 0.0
        %2097 = vmatpush2.msra.mxu0 0.0
        %2098 = vmatprep.subr.mxu0 0.0
        %2099 = vmatpush2.msra.mxu0 0.0
        %2100 = vmatprep.subr.mxu0 0.0
        %2101 = vmatpush2.msra.mxu0 0.0
        %2102 = vmatprep.subr.mxu0 0.0
        %2103 = vmatpush2.msra.mxu0 0.0
        %2104 = vmatprep.subr.mxu0 0.0
        %2105 = vmatpush2.msra.mxu0 0.0
        %2106 = vmatprep.subr.mxu0 0.0
        %2107 = vmatpush2.msra.mxu0 0.0
        %2108 = vmatprep.subr.mxu0 0.0
        %2109 = vmatpush2.msra.mxu0 0.0
        %2110 = vmatprep.subr.mxu0 0.0
        %2111 = vmatpush2.msra.mxu0 0.0
        %2112 = vmatprep.mubr.f32.mxu0 0.0
        %2113 = vmatmul.mubr.f32.gmra.mxu0 %v2043
        %v2114 = vpop.f32.mrf.mxu0
        %v2115 = vadd.f32 0.0, %v2114
        %v2116 = vpop.f32.mrf.mxu0
        %2117 = vmatprep.mubr.f32.mxu0 0.0
        %2118 = vmatmul.mubr.f32.gmra.mxu0 %v2046
        %v2119 = vpop.f32.mrf.mxu0
        %v2120 = vadd.f32 0.0, %v2119
        %v2121 = vpop.f32.mrf.mxu0
        %2122 = vdwg.mxu0
        %v2124 = vsel %vm709, %v2028, 0
        %v2127 = vsel %vm709, %v2033, 0
        %v2130 = vsel %vm709, %v2115, 0
        %v2133 = vsel %vm709, %v2120, 0
        %2135 = vmatprep.subr.mxu0 0.0
        %2136 = vmatpush1.msra.mxu0 0.0
        %2137 = vmatprep.subr.mxu0 0.0
        %2138 = vmatpush1.msra.mxu0 0.0
        %2139 = vmatprep.subr.mxu0 0.0
        %2140 = vmatpush1.msra.mxu0 0.0
        %2141 = vmatprep.subr.mxu0 0.0
        %2142 = vmatpush1.msra.mxu0 0.0
        %2143 = vmatprep.subr.mxu0 0.0
        %2144 = vmatpush1.msra.mxu0 0.0
        %2145 = vmatprep.subr.mxu0 0.0
        %2146 = vmatpush1.msra.mxu0 0.0
        %2147 = vmatprep.subr.mxu0 0.0
        %2148 = vmatpush1.msra.mxu0 0.0
        %2149 = vmatprep.subr.mxu0 0.0
        %2150 = vmatpush1.msra.mxu0 0.0
        %2151 = vmatprep.subr.mxu0 0.0
        %2152 = vmatpush1.msra.mxu0 0.0
        %2153 = vmatprep.subr.mxu0 0.0
        %2154 = vmatpush1.msra.mxu0 0.0
        %2155 = vmatprep.subr.mxu0 0.0
        %2156 = vmatpush1.msra.mxu0 0.0
        %2157 = vmatprep.subr.mxu0 0.0
        %2158 = vmatpush1.msra.mxu0 0.0
        %2159 = vmatprep.subr.mxu0 0.0
        %2160 = vmatpush1.msra.mxu0 0.0
        %2161 = vmatprep.subr.mxu0 0.0
        %2162 = vmatpush1.msra.mxu0 0.0
        %2163 = vmatprep.subr.mxu0 0.0
        %2164 = vmatpush1.msra.mxu0 0.0
        %2165 = vmatprep.subr.mxu0 0.0
        %2166 = vmatpush1.msra.mxu0 %v486
        %2167 = vmatprep.subr.mxu0 0.0
        %2168 = vmatpush2.msra.mxu0 0.0
        %2169 = vmatprep.subr.mxu0 0.0
        %2170 = vmatpush2.msra.mxu0 0.0
        %2171 = vmatprep.subr.mxu0 0.0
        %2172 = vmatpush2.msra.mxu0 0.0
        %2173 = vmatprep.subr.mxu0 0.0
        %2174 = vmatpush2.msra.mxu0 0.0
        %2175 = vmatprep.subr.mxu0 0.0
        %2176 = vmatpush2.msra.mxu0 0.0
        %2177 = vmatprep.subr.mxu0 0.0
        %2178 = vmatpush2.msra.mxu0 0.0
        %2179 = vmatprep.subr.mxu0 0.0
        %2180 = vmatpush2.msra.mxu0 0.0
        %2181 = vmatprep.subr.mxu0 0.0
        %2182 = vmatpush2.msra.mxu0 0.0
        %2183 = vmatprep.subr.mxu0 0.0
        %2184 = vmatpush2.msra.mxu0 0.0
        %2185 = vmatprep.subr.mxu0 0.0
        %2186 = vmatpush2.msra.mxu0 0.0
        %2187 = vmatprep.subr.mxu0 0.0
        %2188 = vmatpush2.msra.mxu0 0.0
        %2189 = vmatprep.subr.mxu0 0.0
        %2190 = vmatpush2.msra.mxu0 0.0
        %2191 = vmatprep.subr.mxu0 0.0
        %2192 = vmatpush2.msra.mxu0 0.0
        %2193 = vmatprep.subr.mxu0 0.0
        %2194 = vmatpush2.msra.mxu0 0.0
        %2195 = vmatprep.subr.mxu0 0.0
        %2196 = vmatpush2.msra.mxu0 0.0
        %2197 = vmatprep.subr.mxu0 0.0
        %2198 = vmatpush2.msra.mxu0 0.0
        %2199 = vmatprep.mubr.f32.mxu0 0.0
        %2200 = vmatmul.mubr.f32.gmra.mxu0 %v2124
        %v2201 = vpop.f32.mrf.mxu0
        %v2202 = vadd.f32 0.0, %v2201
        %v2203 = vpop.f32.mrf.mxu0
        %2204 = vmatprep.mubr.f32.mxu0 0.0
        %2205 = vmatmul.mubr.f32.gmra.mxu0 %v2127
        %v2206 = vpop.f32.mrf.mxu0
        %v2207 = vadd.f32 0.0, %v2206
        %v2208 = vpop.f32.mrf.mxu0
        %2209 = vmatprep.mubr.f32.mxu0 0.0
        %2210 = vmatmul.mubr.f32.gmra.mxu0 %v2130
        %v2211 = vpop.f32.mrf.mxu0
        %v2212 = vadd.f32 0.0, %v2211
        %v2213 = vpop.f32.mrf.mxu0
        %2214 = vmatprep.mubr.f32.mxu0 0.0
        %2215 = vmatmul.mubr.f32.gmra.mxu0 %v2133
        %v2216 = vpop.f32.mrf.mxu0
        %v2217 = vadd.f32 0.0, %v2216
        %v2218 = vpop.f32.mrf.mxu0
        %2219 = vdwg.mxu0
        %v2220 = vadd.f32 %v1693, %v2202
        %v2221 = vadd.f32 %v1698, %v2207
        %v2222 = vadd.f32 %v1703, %v2212
        %v2223 = vadd.f32 %v1708, %v2217
        %2224 = vrot.lane.b32.xlu0 %v584, 104
        %v2225 = vpop.permute.xlu0 %2224
        %2226 = vrot.lane.b32.xlu0 %v589, 104
        %v2227 = vpop.permute.xlu0 %2226
        %2228 = vrot.lane.b32.xlu0 %v584, 72
        %v2229 = vpop.permute.xlu0 %2228
        %2230 = vrot.lane.b32.xlu0 %v589, 72
        %v2231 = vpop.permute.xlu0 %2230
        %v2232 = vsel %vm709, %v2225, 0
        %v2234 = vsel %vm709, %v2227, 0
        %v2236 = vsel %vm709, %v2229, 0
        %v2238 = vsel %vm709, %v2231, 0
        %2240 = vmatprep.subr.mxu0 0.0
        %2241 = vmatpush1.xpose.msra.mxu0 0.0
        %2242 = vmatprep.subr.mxu0 0.0
        %2243 = vmatpush1.xpose.msra.mxu0 0.0
        %2244 = vmatprep.subr.mxu0 0.0
        %2245 = vmatpush1.xpose.msra.mxu0 0.0
        %2246 = vmatprep.subr.mxu0 0.0
        %2247 = vmatpush1.xpose.msra.mxu0 0.0
        %2248 = vmatprep.subr.mxu0 0.0
        %2249 = vmatpush1.xpose.msra.mxu0 0.0
        %2250 = vmatprep.subr.mxu0 0.0
        %2251 = vmatpush1.xpose.msra.mxu0 0.0
        %2252 = vmatprep.subr.mxu0 0.0
        %2253 = vmatpush1.xpose.msra.mxu0 0.0
        %2254 = vmatprep.subr.mxu0 0.0
        %2255 = vmatpush1.xpose.msra.mxu0 0.0
        %2256 = vmatprep.subr.mxu0 0.0
        %2257 = vmatpush1.xpose.msra.mxu0 0.0
        %2258 = vmatprep.subr.mxu0 0.0
        %2259 = vmatpush1.xpose.msra.mxu0 0.0
        %2260 = vmatprep.subr.mxu0 0.0
        %2261 = vmatpush1.xpose.msra.mxu0 0.0
        %2262 = vmatprep.subr.mxu0 0.0
        %2263 = vmatpush1.xpose.msra.mxu0 0.0
        %2264 = vmatprep.subr.mxu0 0.0
        %2265 = vmatpush1.xpose.msra.mxu0 0.0
        %2266 = vmatprep.subr.mxu0 0.0
        %2267 = vmatpush1.xpose.msra.mxu0 0.0
        %2268 = vmatprep.subr.mxu0 0.0
        %2269 = vmatpush1.xpose.msra.mxu0 %v2238
        %2270 = vmatprep.subr.mxu0 0.0
        %2271 = vmatpush1.xpose.msra.mxu0 %v2236
        %2272 = vmatprep.subr.mxu0 0.0
        %2273 = vmatpush2.xpose.msra.mxu0 0.0
        %2274 = vmatprep.subr.mxu0 0.0
        %2275 = vmatpush2.xpose.msra.mxu0 0.0
        %2276 = vmatprep.subr.mxu0 0.0
        %2277 = vmatpush2.xpose.msra.mxu0 0.0
        %2278 = vmatprep.subr.mxu0 0.0
        %2279 = vmatpush2.xpose.msra.mxu0 0.0
        %2280 = vmatprep.subr.mxu0 0.0
        %2281 = vmatpush2.xpose.msra.mxu0 0.0
        %2282 = vmatprep.subr.mxu0 0.0
        %2283 = vmatpush2.xpose.msra.mxu0 0.0
        %2284 = vmatprep.subr.mxu0 0.0
        %2285 = vmatpush2.xpose.msra.mxu0 0.0
        %2286 = vmatprep.subr.mxu0 0.0
        %2287 = vmatpush2.xpose.msra.mxu0 0.0
        %2288 = vmatprep.subr.mxu0 0.0
        %2289 = vmatpush2.xpose.msra.mxu0 0.0
        %2290 = vmatprep.subr.mxu0 0.0
        %2291 = vmatpush2.xpose.msra.mxu0 0.0
        %2292 = vmatprep.subr.mxu0 0.0
        %2293 = vmatpush2.xpose.msra.mxu0 0.0
        %2294 = vmatprep.subr.mxu0 0.0
        %2295 = vmatpush2.xpose.msra.mxu0 0.0
        %2296 = vmatprep.subr.mxu0 0.0
        %2297 = vmatpush2.xpose.msra.mxu0 0.0
        %2298 = vmatprep.subr.mxu0 0.0
        %2299 = vmatpush2.xpose.msra.mxu0 0.0
        %2300 = vmatprep.subr.mxu0 0.0
        %2301 = vmatpush2.xpose.msra.mxu0 0.0
        %2302 = vmatprep.subr.mxu0 0.0
        %2303 = vmatpush2.xpose.msra.mxu0 0.0
        %2304 = vmatprep.mubr.f32.mxu0 0.0
        %2305 = vmatmul.mubr.f32.gmra.mxu0 %v2232
        %v2306 = vpop.f32.mrf.mxu0
        %v2307 = vadd.f32 0.0, %v2306
        %v2308 = vpop.f32.mrf.mxu0
        %2309 = vmatprep.mubr.f32.mxu0 0.0
        %2310 = vmatmul.mubr.f32.gmra.mxu0 %v2234
        %v2311 = vpop.f32.mrf.mxu0
        %v2312 = vadd.f32 0.0, %v2311
        %v2313 = vpop.f32.mrf.mxu0
        %2314 = vdwg.mxu0
        %2315 = vrot.lane.b32.xlu0 %v594, 104
        %v2316 = vpop.permute.xlu0 %2315
        %2317 = vrot.lane.b32.xlu0 %v599, 104
        %v2318 = vpop.permute.xlu0 %2317
        %2319 = vrot.lane.b32.xlu0 %v594, 72
        %v2320 = vpop.permute.xlu0 %2319
        %2321 = vrot.lane.b32.xlu0 %v599, 72
        %v2322 = vpop.permute.xlu0 %2321
        %v2323 = vsel %vm709, %v2316, 0
        %v2325 = vsel %vm709, %v2318, 0
        %v2327 = vsel %vm709, %v2320, 0
        %v2329 = vsel %vm709, %v2322, 0
        %2331 = vmatprep.subr.mxu0 0.0
        %2332 = vmatpush1.xpose.msra.mxu0 0.0
        %2333 = vmatprep.subr.mxu0 0.0
        %2334 = vmatpush1.xpose.msra.mxu0 0.0
        %2335 = vmatprep.subr.mxu0 0.0
        %2336 = vmatpush1.xpose.msra.mxu0 0.0
        %2337 = vmatprep.subr.mxu0 0.0
        %2338 = vmatpush1.xpose.msra.mxu0 0.0
        %2339 = vmatprep.subr.mxu0 0.0
        %2340 = vmatpush1.xpose.msra.mxu0 0.0
        %2341 = vmatprep.subr.mxu0 0.0
        %2342 = vmatpush1.xpose.msra.mxu0 0.0
        %2343 = vmatprep.subr.mxu0 0.0
        %2344 = vmatpush1.xpose.msra.mxu0 0.0
        %2345 = vmatprep.subr.mxu0 0.0
        %2346 = vmatpush1.xpose.msra.mxu0 0.0
        %2347 = vmatprep.subr.mxu0 0.0
        %2348 = vmatpush1.xpose.msra.mxu0 0.0
        %2349 = vmatprep.subr.mxu0 0.0
        %2350 = vmatpush1.xpose.msra.mxu0 0.0
        %2351 = vmatprep.subr.mxu0 0.0
        %2352 = vmatpush1.xpose.msra.mxu0 0.0
        %2353 = vmatprep.subr.mxu0 0.0
        %2354 = vmatpush1.xpose.msra.mxu0 0.0
        %2355 = vmatprep.subr.mxu0 0.0
        %2356 = vmatpush1.xpose.msra.mxu0 0.0
        %2357 = vmatprep.subr.mxu0 0.0
        %2358 = vmatpush1.xpose.msra.mxu0 0.0
        %2359 = vmatprep.subr.mxu0 0.0
        %2360 = vmatpush1.xpose.msra.mxu0 %v2329
        %2361 = vmatprep.subr.mxu0 0.0
        %2362 = vmatpush1.xpose.msra.mxu0 %v2327
        %2363 = vmatprep.subr.mxu0 0.0
        %2364 = vmatpush2.xpose.msra.mxu0 0.0
        %2365 = vmatprep.subr.mxu0 0.0
        %2366 = vmatpush2.xpose.msra.mxu0 0.0
        %2367 = vmatprep.subr.mxu0 0.0
        %2368 = vmatpush2.xpose.msra.mxu0 0.0
        %2369 = vmatprep.subr.mxu0 0.0
        %2370 = vmatpush2.xpose.msra.mxu0 0.0
        %2371 = vmatprep.subr.mxu0 0.0
        %2372 = vmatpush2.xpose.msra.mxu0 0.0
        %2373 = vmatprep.subr.mxu0 0.0
        %2374 = vmatpush2.xpose.msra.mxu0 0.0
        %2375 = vmatprep.subr.mxu0 0.0
        %2376 = vmatpush2.xpose.msra.mxu0 0.0
        %2377 = vmatprep.subr.mxu0 0.0
        %2378 = vmatpush2.xpose.msra.mxu0 0.0
        %2379 = vmatprep.subr.mxu0 0.0
        %2380 = vmatpush2.xpose.msra.mxu0 0.0
        %2381 = vmatprep.subr.mxu0 0.0
        %2382 = vmatpush2.xpose.msra.mxu0 0.0
        %2383 = vmatprep.subr.mxu0 0.0
        %2384 = vmatpush2.xpose.msra.mxu0 0.0
        %2385 = vmatprep.subr.mxu0 0.0
        %2386 = vmatpush2.xpose.msra.mxu0 0.0
        %2387 = vmatprep.subr.mxu0 0.0
        %2388 = vmatpush2.xpose.msra.mxu0 0.0
        %2389 = vmatprep.subr.mxu0 0.0
        %2390 = vmatpush2.xpose.msra.mxu0 0.0
        %2391 = vmatprep.subr.mxu0 0.0
        %2392 = vmatpush2.xpose.msra.mxu0 0.0
        %2393 = vmatprep.subr.mxu0 0.0
        %2394 = vmatpush2.xpose.msra.mxu0 0.0
        %2395 = vmatprep.mubr.f32.mxu0 0.0
        %2396 = vmatmul.mubr.f32.gmra.mxu0 %v2323
        %v2397 = vpop.f32.mrf.mxu0
        %v2398 = vadd.f32 0.0, %v2397
        %v2399 = vpop.f32.mrf.mxu0
        %2400 = vmatprep.mubr.f32.mxu0 0.0
        %2401 = vmatmul.mubr.f32.gmra.mxu0 %v2325
        %v2402 = vpop.f32.mrf.mxu0
        %v2403 = vadd.f32 0.0, %v2402
        %v2404 = vpop.f32.mrf.mxu0
        %2405 = vdwg.mxu0
        %v2406 = vsel %vm882, %v2307, -inf
        %2407 = vmax.xlane.f32.xlu0 %v2406
        %v2408 = vpop.xlane.xlu0 %2407
        %v2409 = vsel %vm882, %v2312, -inf
        %2410 = vmax.xlane.f32.xlu0 %v2409
        %v2411 = vpop.xlane.xlu0 %2410
        %v2412 = vsel %vm882, %v2398, -inf
        %2413 = vmax.xlane.f32.xlu0 %v2412
        %v2414 = vpop.xlane.xlu0 %2413
        %v2415 = vsel %vm882, %v2403, -inf
        %2416 = vmax.xlane.f32.xlu0 %v2415
        %v2417 = vpop.xlane.xlu0 %2416
        %v2418 = vsub.f32 %v2307, %v2408
        %v2419 = vsub.f32 %v2312, %v2411
        %v2420 = vsub.f32 %v2398, %v2414
        %v2421 = vsub.f32 %v2403, %v2417
        %v2422 = vmul.f32 %v2418, 1.442695
        %v2423 = vpow.pop %v2422
        %v2424 = vmul.f32 %v2419, 1.442695
        %v2425 = vpow.pop %v2424
        %v2426 = vmul.f32 %v2420, 1.442695
        %v2427 = vpow.pop %v2426
        %v2428 = vmul.f32 %v2421, 1.442695
        %v2429 = vpow.pop %v2428
        %v2430 = vsel %vm882, %v2423, 0.0
        %2431 = vadd.xlane.f32.xlu0 %v2430
        %v2432 = vpop.xlane.xlu0 %2431
        %v2433 = vsel %vm882, %v2425, 0.0
        %2434 = vadd.xlane.f32.xlu0 %v2433
        %v2435 = vpop.xlane.xlu0 %2434
        %v2436 = vsel %vm882, %v2427, 0.0
        %2437 = vadd.xlane.f32.xlu0 %v2436
        %v2438 = vpop.xlane.xlu0 %2437
        %v2439 = vsel %vm882, %v2429, 0.0
        %2440 = vadd.xlane.f32.xlu0 %v2439
        %v2441 = vpop.xlane.xlu0 %2440
        %v2442 = vrcp.pop %v2432
        %v2443 = vrcp.pop %v2435
        %v2444 = vrcp.pop %v2438
        %v2445 = vrcp.pop %v2441
        %v2446 = vmul.f32 %v2432, %v2442
        %v2447 = vmul.f32 %v2435, %v2443
        %v2448 = vmul.f32 %v2438, %v2444
        %v2449 = vmul.f32 %v2441, %v2445
        %v2450 = vsub.f32 2.0, %v2446
        %v2451 = vsub.f32 2.0, %v2447
        %v2452 = vsub.f32 2.0, %v2448
        %v2453 = vsub.f32 2.0, %v2449
        %v2454 = vmul.f32 %v2442, %v2450
        %v2455 = vmul.f32 %v2443, %v2451
        %v2456 = vmul.f32 %v2444, %v2452
        %v2457 = vmul.f32 %v2445, %v2453
        %v2458 = vmul.f32 %v2423, %v2454
        %v2459 = vmul.f32 %v2425, %v2455
        %v2460 = vmul.f32 %v2427, %v2456
        %v2461 = vmul.f32 %v2429, %v2457
        %2462 = vrot.lane.b32.xlu0 %v685, 104
        %v2463 = vpop.permute.xlu0 %2462
        %2464 = vrot.lane.b32.xlu0 %v690, 104
        %v2465 = vpop.permute.xlu0 %2464
        %v2469 = vsel %vm882, %v2458, 0
        %v2472 = vsel %vm882, %v2459, 0
        %2474 = vmatprep.subr.mxu0 0.0
        %2475 = vmatpush1.msra.mxu0 0.0
        %2476 = vmatprep.subr.mxu0 0.0
        %2477 = vmatpush1.msra.mxu0 0.0
        %2478 = vmatprep.subr.mxu0 0.0
        %2479 = vmatpush1.msra.mxu0 0.0
        %2480 = vmatprep.subr.mxu0 0.0
        %2481 = vmatpush1.msra.mxu0 0.0
        %2482 = vmatprep.subr.mxu0 0.0
        %2483 = vmatpush1.msra.mxu0 0.0
        %2484 = vmatprep.subr.mxu0 0.0
        %2485 = vmatpush1.msra.mxu0 0.0
        %2486 = vmatprep.subr.mxu0 0.0
        %2487 = vmatpush1.msra.mxu0 0.0
        %2488 = vmatprep.subr.mxu0 0.0
        %2489 = vmatpush1.msra.mxu0 0.0
        %2490 = vmatprep.subr.mxu0 0.0
        %2491 = vmatpush1.msra.mxu0 0.0
        %2492 = vmatprep.subr.mxu0 0.0
        %2493 = vmatpush1.msra.mxu0 0.0
        %2494 = vmatprep.subr.mxu0 0.0
        %2495 = vmatpush1.msra.mxu0 0.0
        %2496 = vmatprep.subr.mxu0 0.0
        %2497 = vmatpush1.msra.mxu0 0.0
        %2498 = vmatprep.subr.mxu0 0.0
        %2499 = vmatpush1.msra.mxu0 0.0
        %2500 = vmatprep.subr.mxu0 0.0
        %2501 = vmatpush1.msra.mxu0 0.0
        %2502 = vmatprep.subr.mxu0 0.0
        %2503 = vmatpush1.msra.mxu0 %v2465
        %2504 = vmatprep.subr.mxu0 0.0
        %2505 = vmatpush1.msra.mxu0 %v2463
        %2506 = vmatprep.subr.mxu0 0.0
        %2507 = vmatpush2.msra.mxu0 0.0
        %2508 = vmatprep.subr.mxu0 0.0
        %2509 = vmatpush2.msra.mxu0 0.0
        %2510 = vmatprep.subr.mxu0 0.0
        %2511 = vmatpush2.msra.mxu0 0.0
        %2512 = vmatprep.subr.mxu0 0.0
        %2513 = vmatpush2.msra.mxu0 0.0
        %2514 = vmatprep.subr.mxu0 0.0
        %2515 = vmatpush2.msra.mxu0 0.0
        %2516 = vmatprep.subr.mxu0 0.0
        %2517 = vmatpush2.msra.mxu0 0.0
        %2518 = vmatprep.subr.mxu0 0.0
        %2519 = vmatpush2.msra.mxu0 0.0
        %2520 = vmatprep.subr.mxu0 0.0
        %2521 = vmatpush2.msra.mxu0 0.0
        %2522 = vmatprep.subr.mxu0 0.0
        %2523 = vmatpush2.msra.mxu0 0.0
        %2524 = vmatprep.subr.mxu0 0.0
        %2525 = vmatpush2.msra.mxu0 0.0
        %2526 = vmatprep.subr.mxu0 0.0
        %2527 = vmatpush2.msra.mxu0 0.0
        %2528 = vmatprep.subr.mxu0 0.0
        %2529 = vmatpush2.msra.mxu0 0.0
        %2530 = vmatprep.subr.mxu0 0.0
        %2531 = vmatpush2.msra.mxu0 0.0
        %2532 = vmatprep.subr.mxu0 0.0
        %2533 = vmatpush2.msra.mxu0 0.0
        %2534 = vmatprep.subr.mxu0 0.0
        %2535 = vmatpush2.msra.mxu0 0.0
        %2536 = vmatprep.subr.mxu0 0.0
        %2537 = vmatpush2.msra.mxu0 0.0
        %2538 = vmatprep.mubr.f32.mxu0 0.0
        %2539 = vmatmul.mubr.f32.gmra.mxu0 %v2469
        %v2540 = vpop.f32.mrf.mxu0
        %v2541 = vadd.f32 0.0, %v2540
        %v2542 = vpop.f32.mrf.mxu0
        %2543 = vmatprep.mubr.f32.mxu0 0.0
        %2544 = vmatmul.mubr.f32.gmra.mxu0 %v2472
        %v2545 = vpop.f32.mrf.mxu0
        %v2546 = vadd.f32 0.0, %v2545
        %v2547 = vpop.f32.mrf.mxu0
        %2548 = vdwg.mxu0
        %2549 = vrot.lane.b32.xlu0 %v695, 104
        %v2550 = vpop.permute.xlu0 %2549
        %2551 = vrot.lane.b32.xlu0 %v700, 104
        %v2552 = vpop.permute.xlu0 %2551
        %v2556 = vsel %vm882, %v2460, 0
        %v2559 = vsel %vm882, %v2461, 0
        %2561 = vmatprep.subr.mxu0 0.0
        %2562 = vmatpush1.msra.mxu0 0.0
        %2563 = vmatprep.subr.mxu0 0.0
        %2564 = vmatpush1.msra.mxu0 0.0
        %2565 = vmatprep.subr.mxu0 0.0
        %2566 = vmatpush1.msra.mxu0 0.0
        %2567 = vmatprep.subr.mxu0 0.0
        %2568 = vmatpush1.msra.mxu0 0.0
        %2569 = vmatprep.subr.mxu0 0.0
        %2570 = vmatpush1.msra.mxu0 0.0
        %2571 = vmatprep.subr.mxu0 0.0
        %2572 = vmatpush1.msra.mxu0 0.0
        %2573 = vmatprep.subr.mxu0 0.0
        %2574 = vmatpush1.msra.mxu0 0.0
        %2575 = vmatprep.subr.mxu0 0.0
        %2576 = vmatpush1.msra.mxu0 0.0
        %2577 = vmatprep.subr.mxu0 0.0
        %2578 = vmatpush1.msra.mxu0 0.0
        %2579 = vmatprep.subr.mxu0 0.0
        %2580 = vmatpush1.msra.mxu0 0.0
        %2581 = vmatprep.subr.mxu0 0.0
        %2582 = vmatpush1.msra.mxu0 0.0
        %2583 = vmatprep.subr.mxu0 0.0
        %2584 = vmatpush1.msra.mxu0 0.0
        %2585 = vmatprep.subr.mxu0 0.0
        %2586 = vmatpush1.msra.mxu0 0.0
        %2587 = vmatprep.subr.mxu0 0.0
        %2588 = vmatpush1.msra.mxu0 0.0
        %2589 = vmatprep.subr.mxu0 0.0
        %2590 = vmatpush1.msra.mxu0 %v2552
        %2591 = vmatprep.subr.mxu0 0.0
        %2592 = vmatpush1.msra.mxu0 %v2550
        %2593 = vmatprep.subr.mxu0 0.0
        %2594 = vmatpush2.msra.mxu0 0.0
        %2595 = vmatprep.subr.mxu0 0.0
        %2596 = vmatpush2.msra.mxu0 0.0
        %2597 = vmatprep.subr.mxu0 0.0
        %2598 = vmatpush2.msra.mxu0 0.0
        %2599 = vmatprep.subr.mxu0 0.0
        %2600 = vmatpush2.msra.mxu0 0.0
        %2601 = vmatprep.subr.mxu0 0.0
        %2602 = vmatpush2.msra.mxu0 0.0
        %2603 = vmatprep.subr.mxu0 0.0
        %2604 = vmatpush2.msra.mxu0 0.0
        %2605 = vmatprep.subr.mxu0 0.0
        %2606 = vmatpush2.msra.mxu0 0.0
        %2607 = vmatprep.subr.mxu0 0.0
        %2608 = vmatpush2.msra.mxu0 0.0
        %2609 = vmatprep.subr.mxu0 0.0
        %2610 = vmatpush2.msra.mxu0 0.0
        %2611 = vmatprep.subr.mxu0 0.0
        %2612 = vmatpush2.msra.mxu0 0.0
        %2613 = vmatprep.subr.mxu0 0.0
        %2614 = vmatpush2.msra.mxu0 0.0
        %2615 = vmatprep.subr.mxu0 0.0
        %2616 = vmatpush2.msra.mxu0 0.0
        %2617 = vmatprep.subr.mxu0 0.0
        %2618 = vmatpush2.msra.mxu0 0.0
        %2619 = vmatprep.subr.mxu0 0.0
        %2620 = vmatpush2.msra.mxu0 0.0
        %2621 = vmatprep.subr.mxu0 0.0
        %2622 = vmatpush2.msra.mxu0 0.0
        %2623 = vmatprep.subr.mxu0 0.0
        %2624 = vmatpush2.msra.mxu0 0.0
        %2625 = vmatprep.mubr.f32.mxu0 0.0
        %2626 = vmatmul.mubr.f32.gmra.mxu0 %v2556
        %v2627 = vpop.f32.mrf.mxu0
        %v2628 = vadd.f32 0.0, %v2627
        %v2629 = vpop.f32.mrf.mxu0
        %2630 = vmatprep.mubr.f32.mxu0 0.0
        %2631 = vmatmul.mubr.f32.gmra.mxu0 %v2559
        %v2632 = vpop.f32.mrf.mxu0
        %v2633 = vadd.f32 0.0, %v2632
        %v2634 = vpop.f32.mrf.mxu0
        %2635 = vdwg.mxu0
        %v2637 = vsel %vm709, %v2541, 0
        %v2640 = vsel %vm709, %v2546, 0
        %v2643 = vsel %vm709, %v2628, 0
        %v2646 = vsel %vm709, %v2633, 0
        %2648 = vmatprep.subr.mxu0 0.0
        %2649 = vmatpush1.msra.mxu0 0.0
        %2650 = vmatprep.subr.mxu0 0.0
        %2651 = vmatpush1.msra.mxu0 0.0
        %2652 = vmatprep.subr.mxu0 0.0
        %2653 = vmatpush1.msra.mxu0 0.0
        %2654 = vmatprep.subr.mxu0 0.0
        %2655 = vmatpush1.msra.mxu0 0.0
        %2656 = vmatprep.subr.mxu0 0.0
        %2657 = vmatpush1.msra.mxu0 0.0
        %2658 = vmatprep.subr.mxu0 0.0
        %2659 = vmatpush1.msra.mxu0 0.0
        %2660 = vmatprep.subr.mxu0 0.0
        %2661 = vmatpush1.msra.mxu0 0.0
        %2662 = vmatprep.subr.mxu0 0.0
        %2663 = vmatpush1.msra.mxu0 0.0
        %2664 = vmatprep.subr.mxu0 0.0
        %2665 = vmatpush1.msra.mxu0 0.0
        %2666 = vmatprep.subr.mxu0 0.0
        %2667 = vmatpush1.msra.mxu0 0.0
        %2668 = vmatprep.subr.mxu0 0.0
        %2669 = vmatpush1.msra.mxu0 0.0
        %2670 = vmatprep.subr.mxu0 0.0
        %2671 = vmatpush1.msra.mxu0 0.0
        %2672 = vmatprep.subr.mxu0 0.0
        %2673 = vmatpush1.msra.mxu0 0.0
        %2674 = vmatprep.subr.mxu0 0.0
        %2675 = vmatpush1.msra.mxu0 0.0
        %2676 = vmatprep.subr.mxu0 0.0
        %2677 = vmatpush1.msra.mxu0 0.0
        %2678 = vmatprep.subr.mxu0 0.0
        %2679 = vmatpush1.msra.mxu0 %v487
        %2680 = vmatprep.subr.mxu0 0.0
        %2681 = vmatpush2.msra.mxu0 0.0
        %2682 = vmatprep.subr.mxu0 0.0
        %2683 = vmatpush2.msra.mxu0 0.0
        %2684 = vmatprep.subr.mxu0 0.0
        %2685 = vmatpush2.msra.mxu0 0.0
        %2686 = vmatprep.subr.mxu0 0.0
        %2687 = vmatpush2.msra.mxu0 0.0
        %2688 = vmatprep.subr.mxu0 0.0
        %2689 = vmatpush2.msra.mxu0 0.0
        %2690 = vmatprep.subr.mxu0 0.0
        %2691 = vmatpush2.msra.mxu0 0.0
        %2692 = vmatprep.subr.mxu0 0.0
        %2693 = vmatpush2.msra.mxu0 0.0
        %2694 = vmatprep.subr.mxu0 0.0
        %2695 = vmatpush2.msra.mxu0 0.0
        %2696 = vmatprep.subr.mxu0 0.0
        %2697 = vmatpush2.msra.mxu0 0.0
        %2698 = vmatprep.subr.mxu0 0.0
        %2699 = vmatpush2.msra.mxu0 0.0
        %2700 = vmatprep.subr.mxu0 0.0
        %2701 = vmatpush2.msra.mxu0 0.0
        %2702 = vmatprep.subr.mxu0 0.0
        %2703 = vmatpush2.msra.mxu0 0.0
        %2704 = vmatprep.subr.mxu0 0.0
        %2705 = vmatpush2.msra.mxu0 0.0
        %2706 = vmatprep.subr.mxu0 0.0
        %2707 = vmatpush2.msra.mxu0 0.0
        %2708 = vmatprep.subr.mxu0 0.0
        %2709 = vmatpush2.msra.mxu0 0.0
        %2710 = vmatprep.subr.mxu0 0.0
        %2711 = vmatpush2.msra.mxu0 0.0
        %2712 = vmatprep.mubr.f32.mxu0 0.0
        %2713 = vmatmul.mubr.f32.gmra.mxu0 %v2637
        %v2714 = vpop.f32.mrf.mxu0
        %v2715 = vadd.f32 0.0, %v2714
        %v2716 = vpop.f32.mrf.mxu0
        %2717 = vmatprep.mubr.f32.mxu0 0.0
        %2718 = vmatmul.mubr.f32.gmra.mxu0 %v2640
        %v2719 = vpop.f32.mrf.mxu0
        %v2720 = vadd.f32 0.0, %v2719
        %v2721 = vpop.f32.mrf.mxu0
        %2722 = vmatprep.mubr.f32.mxu0 0.0
        %2723 = vmatmul.mubr.f32.gmra.mxu0 %v2643
        %v2724 = vpop.f32.mrf.mxu0
        %v2725 = vadd.f32 0.0, %v2724
        %v2726 = vpop.f32.mrf.mxu0
        %2727 = vmatprep.mubr.f32.mxu0 0.0
        %2728 = vmatmul.mubr.f32.gmra.mxu0 %v2646
        %v2729 = vpop.f32.mrf.mxu0
        %v2730 = vadd.f32 0.0, %v2729
        %v2731 = vpop.f32.mrf.mxu0
        %2732 = vdwg.mxu0
        %v2733 = vadd.f32 %v2220, %v2715
        %v2734 = vadd.f32 %v2221, %v2720
        %v2735 = vadd.f32 %v2222, %v2725
        %v2736 = vadd.f32 %v2223, %v2730
        %v2737 = vlaneseq
        %v2738 = vshrl.u32 %v2737, 7
        %v2739 = vsub.s32 1, %v2738
        %v2740 = vrot.slane %v488, %v2739
        %v2741 = vadd.f32 %v2733, %v2740
        %v2742 = vadd.f32 %v2734, %v2740
        %v2743 = vadd.f32 %v2735, %v2740
        %v2744 = vadd.f32 %v2736, %v2740
        %v2745 = vadd.f32 %v476, %v2741
        %v2746 = vadd.f32 %v477, %v2742
        %v2747 = vadd.f32 %v478, %v2743
        %v2748 = vadd.f32 %v479, %v2744
        %v2749 = vsel %vm504, %v2745, 0.0
        %2750 = vadd.xlane.f32.xlu0 %v2749
        %v2751 = vpop.xlane.xlu0 %2750
        %v2752 = vsel %vm504, %v2746, 0.0
        %2753 = vadd.xlane.f32.xlu0 %v2752
        %v2754 = vpop.xlane.xlu0 %2753
        %v2755 = vsel %vm504, %v2747, 0.0
        %2756 = vadd.xlane.f32.xlu0 %v2755
        %v2757 = vpop.xlane.xlu0 %2756
        %v2758 = vsel %vm504, %v2748, 0.0
        %2759 = vadd.xlane.f32.xlu0 %v2758
        %v2760 = vpop.xlane.xlu0 %2759
        %v2761 = vrcp.pop 32.0
        %v2762 = vmul.f32 %v2751, %v2761
        %v2763 = vmul.f32 %v2754, %v2761
        %v2764 = vmul.f32 %v2757, %v2761
        %v2765 = vmul.f32 %v2760, %v2761
        %v2766 = vsub.f32 %v2745, %v2762
        %v2767 = vsub.f32 %v2746, %v2763
        %v2768 = vsub.f32 %v2747, %v2764
        %v2769 = vsub.f32 %v2748, %v2765
        %v2770 = vmul.f32 %v2766, %v2766
        %v2771 = vmul.f32 %v2767, %v2767
        %v2772 = vmul.f32 %v2768, %v2768
        %v2773 = vmul.f32 %v2769, %v2769
        %v2774 = vsel %vm504, %v2770, 0.0
        %2775 = vadd.xlane.f32.xlu0 %v2774
        %v2776 = vpop.xlane.xlu0 %2775
        %v2777 = vsel %vm504, %v2771, 0.0
        %2778 = vadd.xlane.f32.xlu0 %v2777
        %v2779 = vpop.xlane.xlu0 %2778
        %v2780 = vsel %vm504, %v2772, 0.0
        %2781 = vadd.xlane.f32.xlu0 %v2780
        %v2782 = vpop.xlane.xlu0 %2781
        %v2783 = vsel %vm504, %v2773, 0.0
        %2784 = vadd.xlane.f32.xlu0 %v2783
        %v2785 = vpop.xlane.xlu0 %2784
        %v2786 = vmul.f32 %v2776, %v2761
        %v2787 = vmul.f32 %v2779, %v2761
        %v2788 = vmul.f32 %v2782, %v2761
        %v2789 = vmul.f32 %v2785, %v2761
        %v2790 = vadd.f32 %v2786, 1e-05
        %v2791 = vadd.f32 %v2787, 1e-05
        %v2792 = vadd.f32 %v2788, 1e-05
        %v2793 = vadd.f32 %v2789, 1e-05
        %v2794 = vrsqrt.pop %v2790
        %v2795 = vrsqrt.pop %v2791
        %v2796 = vrsqrt.pop %v2792
        %v2797 = vrsqrt.pop %v2793
        %v2798 = vmul.f32 %v2766, %v2794
        %v2799 = vmul.f32 %v2767, %v2795
        %v2800 = vmul.f32 %v2768, %v2796
        %v2801 = vmul.f32 %v2769, %v2797
        %v2802 = vlaneseq
        %v2803 = vshrl.u32 %v2802, 7
        %v2804 = vsub.s32 3, %v2803
        %v2805 = vrot.slane %v488, %v2804
        %v2806 = vmul.f32 %v2798, %v2805
        %v2807 = vmul.f32 %v2799, %v2805
        %v2808 = vmul.f32 %v2800, %v2805
        %v2809 = vmul.f32 %v2801, %v2805
        %v2810 = vlaneseq
        %v2811 = vshrl.u32 %v2810, 7
        %v2812 = vsub.s32 4, %v2811
        %v2813 = vrot.slane %v488, %v2812
        %v2814 = vadd.f32 %v2806, %v2813
        %v2815 = vadd.f32 %v2807, %v2813
        %v2816 = vadd.f32 %v2808, %v2813
        %v2817 = vadd.f32 %v2809, %v2813
        %v2818 = vld [vmem:[%s379] sm:$0xff]
        %v2819 = vld [vmem:[%s379 + $0x8] sm:$0xff]
        %v2820 = vld [vmem:[%s379 + $0x10] sm:$0xff]
        %v2821 = vld [vmem:[%s379 + $0x18] sm:$0xff]
        %v2822 = vld [vmem:[%s449] sm:$0x1]
        %v2823 = vld [vmem:[%s454] sm:$0xff]
        %v2824 = vld [vmem:[%s454 + $0x8] sm:$0xff]
        %v2825 = vld [vmem:[%s454 + $0x10] sm:$0xff]
        %v2826 = vld [vmem:[%s454 + $0x18] sm:$0xff]
        %v2827 = vld [vmem:[%s454 + $0x20] sm:$0xff]
        %v2828 = vld [vmem:[%s454 + $0x28] sm:$0xff]
        %v2829 = vld [vmem:[%s454 + $0x30] sm:$0xff]
        %v2830 = vld [vmem:[%s454 + $0x38] sm:$0xff]
        %v2832 = vlaneseq
        %v2833 = vshrl.u32 %v2832, 7
        %v2834 = vsub.s32 0, %v2833
        %v2835 = vrot.slane %v2822, %v2834
        %v2838 = vsel %vm504, %v2814, 0
        %v2841 = vsel %vm504, %v2815, 0
        %v2844 = vsel %vm504, %v2816, 0
        %v2847 = vsel %vm504, %v2817, 0
        %2849 = vmatprep.subr.mxu0 0.0
        %2850 = vmatpush1.msra.mxu0 0.0
        %2851 = vmatprep.subr.mxu0 0.0
        %2852 = vmatpush1.msra.mxu0 0.0
        %2853 = vmatprep.subr.mxu0 0.0
        %2854 = vmatpush1.msra.mxu0 0.0
        %2855 = vmatprep.subr.mxu0 0.0
        %2856 = vmatpush1.msra.mxu0 0.0
        %2857 = vmatprep.subr.mxu0 0.0
        %2858 = vmatpush1.msra.mxu0 0.0
        %2859 = vmatprep.subr.mxu0 0.0
        %2860 = vmatpush1.msra.mxu0 0.0
        %2861 = vmatprep.subr.mxu0 0.0
        %2862 = vmatpush1.msra.mxu0 0.0
        %2863 = vmatprep.subr.mxu0 0.0
        %2864 = vmatpush1.msra.mxu0 0.0
        %2865 = vmatprep.subr.mxu0 0.0
        %2866 = vmatpush1.msra.mxu0 0.0
        %2867 = vmatprep.subr.mxu0 0.0
        %2868 = vmatpush1.msra.mxu0 0.0
        %2869 = vmatprep.subr.mxu0 0.0
        %2870 = vmatpush1.msra.mxu0 0.0
        %2871 = vmatprep.subr.mxu0 0.0
        %2872 = vmatpush1.msra.mxu0 0.0
        %2873 = vmatprep.subr.mxu0 0.0
        %2874 = vmatpush1.msra.mxu0 %v2821
        %2875 = vmatprep.subr.mxu0 0.0
        %2876 = vmatpush1.msra.mxu0 %v2820
        %2877 = vmatprep.subr.mxu0 0.0
        %2878 = vmatpush1.msra.mxu0 %v2819
        %2879 = vmatprep.subr.mxu0 0.0
        %2880 = vmatpush1.msra.mxu0 %v2818
        %2881 = vmatprep.subr.mxu0 0.0
        %2882 = vmatpush2.msra.mxu0 0.0
        %2883 = vmatprep.subr.mxu0 0.0
        %2884 = vmatpush2.msra.mxu0 0.0
        %2885 = vmatprep.subr.mxu0 0.0
        %2886 = vmatpush2.msra.mxu0 0.0
        %2887 = vmatprep.subr.mxu0 0.0
        %2888 = vmatpush2.msra.mxu0 0.0
        %2889 = vmatprep.subr.mxu0 0.0
        %2890 = vmatpush2.msra.mxu0 0.0
        %2891 = vmatprep.subr.mxu0 0.0
        %2892 = vmatpush2.msra.mxu0 0.0
        %2893 = vmatprep.subr.mxu0 0.0
        %2894 = vmatpush2.msra.mxu0 0.0
        %2895 = vmatprep.subr.mxu0 0.0
        %2896 = vmatpush2.msra.mxu0 0.0
        %2897 = vmatprep.subr.mxu0 0.0
        %2898 = vmatpush2.msra.mxu0 0.0
        %2899 = vmatprep.subr.mxu0 0.0
        %2900 = vmatpush2.msra.mxu0 0.0
        %2901 = vmatprep.subr.mxu0 0.0
        %2902 = vmatpush2.msra.mxu0 0.0
        %2903 = vmatprep.subr.mxu0 0.0
        %2904 = vmatpush2.msra.mxu0 0.0
        %2905 = vmatprep.subr.mxu0 0.0
        %2906 = vmatpush2.msra.mxu0 0.0
        %2907 = vmatprep.subr.mxu0 0.0
        %2908 = vmatpush2.msra.mxu0 0.0
        %2909 = vmatprep.subr.mxu0 0.0
        %2910 = vmatpush2.msra.mxu0 0.0
        %2911 = vmatprep.subr.mxu0 0.0
        %2912 = vmatpush2.msra.mxu0 0.0
        %2913 = vmatprep.mubr.f32.mxu0 0.0
        %2914 = vmatmul.mubr.f32.gmra.mxu0 %v2838
        %v2915 = vpop.f32.mrf.mxu0
        %v2916 = vadd.f32 %v2835, %v2915
        %v2917 = vpop.f32.mrf.mxu0
        %2918 = vmatprep.mubr.f32.mxu0 0.0
        %2919 = vmatmul.mubr.f32.gmra.mxu0 %v2841
        %v2920 = vpop.f32.mrf.mxu0
        %v2921 = vadd.f32 %v2835, %v2920
        %v2922 = vpop.f32.mrf.mxu0
        %2923 = vmatprep.mubr.f32.mxu0 0.0
        %2924 = vmatmul.mubr.f32.gmra.mxu0 %v2844
        %v2925 = vpop.f32.mrf.mxu0
        %v2926 = vadd.f32 %v2835, %v2925
        %v2927 = vpop.f32.mrf.mxu0
        %2928 = vmatprep.mubr.f32.mxu0 0.0
        %2929 = vmatmul.mubr.f32.gmra.mxu0 %v2847
        %v2930 = vpop.f32.mrf.mxu0
        %v2931 = vadd.f32 %v2835, %v2930
        %v2932 = vpop.f32.mrf.mxu0
        %2933 = vdwg.mxu0
        %v2934 = vmax.f32 %v2916, 0.0
        %v2935 = vmax.f32 %v2921, 0.0
        %v2936 = vmax.f32 %v2926, 0.0
        %v2937 = vmax.f32 %v2931, 0.0
        %v2938 = vlaneseq
        %v2939 = vshrl.u32 %v2938, 7
        %v2940 = vsub.s32 2, %v2939
        %v2941 = vrot.slane %v488, %v2940
        %vm2942 = vcmask 523264
        %v2944 = vsel %vm2942, %v2934, 0
        %v2947 = vsel %vm2942, %v2935, 0
        %v2950 = vsel %vm2942, %v2936, 0
        %v2953 = vsel %vm2942, %v2937, 0
        %2955 = vmatprep.subr.mxu0 0.0
        %2956 = vmatpush1.msra.mxu0 0.0
        %2957 = vmatprep.subr.mxu0 0.0
        %2958 = vmatpush1.msra.mxu0 0.0
        %2959 = vmatprep.subr.mxu0 0.0
        %2960 = vmatpush1.msra.mxu0 0.0
        %2961 = vmatprep.subr.mxu0 0.0
        %2962 = vmatpush1.msra.mxu0 0.0
        %2963 = vmatprep.subr.mxu0 0.0
        %2964 = vmatpush1.msra.mxu0 0.0
        %2965 = vmatprep.subr.mxu0 0.0
        %2966 = vmatpush1.msra.mxu0 0.0
        %2967 = vmatprep.subr.mxu0 0.0
        %2968 = vmatpush1.msra.mxu0 0.0
        %2969 = vmatprep.subr.mxu0 0.0
        %2970 = vmatpush1.msra.mxu0 0.0
        %2971 = vmatprep.subr.mxu0 0.0
        %2972 = vmatpush1.msra.mxu0 %v2830
        %2973 = vmatprep.subr.mxu0 0.0
        %2974 = vmatpush1.msra.mxu0 %v2829
        %2975 = vmatprep.subr.mxu0 0.0
        %2976 = vmatpush1.msra.mxu0 %v2828
        %2977 = vmatprep.subr.mxu0 0.0
        %2978 = vmatpush1.msra.mxu0 %v2827
        %2979 = vmatprep.subr.mxu0 0.0
        %2980 = vmatpush1.msra.mxu0 %v2826
        %2981 = vmatprep.subr.mxu0 0.0
        %2982 = vmatpush1.msra.mxu0 %v2825
        %2983 = vmatprep.subr.mxu0 0.0
        %2984 = vmatpush1.msra.mxu0 %v2824
        %2985 = vmatprep.subr.mxu0 0.0
        %2986 = vmatpush1.msra.mxu0 %v2823
        %2987 = vmatprep.subr.mxu0 0.0
        %2988 = vmatpush2.msra.mxu0 0.0
        %2989 = vmatprep.subr.mxu0 0.0
        %2990 = vmatpush2.msra.mxu0 0.0
        %2991 = vmatprep.subr.mxu0 0.0
        %2992 = vmatpush2.msra.mxu0 0.0
        %2993 = vmatprep.subr.mxu0 0.0
        %2994 = vmatpush2.msra.mxu0 0.0
        %2995 = vmatprep.subr.mxu0 0.0
        %2996 = vmatpush2.msra.mxu0 0.0
        %2997 = vmatprep.subr.mxu0 0.0
        %2998 = vmatpush2.msra.mxu0 0.0
        %2999 = vmatprep.subr.mxu0 0.0
        %3000 = vmatpush2.msra.mxu0 0.0
        %3001 = vmatprep.subr.mxu0 0.0
        %3002 = vmatpush2.msra.mxu0 0.0
        %3003 = vmatprep.subr.mxu0 0.0
        %3004 = vmatpush2.msra.mxu0 0.0
        %3005 = vmatprep.subr.mxu0 0.0
        %3006 = vmatpush2.msra.mxu0 0.0
        %3007 = vmatprep.subr.mxu0 0.0
        %3008 = vmatpush2.msra.mxu0 0.0
        %3009 = vmatprep.subr.mxu0 0.0
        %3010 = vmatpush2.msra.mxu0 0.0
        %3011 = vmatprep.subr.mxu0 0.0
        %3012 = vmatpush2.msra.mxu0 0.0
        %3013 = vmatprep.subr.mxu0 0.0
        %3014 = vmatpush2.msra.mxu0 0.0
        %3015 = vmatprep.subr.mxu0 0.0
        %3016 = vmatpush2.msra.mxu0 0.0
        %3017 = vmatprep.subr.mxu0 0.0
        %3018 = vmatpush2.msra.mxu0 0.0
        %3019 = vmatprep.mubr.f32.mxu0 0.0
        %3020 = vmatmul.mubr.f32.gmra.mxu0 %v2944
        %v3021 = vpop.f32.mrf.mxu0
        %v3022 = vadd.f32 %v2941, %v3021
        %v3023 = vpop.f32.mrf.mxu0
        %3024 = vmatprep.mubr.f32.mxu0 0.0
        %3025 = vmatmul.mubr.f32.gmra.mxu0 %v2947
        %v3026 = vpop.f32.mrf.mxu0
        %v3027 = vadd.f32 %v2941, %v3026
        %v3028 = vpop.f32.mrf.mxu0
        %3029 = vmatprep.mubr.f32.mxu0 0.0
        %3030 = vmatmul.mubr.f32.gmra.mxu0 %v2950
        %v3031 = vpop.f32.mrf.mxu0
        %v3032 = vadd.f32 %v2941, %v3031
        %v3033 = vpop.f32.mrf.mxu0
        %3034 = vmatprep.mubr.f32.mxu0 0.0
        %3035 = vmatmul.mubr.f32.gmra.mxu0 %v2953
        %v3036 = vpop.f32.mrf.mxu0
        %v3037 = vadd.f32 %v2941, %v3036
        %v3038 = vpop.f32.mrf.mxu0
        %3039 = vdwg.mxu0
        %v3040 = vadd.f32 %v2814, %v3022
        %v3041 = vadd.f32 %v2815, %v3027
        %v3042 = vadd.f32 %v2816, %v3032
        %v3043 = vadd.f32 %v2817, %v3037
        %v3044 = vsel %vm504, %v3040, 0.0
        %3045 = vadd.xlane.f32.xlu0 %v3044
        %v3046 = vpop.xlane.xlu0 %3045
        %v3047 = vsel %vm504, %v3041, 0.0
        %3048 = vadd.xlane.f32.xlu0 %v3047
        %v3049 = vpop.xlane.xlu0 %3048
        %v3050 = vsel %vm504, %v3042, 0.0
        %3051 = vadd.xlane.f32.xlu0 %v3050
        %v3052 = vpop.xlane.xlu0 %3051
        %v3053 = vsel %vm504, %v3043, 0.0
        %3054 = vadd.xlane.f32.xlu0 %v3053
        %v3055 = vpop.xlane.xlu0 %3054
        %v3056 = vmul.f32 %v3046, %v2761
        %v3057 = vmul.f32 %v3049, %v2761
        %v3058 = vmul.f32 %v3052, %v2761
        %v3059 = vmul.f32 %v3055, %v2761
        %v3060 = vsub.f32 %v3040, %v3056
        %v3061 = vsub.f32 %v3041, %v3057
        %v3062 = vsub.f32 %v3042, %v3058
        %v3063 = vsub.f32 %v3043, %v3059
        %v3064 = vmul.f32 %v3060, %v3060
        %v3065 = vmul.f32 %v3061, %v3061
        %v3066 = vmul.f32 %v3062, %v3062
        %v3067 = vmul.f32 %v3063, %v3063
        %v3068 = vsel %vm504, %v3064, 0.0
        %3069 = vadd.xlane.f32.xlu0 %v3068
        %v3070 = vpop.xlane.xlu0 %3069
        %v3071 = vsel %vm504, %v3065, 0.0
        %3072 = vadd.xlane.f32.xlu0 %v3071
        %v3073 = vpop.xlane.xlu0 %3072
        %v3074 = vsel %vm504, %v3066, 0.0
        %3075 = vadd.xlane.f32.xlu0 %v3074
        %v3076 = vpop.xlane.xlu0 %3075
        %v3077 = vsel %vm504, %v3067, 0.0
        %3078 = vadd.xlane.f32.xlu0 %v3077
        %v3079 = vpop.xlane.xlu0 %3078
        %v3080 = vmul.f32 %v3070, %v2761
        %v3081 = vmul.f32 %v3073, %v2761
        %v3082 = vmul.f32 %v3076, %v2761
        %v3083 = vmul.f32 %v3079, %v2761
        %v3084 = vadd.f32 %v3080, 1e-05
        %v3085 = vadd.f32 %v3081, 1e-05
        %v3086 = vadd.f32 %v3082, 1e-05
        %v3087 = vadd.f32 %v3083, 1e-05
        %v3088 = vrsqrt.pop %v3084
        %v3089 = vrsqrt.pop %v3085
        %v3090 = vrsqrt.pop %v3086
        %v3091 = vrsqrt.pop %v3087
        %v3092 = vmul.f32 %v3060, %v3088
        %v3093 = vmul.f32 %v3061, %v3089
        %v3094 = vmul.f32 %v3062, %v3090
        %v3095 = vmul.f32 %v3063, %v3091
        %v3096 = vlaneseq
        %v3097 = vshrl.u32 %v3096, 7
        %v3098 = vsub.s32 5, %v3097
        %v3099 = vrot.slane %v488, %v3098
        %v3100 = vmul.f32 %v3092, %v3099
        %v3101 = vmul.f32 %v3093, %v3099
        %v3102 = vmul.f32 %v3094, %v3099
        %v3103 = vmul.f32 %v3095, %v3099
        %v3104 = vlaneseq
        %v3105 = vshrl.u32 %v3104, 7
        %v3106 = vsub.s32 6, %v3105
        %v3107 = vrot.slane %v488, %v3106
        %v3108 = vadd.f32 %v3100, %v3107
        %v3109 = vadd.f32 %v3101, %v3107
        %v3110 = vadd.f32 %v3102, %v3107
        %v3111 = vadd.f32 %v3103, %v3107
        %3112 = vst.msk [vmem:[#allocation2] sm:$0xff] %vm504, %v3108
        %3113 = vst.msk [vmem:[#allocation2 + $0x8] sm:$0xff] %vm504, %v3109
        %3114 = vst.msk [vmem:[#allocation2 + $0x10] sm:$0xff] %vm504, %v3110
        %3115 = vst.msk [vmem:[#allocation2 + $0x18] sm:$0xff] %vm504, %v3111
        %3116 = vst.msk [vmem:[#allocation8] sm:$0xff] %vm504, %v3108
        %3117 = vst.msk [vmem:[#allocation8 + $0x8] sm:$0xff] %vm504, %v3109
        %3118 = vst.msk [vmem:[#allocation8 + $0x10] sm:$0xff] %vm504, %v3110
        %3119 = vst.msk [vmem:[#allocation8 + $0x18] sm:$0xff] %vm504, %v3111
        // Predicated region
        $region69: #{tpu_custom_call.1} parent=55 // pred_check
          %p3120 = pneg %p262
        $region70: #{tpu_custom_call.1} parent=55 // pred_check_branch
          %3122 = sbr.rel (%p3120) target = $region72
        $region71: #{tpu_custom_call.1} parent=55 // pred_region
          %s3124 = ssub.s32 512, 512
          %3125 = vsyncadd [#allocation5], %s3124
          %s3126 = sshll.u32 [#allocation8], 4
          %s3127 = int_to_ptr.vmem [resolvable:$true] %s3126
          %3132 = dma.vmem_to_hbm [thread:$0]  %s3127, 512, %s9, [#allocation5], 128, 128, 8
        $region72: #{tpu_custom_call.1} parent=55 // pred_fallthru
          _
        // Predicated region
        $region73: #{tpu_custom_call.1} parent=55 // pred_check
          %p3133 = pneg %p262
        $region74: #{tpu_custom_call.1} parent=55 // pred_check_branch
          %3135 = sbr.rel (%p3133) target = $region76
        $region75: #{tpu_custom_call.1} parent=55 // pred_region
          %3136 = dma.done [#allocation5], 512
        $region76: #{tpu_custom_call.1} parent=55 // pred_fallthru
          _
      $region56: #{tpu_custom_call.1} parent=5 // pred_fallthru
        _
      %p3137 = scmp.le.s32.totalorder 2, %s20
      // Predicated region
      $region77: #{tpu_custom_call.1} parent=5 // pred_check
        %p3138 = pneg %p3137
      $region78: #{tpu_custom_call.1} parent=5 // pred_check_branch
        %3140 = sbr.rel (%p3138) target = $region80
      $region79: #{tpu_custom_call.1} parent=5 // pred_region
        %s3141 = ssub.s32 %s20, 2
      $region80: #{tpu_custom_call.1} parent=5 // pred_fallthru
        _
    $region6: #{tpu_custom_call.1} parent=1 // loop_footer
      %s24 = sadd.s32 1, %s20
    $region7: #{tpu_custom_call.1} parent=1 // loop_footer_branch
      %19 = sbr.rel target = $region3
    $region8: #{tpu_custom_call.1} parent=1 // loop_exit
      _
    %3142 = vsyncpa [#allocation4], 1
    %s3143 = scalar_lea.sflag [#allocation4], 1
    %3144 = vsyncpa %s3143, 1
    %3145 = vsyncpa [#allocation7], 1
    %s3146 = scalar_lea.sflag [#allocation7], 1
    %3147 = vsyncpa %s3146, 1
    %3148 = vsyncpa [#allocation5], 1
    %s3149 = scalar_lea.sflag [#allocation5], 1
    %3150 = vsyncpa %s3149, 1

</llo_original>
